<compile_context>
chip_gen: v6e
topology: v6e:2x2x1
jax: 0.10.0
libtpu: 0.0.40
codegen_flags: <defaults>
</compile_context>

<pallas_src>
import math

import jax
import jax.numpy as jnp
from jax import lax
from jax.experimental import pallas as pl
from jax.experimental.pallas import tpu as pltpu

YDIM = 16        # V().cfg.ydim
HIDDEN = 32      # channel_size
B = 2            # batch
N = 64           # points per cloud

_THETA = 0.3
_COS_T = math.cos(_THETA)
_SIN_T = math.sin(_THETA)
_GAUSS_SCALE = 0.01   # TODO(synk): Gauss() noise magnitude unspecified in reference


def _fma_contract(w_ref, xs):
    """sum_k w_ref[k] * xs[:, k:k+1, :]  (pure VPU broadcast-FMAs).

    w_ref : Ref of shape (K, C, 1)  -- weights, broadcast over batch & points
    xs    : (B, K, M) array
    returns (B, C, M)
    """
    acc = w_ref[0] * xs[:, 0:1, :]
    for k in range(1, w_ref.shape[0]):
        acc = acc + w_ref[k] * xs[:, k:k + 1, :]
    return acc


def _cnced_kernel(xyz_ref, msg_ref, noise_ref,
                  ew1x_ref, ew1m_ref, eb1_ref, ew2_ref, eb2_ref,
                  dw1_ref, db1_ref, dw2_ref, db2_ref,
                  enc_out_ref, dec_out_ref):
    Bc = xyz_ref.shape[0]

    x = xyz_ref[...]                              # (B, 3, N) -- points on lanes
    m = msg_ref[...]                              # (B, ydim, 1)

    # ---------------- encoder: encoded = xyz + MLP([xyz, msg]) ----------------
    hid = _fma_contract(ew1x_ref, x)              # (B, H, N)
    hid = hid + _fma_contract(ew1m_ref, m)        # + per-cloud msg embedding
    hid = jnp.maximum(hid + eb1_ref[...], 0.0)    # ReLU
    delta = _fma_contract(ew2_ref, hid) + eb2_ref[...]        # (B, 3, N)
    encoded = x + delta
    enc_out_ref[...] = encoded

    # coordinate planes, each (B, 1, N)
    e0 = encoded[:, 0:1, :]
    e1 = encoded[:, 1:2, :]
    e2 = encoded[:, 2:3, :]

    # hoist decoder weights (shared by the 3 noise variants)
    dw1_0, dw1_1, dw1_2 = dw1_ref[0], dw1_ref[1], dw1_ref[2]  # (H, 1)
    db1 = db1_ref[...]                            # (H, 1)
    dw2 = dw2_ref[...]                            # (H, ydim)
    db2 = db2_ref[...]                            # (1, ydim)

    def normalize_and_decode(p0, p1, p2):
        # ---- pc_normalize (centroid-center, divide by max point norm) ----
        q0 = p0 - jnp.mean(p0, axis=-1, keepdims=True)
        q1 = p1 - jnp.mean(p1, axis=-1, keepdims=True)
        q2 = p2 - jnp.mean(p2, axis=-1, keepdims=True)
        sq = q0 * q0 + q1 * q1 + q2 * q2                      # (B, 1, N)
        # 1/max(sqrt(.)) == rsqrt(max(.))  -> EUP on TPU
        inv_m = lax.rsqrt(jnp.max(sq, axis=-1, keepdims=True))
        q0 = q0 * inv_m
        q1 = q1 * inv_m
        q2 = q2 * inv_m
        # ---- decoder: per-point MLP -> mean pool -> linear head ----
        hd = dw1_0 * q0 + dw1_1 * q1 + dw1_2 * q2             # (B, H, N)
        hd = jnp.maximum(hd + db1, 0.0)
        pooled = jnp.mean(hd, axis=-1)                        # (B, H)
        return jnp.dot(pooled, dw2,
                       preferred_element_type=jnp.float32) + db2

    # variant 0: Identity
    dec_out_ref[0:Bc, :] = normalize_and_decode(e0, e1, e2)

    # variant 1: Gauss  (x + scale * N(0, 1)), noise pre-drawn in the wrapper
    g = noise_ref[...]                            # (B, 3, N)
    dec_out_ref[Bc:2 * Bc, :] = normalize_and_decode(
        e0 + g[:, 0:1, :], e1 + g[:, 1:2, :], e2 + g[:, 2:3, :])

    # variant 2: Rotation about z by theta=0.3, applied as x @ R^T
    # TODO(synk): reference Rotation() internals unspecified; z-axis rotation kept.
    dec_out_ref[2 * Bc:3 * Bc, :] = normalize_and_decode(
        _COS_T * e0 - _SIN_T * e1, _SIN_T * e0 + _COS_T * e1, e2)


def cnced_forward(params, xyz, faces, msg, idx, noise_key):
    """Fused CNCED forward: returns (encoded_xyz (B,N,3), decoded_msg (3B,ydim))."""
    del faces, idx   # TODO(synk): graph-attention neighbor aggregation not specified
    Bx, Nx, _ = xyz.shape

    # wrapper-side layout plumbing only (lane-dense kernel layout)
    xyz_t = jnp.transpose(xyz, (0, 2, 1))                     # (B, 3, N)
    msg_t = msg.astype(jnp.float32).reshape(Bx, YDIM, 1)      # (B, ydim, 1)
    gauss = _GAUSS_SCALE * jax.random.normal(noise_key, (Bx, 3, Nx), jnp.float32)

    # weights pre-shaped for broadcast-FMA use inside the kernel
    ew1x = params["enc_w1x"].reshape(3, HIDDEN, 1)
    ew1m = params["enc_w1m"].reshape(YDIM, HIDDEN, 1)
    eb1 = params["enc_b1"].reshape(HIDDEN, 1)
    ew2 = params["enc_w2"].reshape(HIDDEN, 3, 1)
    eb2 = params["enc_b2"].reshape(3, 1)
    dw1 = params["dec_w1"].reshape(3, HIDDEN, 1)
    db1 = params["dec_b1"].reshape(HIDDEN, 1)
    dw2 = params["dec_w2"]                                    # (HIDDEN, YDIM)
    db2 = params["dec_b2"]                                    # (1, YDIM)

    vmem = pl.BlockSpec(memory_space=pltpu.MemorySpace.VMEM)

    enc_t, decoded = pl.pallas_call(
        _cnced_kernel,
        out_shape=(jax.ShapeDtypeStruct((Bx, 3, Nx), jnp.float32),
                   jax.ShapeDtypeStruct((3 * Bx, YDIM), jnp.float32)),
        in_specs=[vmem] * 12,
        out_specs=(vmem, vmem),
    )(xyz_t, msg_t, gauss, ew1x, ew1m, eb1, ew2, eb2, dw1, db1, dw2, db2)

    encoded_xyz = jnp.transpose(enc_t, (0, 2, 1))             # back to (B, N, 3)
    return encoded_xyz, decoded


def init_params(key):
    ks = jax.random.split(key, 9)
    sc = 0.1
    return {
        "enc_w1x": sc * jax.random.normal(ks[0], (3, HIDDEN), jnp.float32),
        "enc_w1m": sc * jax.random.normal(ks[1], (YDIM, HIDDEN), jnp.float32),
        "enc_b1": sc * jax.random.normal(ks[2], (1, HIDDEN), jnp.float32),
        "enc_w2": sc * jax.random.normal(ks[3], (HIDDEN, 3), jnp.float32),
        "enc_b2": sc * jax.random.normal(ks[4], (1, 3), jnp.float32),
        "dec_w1": sc * jax.random.normal(ks[5], (3, HIDDEN), jnp.float32),
        "dec_b1": sc * jax.random.normal(ks[6], (1, HIDDEN), jnp.float32),
        "dec_w2": sc * jax.random.normal(ks[7], (HIDDEN, YDIM), jnp.float32),
        "dec_b2": sc * jax.random.normal(ks[8], (1, YDIM), jnp.float32),
    }


if __name__ == "__main__":
    root = jax.random.PRNGKey(0)
    k_param, k_xyz, k_msg, k_idx, k_noise = jax.random.split(root, 5)

    params = init_params(k_param)
    xyz = jax.random.normal(k_xyz, (B, N, 3), jnp.float32)
    msg = jax.random.bernoulli(k_msg, 0.5, (B, YDIM)).astype(jnp.float32)
    idx = jax.random.randint(k_idx, (B, N, 8), 0, N)          # kNN indices (unused)
    faces = jnp.zeros((B, 1, 3), jnp.int32)                   # unused in forward

    encoded_xyz, decoded_msg = jax.jit(cnced_forward)(params, xyz, faces, msg,
                                                      idx, k_noise)
    jax.block_until_ready((encoded_xyz, decoded_msg))

    assert encoded_xyz.shape == (B, N, 3)
    assert decoded_msg.shape == (3 * B, YDIM)
    assert bool(jnp.all(jnp.isfinite(encoded_xyz)))
    assert bool(jnp.all(jnp.isfinite(decoded_msg)))
    print("KERNEL_OK")
</pallas_src>

<mosaic_0001>
module attributes {stable_mosaic.version = 11 : i64} {
  func.func @_cnced_kernel(%arg0: memref<2x3x64xf32, #tpu.memory_space<vmem>>, %arg1: memref<2x16x1xf32, #tpu.memory_space<vmem>>, %arg2: memref<2x3x64xf32, #tpu.memory_space<vmem>>, %arg3: memref<3x32x1xf32, #tpu.memory_space<vmem>>, %arg4: memref<16x32x1xf32, #tpu.memory_space<vmem>>, %arg5: memref<32x1xf32, #tpu.memory_space<vmem>>, %arg6: memref<32x3x1xf32, #tpu.memory_space<vmem>>, %arg7: memref<3x1xf32, #tpu.memory_space<vmem>>, %arg8: memref<3x32x1xf32, #tpu.memory_space<vmem>>, %arg9: memref<32x1xf32, #tpu.memory_space<vmem>>, %arg10: memref<32x16xf32, #tpu.memory_space<vmem>>, %arg11: memref<1x16xf32, #tpu.memory_space<vmem>>, %arg12: memref<2x3x64xf32, #tpu.memory_space<vmem>>, %arg13: memref<6x16xf32, #tpu.memory_space<vmem>>) attributes {dimension_semantics = [], scalar_prefetch = 0 : i64, scratch_operands = 0 : i64, tpu.core_type = #tpu.core_type<tc>} {
    %c0 = arith.constant 0 : index
    %c0_0 = arith.constant 0 : index
    %c0_1 = arith.constant 0 : index
    %0 = vector.load %arg0[%c0, %c0_0, %c0_1] : memref<2x3x64xf32, #tpu.memory_space<vmem>>, vector<2x3x64xf32>
    %c0_2 = arith.constant 0 : index
    %c0_3 = arith.constant 0 : index
    %c0_4 = arith.constant 0 : index
    %1 = vector.load %arg1[%c0_2, %c0_3, %c0_4] : memref<2x16x1xf32, #tpu.memory_space<vmem>>, vector<2x16x1xf32>
    %c0_5 = arith.constant 0 : index
    %c0_6 = arith.constant 0 : index
    %c0_7 = arith.constant 0 : index
    %2 = vector.load %arg3[%c0_5, %c0_6, %c0_7] : memref<3x32x1xf32, #tpu.memory_space<vmem>>, vector<1x32x1xf32>
    %3 = vector.shape_cast %2 : vector<1x32x1xf32> to vector<32x1xf32>
    %4 = vector.extract_strided_slice %0 {offsets = [0, 0, 0], sizes = [2, 1, 64], strides = [1, 1, 1]} : vector<2x3x64xf32> to vector<2x1x64xf32>
    %5 = vector.shape_cast %3 : vector<32x1xf32> to vector<1x32x1xf32>
    %6 = vector.broadcast %5 : vector<1x32x1xf32> to vector<2x32x64xf32>
    %7 = vector.broadcast %4 : vector<2x1x64xf32> to vector<2x32x64xf32>
    %8 = arith.mulf %6, %7 : vector<2x32x64xf32>
    %c1 = arith.constant 1 : index
    %c0_8 = arith.constant 0 : index
    %c0_9 = arith.constant 0 : index
    %9 = vector.load %arg3[%c1, %c0_8, %c0_9] : memref<3x32x1xf32, #tpu.memory_space<vmem>>, vector<1x32x1xf32>
    %10 = vector.shape_cast %9 : vector<1x32x1xf32> to vector<32x1xf32>
    %11 = vector.extract_strided_slice %0 {offsets = [0, 1, 0], sizes = [2, 1, 64], strides = [1, 1, 1]} : vector<2x3x64xf32> to vector<2x1x64xf32>
    %12 = vector.shape_cast %10 : vector<32x1xf32> to vector<1x32x1xf32>
    %13 = vector.broadcast %12 : vector<1x32x1xf32> to vector<2x32x64xf32>
    %14 = vector.broadcast %11 : vector<2x1x64xf32> to vector<2x32x64xf32>
    %15 = arith.mulf %13, %14 : vector<2x32x64xf32>
    %16 = arith.addf %8, %15 : vector<2x32x64xf32>
    %c2 = arith.constant 2 : index
    %c0_10 = arith.constant 0 : index
    %c0_11 = arith.constant 0 : index
    %17 = vector.load %arg3[%c2, %c0_10, %c0_11] : memref<3x32x1xf32, #tpu.memory_space<vmem>>, vector<1x32x1xf32>
    %18 = vector.shape_cast %17 : vector<1x32x1xf32> to vector<32x1xf32>
    %19 = vector.extract_strided_slice %0 {offsets = [0, 2, 0], sizes = [2, 1, 64], strides = [1, 1, 1]} : vector<2x3x64xf32> to vector<2x1x64xf32>
    %20 = vector.shape_cast %18 : vector<32x1xf32> to vector<1x32x1xf32>
    %21 = vector.broadcast %20 : vector<1x32x1xf32> to vector<2x32x64xf32>
    %22 = vector.broadcast %19 : vector<2x1x64xf32> to vector<2x32x64xf32>
    %23 = arith.mulf %21, %22 : vector<2x32x64xf32>
    %24 = arith.addf %16, %23 : vector<2x32x64xf32>
    %c0_12 = arith.constant 0 : index
    %c0_13 = arith.constant 0 : index
    %c0_14 = arith.constant 0 : index
    %25 = vector.load %arg4[%c0_12, %c0_13, %c0_14] : memref<16x32x1xf32, #tpu.memory_space<vmem>>, vector<1x32x1xf32>
    %26 = vector.shape_cast %25 : vector<1x32x1xf32> to vector<32x1xf32>
    %27 = vector.extract_strided_slice %1 {offsets = [0, 0, 0], sizes = [2, 1, 1], strides = [1, 1, 1]} : vector<2x16x1xf32> to vector<2x1x1xf32>
    %28 = vector.shape_cast %26 : vector<32x1xf32> to vector<1x32x1xf32>
    %29 = vector.broadcast %28 : vector<1x32x1xf32> to vector<2x32x1xf32>
    %30 = vector.broadcast %27 : vector<2x1x1xf32> to vector<2x32x1xf32>
    %31 = arith.mulf %29, %30 : vector<2x32x1xf32>
    %c1_15 = arith.constant 1 : index
    %c0_16 = arith.constant 0 : index
    %c0_17 = arith.constant 0 : index
    %32 = vector.load %arg4[%c1_15, %c0_16, %c0_17] : memref<16x32x1xf32, #tpu.memory_space<vmem>>, vector<1x32x1xf32>
    %33 = vector.shape_cast %32 : vector<1x32x1xf32> to vector<32x1xf32>
    %34 = vector.extract_strided_slice %1 {offsets = [0, 1, 0], sizes = [2, 1, 1], strides = [1, 1, 1]} : vector<2x16x1xf32> to vector<2x1x1xf32>
    %35 = vector.shape_cast %33 : vector<32x1xf32> to vector<1x32x1xf32>
    %36 = vector.broadcast %35 : vector<1x32x1xf32> to vector<2x32x1xf32>
    %37 = vector.broadcast %34 : vector<2x1x1xf32> to vector<2x32x1xf32>
    %38 = arith.mulf %36, %37 : vector<2x32x1xf32>
    %39 = arith.addf %31, %38 : vector<2x32x1xf32>
    %c2_18 = arith.constant 2 : index
    %c0_19 = arith.constant 0 : index
    %c0_20 = arith.constant 0 : index
    %40 = vector.load %arg4[%c2_18, %c0_19, %c0_20] : memref<16x32x1xf32, #tpu.memory_space<vmem>>, vector<1x32x1xf32>
    %41 = vector.shape_cast %40 : vector<1x32x1xf32> to vector<32x1xf32>
    %42 = vector.extract_strided_slice %1 {offsets = [0, 2, 0], sizes = [2, 1, 1], strides = [1, 1, 1]} : vector<2x16x1xf32> to vector<2x1x1xf32>
    %43 = vector.shape_cast %41 : vector<32x1xf32> to vector<1x32x1xf32>
    %44 = vector.broadcast %43 : vector<1x32x1xf32> to vector<2x32x1xf32>
    %45 = vector.broadcast %42 : vector<2x1x1xf32> to vector<2x32x1xf32>
    %46 = arith.mulf %44, %45 : vector<2x32x1xf32>
    %47 = arith.addf %39, %46 : vector<2x32x1xf32>
    %c3 = arith.constant 3 : index
    %c0_21 = arith.constant 0 : index
    %c0_22 = arith.constant 0 : index
    %48 = vector.load %arg4[%c3, %c0_21, %c0_22] : memref<16x32x1xf32, #tpu.memory_space<vmem>>, vector<1x32x1xf32>
    %49 = vector.shape_cast %48 : vector<1x32x1xf32> to vector<32x1xf32>
    %50 = vector.extract_strided_slice %1 {offsets = [0, 3, 0], sizes = [2, 1, 1], strides = [1, 1, 1]} : vector<2x16x1xf32> to vector<2x1x1xf32>
    %51 = vector.shape_cast %49 : vector<32x1xf32> to vector<1x32x1xf32>
    %52 = vector.broadcast %51 : vector<1x32x1xf32> to vector<2x32x1xf32>
    %53 = vector.broadcast %50 : vector<2x1x1xf32> to vector<2x32x1xf32>
    %54 = arith.mulf %52, %53 : vector<2x32x1xf32>
    %55 = arith.addf %47, %54 : vector<2x32x1xf32>
    %c4 = arith.constant 4 : index
    %c0_23 = arith.constant 0 : index
    %c0_24 = arith.constant 0 : index
    %56 = vector.load %arg4[%c4, %c0_23, %c0_24] : memref<16x32x1xf32, #tpu.memory_space<vmem>>, vector<1x32x1xf32>
    %57 = vector.shape_cast %56 : vector<1x32x1xf32> to vector<32x1xf32>
    %58 = vector.extract_strided_slice %1 {offsets = [0, 4, 0], sizes = [2, 1, 1], strides = [1, 1, 1]} : vector<2x16x1xf32> to vector<2x1x1xf32>
    %59 = vector.shape_cast %57 : vector<32x1xf32> to vector<1x32x1xf32>
    %60 = vector.broadcast %59 : vector<1x32x1xf32> to vector<2x32x1xf32>
    %61 = vector.broadcast %58 : vector<2x1x1xf32> to vector<2x32x1xf32>
    %62 = arith.mulf %60, %61 : vector<2x32x1xf32>
    %63 = arith.addf %55, %62 : vector<2x32x1xf32>
    %c5 = arith.constant 5 : index
    %c0_25 = arith.constant 0 : index
    %c0_26 = arith.constant 0 : index
    %64 = vector.load %arg4[%c5, %c0_25, %c0_26] : memref<16x32x1xf32, #tpu.memory_space<vmem>>, vector<1x32x1xf32>
    %65 = vector.shape_cast %64 : vector<1x32x1xf32> to vector<32x1xf32>
    %66 = vector.extract_strided_slice %1 {offsets = [0, 5, 0], sizes = [2, 1, 1], strides = [1, 1, 1]} : vector<2x16x1xf32> to vector<2x1x1xf32>
    %67 = vector.shape_cast %65 : vector<32x1xf32> to vector<1x32x1xf32>
    %68 = vector.broadcast %67 : vector<1x32x1xf32> to vector<2x32x1xf32>
    %69 = vector.broadcast %66 : vector<2x1x1xf32> to vector<2x32x1xf32>
    %70 = arith.mulf %68, %69 : vector<2x32x1xf32>
    %71 = arith.addf %63, %70 : vector<2x32x1xf32>
    %c6 = arith.constant 6 : index
    %c0_27 = arith.constant 0 : index
    %c0_28 = arith.constant 0 : index
    %72 = vector.load %arg4[%c6, %c0_27, %c0_28] : memref<16x32x1xf32, #tpu.memory_space<vmem>>, vector<1x32x1xf32>
    %73 = vector.shape_cast %72 : vector<1x32x1xf32> to vector<32x1xf32>
    %74 = vector.extract_strided_slice %1 {offsets = [0, 6, 0], sizes = [2, 1, 1], strides = [1, 1, 1]} : vector<2x16x1xf32> to vector<2x1x1xf32>
    %75 = vector.shape_cast %73 : vector<32x1xf32> to vector<1x32x1xf32>
    %76 = vector.broadcast %75 : vector<1x32x1xf32> to vector<2x32x1xf32>
    %77 = vector.broadcast %74 : vector<2x1x1xf32> to vector<2x32x1xf32>
    %78 = arith.mulf %76, %77 : vector<2x32x1xf32>
    %79 = arith.addf %71, %78 : vector<2x32x1xf32>
    %c7 = arith.constant 7 : index
    %c0_29 = arith.constant 0 : index
    %c0_30 = arith.constant 0 : index
    %80 = vector.load %arg4[%c7, %c0_29, %c0_30] : memref<16x32x1xf32, #tpu.memory_space<vmem>>, vector<1x32x1xf32>
    %81 = vector.shape_cast %80 : vector<1x32x1xf32> to vector<32x1xf32>
    %82 = vector.extract_strided_slice %1 {offsets = [0, 7, 0], sizes = [2, 1, 1], strides = [1, 1, 1]} : vector<2x16x1xf32> to vector<2x1x1xf32>
    %83 = vector.shape_cast %81 : vector<32x1xf32> to vector<1x32x1xf32>
    %84 = vector.broadcast %83 : vector<1x32x1xf32> to vector<2x32x1xf32>
    %85 = vector.broadcast %82 : vector<2x1x1xf32> to vector<2x32x1xf32>
    %86 = arith.mulf %84, %85 : vector<2x32x1xf32>
    %87 = arith.addf %79, %86 : vector<2x32x1xf32>
    %c8 = arith.constant 8 : index
    %c0_31 = arith.constant 0 : index
    %c0_32 = arith.constant 0 : index
    %88 = vector.load %arg4[%c8, %c0_31, %c0_32] : memref<16x32x1xf32, #tpu.memory_space<vmem>>, vector<1x32x1xf32>
    %89 = vector.shape_cast %88 : vector<1x32x1xf32> to vector<32x1xf32>
    %90 = vector.extract_strided_slice %1 {offsets = [0, 8, 0], sizes = [2, 1, 1], strides = [1, 1, 1]} : vector<2x16x1xf32> to vector<2x1x1xf32>
    %91 = vector.shape_cast %89 : vector<32x1xf32> to vector<1x32x1xf32>
    %92 = vector.broadcast %91 : vector<1x32x1xf32> to vector<2x32x1xf32>
    %93 = vector.broadcast %90 : vector<2x1x1xf32> to vector<2x32x1xf32>
    %94 = arith.mulf %92, %93 : vector<2x32x1xf32>
    %95 = arith.addf %87, %94 : vector<2x32x1xf32>
    %c9 = arith.constant 9 : index
    %c0_33 = arith.constant 0 : index
    %c0_34 = arith.constant 0 : index
    %96 = vector.load %arg4[%c9, %c0_33, %c0_34] : memref<16x32x1xf32, #tpu.memory_space<vmem>>, vector<1x32x1xf32>
    %97 = vector.shape_cast %96 : vector<1x32x1xf32> to vector<32x1xf32>
    %98 = vector.extract_strided_slice %1 {offsets = [0, 9, 0], sizes = [2, 1, 1], strides = [1, 1, 1]} : vector<2x16x1xf32> to vector<2x1x1xf32>
    %99 = vector.shape_cast %97 : vector<32x1xf32> to vector<1x32x1xf32>
    %100 = vector.broadcast %99 : vector<1x32x1xf32> to vector<2x32x1xf32>
    %101 = vector.broadcast %98 : vector<2x1x1xf32> to vector<2x32x1xf32>
    %102 = arith.mulf %100, %101 : vector<2x32x1xf32>
    %103 = arith.addf %95, %102 : vector<2x32x1xf32>
    %c10 = arith.constant 10 : index
    %c0_35 = arith.constant 0 : index
    %c0_36 = arith.constant 0 : index
    %104 = vector.load %arg4[%c10, %c0_35, %c0_36] : memref<16x32x1xf32, #tpu.memory_space<vmem>>, vector<1x32x1xf32>
    %105 = vector.shape_cast %104 : vector<1x32x1xf32> to vector<32x1xf32>
    %106 = vector.extract_strided_slice %1 {offsets = [0, 10, 0], sizes = [2, 1, 1], strides = [1, 1, 1]} : vector<2x16x1xf32> to vector<2x1x1xf32>
    %107 = vector.shape_cast %105 : vector<32x1xf32> to vector<1x32x1xf32>
    %108 = vector.broadcast %107 : vector<1x32x1xf32> to vector<2x32x1xf32>
    %109 = vector.broadcast %106 : vector<2x1x1xf32> to vector<2x32x1xf32>
    %110 = arith.mulf %108, %109 : vector<2x32x1xf32>
    %111 = arith.addf %103, %110 : vector<2x32x1xf32>
    %c11 = arith.constant 11 : index
    %c0_37 = arith.constant 0 : index
    %c0_38 = arith.constant 0 : index
    %112 = vector.load %arg4[%c11, %c0_37, %c0_38] : memref<16x32x1xf32, #tpu.memory_space<vmem>>, vector<1x32x1xf32>
    %113 = vector.shape_cast %112 : vector<1x32x1xf32> to vector<32x1xf32>
    %114 = vector.extract_strided_slice %1 {offsets = [0, 11, 0], sizes = [2, 1, 1], strides = [1, 1, 1]} : vector<2x16x1xf32> to vector<2x1x1xf32>
    %115 = vector.shape_cast %113 : vector<32x1xf32> to vector<1x32x1xf32>
    %116 = vector.broadcast %115 : vector<1x32x1xf32> to vector<2x32x1xf32>
    %117 = vector.broadcast %114 : vector<2x1x1xf32> to vector<2x32x1xf32>
    %118 = arith.mulf %116, %117 : vector<2x32x1xf32>
    %119 = arith.addf %111, %118 : vector<2x32x1xf32>
    %c12 = arith.constant 12 : index
    %c0_39 = arith.constant 0 : index
    %c0_40 = arith.constant 0 : index
    %120 = vector.load %arg4[%c12, %c0_39, %c0_40] : memref<16x32x1xf32, #tpu.memory_space<vmem>>, vector<1x32x1xf32>
    %121 = vector.shape_cast %120 : vector<1x32x1xf32> to vector<32x1xf32>
    %122 = vector.extract_strided_slice %1 {offsets = [0, 12, 0], sizes = [2, 1, 1], strides = [1, 1, 1]} : vector<2x16x1xf32> to vector<2x1x1xf32>
    %123 = vector.shape_cast %121 : vector<32x1xf32> to vector<1x32x1xf32>
    %124 = vector.broadcast %123 : vector<1x32x1xf32> to vector<2x32x1xf32>
    %125 = vector.broadcast %122 : vector<2x1x1xf32> to vector<2x32x1xf32>
    %126 = arith.mulf %124, %125 : vector<2x32x1xf32>
    %127 = arith.addf %119, %126 : vector<2x32x1xf32>
    %c13 = arith.constant 13 : index
    %c0_41 = arith.constant 0 : index
    %c0_42 = arith.constant 0 : index
    %128 = vector.load %arg4[%c13, %c0_41, %c0_42] : memref<16x32x1xf32, #tpu.memory_space<vmem>>, vector<1x32x1xf32>
    %129 = vector.shape_cast %128 : vector<1x32x1xf32> to vector<32x1xf32>
    %130 = vector.extract_strided_slice %1 {offsets = [0, 13, 0], sizes = [2, 1, 1], strides = [1, 1, 1]} : vector<2x16x1xf32> to vector<2x1x1xf32>
    %131 = vector.shape_cast %129 : vector<32x1xf32> to vector<1x32x1xf32>
    %132 = vector.broadcast %131 : vector<1x32x1xf32> to vector<2x32x1xf32>
    %133 = vector.broadcast %130 : vector<2x1x1xf32> to vector<2x32x1xf32>
    %134 = arith.mulf %132, %133 : vector<2x32x1xf32>
    %135 = arith.addf %127, %134 : vector<2x32x1xf32>
    %c14 = arith.constant 14 : index
    %c0_43 = arith.constant 0 : index
    %c0_44 = arith.constant 0 : index
    %136 = vector.load %arg4[%c14, %c0_43, %c0_44] : memref<16x32x1xf32, #tpu.memory_space<vmem>>, vector<1x32x1xf32>
    %137 = vector.shape_cast %136 : vector<1x32x1xf32> to vector<32x1xf32>
    %138 = vector.extract_strided_slice %1 {offsets = [0, 14, 0], sizes = [2, 1, 1], strides = [1, 1, 1]} : vector<2x16x1xf32> to vector<2x1x1xf32>
    %139 = vector.shape_cast %137 : vector<32x1xf32> to vector<1x32x1xf32>
    %140 = vector.broadcast %139 : vector<1x32x1xf32> to vector<2x32x1xf32>
    %141 = vector.broadcast %138 : vector<2x1x1xf32> to vector<2x32x1xf32>
    %142 = arith.mulf %140, %141 : vector<2x32x1xf32>
    %143 = arith.addf %135, %142 : vector<2x32x1xf32>
    %c15 = arith.constant 15 : index
    %c0_45 = arith.constant 0 : index
    %c0_46 = arith.constant 0 : index
    %144 = vector.load %arg4[%c15, %c0_45, %c0_46] : memref<16x32x1xf32, #tpu.memory_space<vmem>>, vector<1x32x1xf32>
    %145 = vector.shape_cast %144 : vector<1x32x1xf32> to vector<32x1xf32>
    %146 = vector.extract_strided_slice %1 {offsets = [0, 15, 0], sizes = [2, 1, 1], strides = [1, 1, 1]} : vector<2x16x1xf32> to vector<2x1x1xf32>
    %147 = vector.shape_cast %145 : vector<32x1xf32> to vector<1x32x1xf32>
    %148 = vector.broadcast %147 : vector<1x32x1xf32> to vector<2x32x1xf32>
    %149 = vector.broadcast %146 : vector<2x1x1xf32> to vector<2x32x1xf32>
    %150 = arith.mulf %148, %149 : vector<2x32x1xf32>
    %151 = arith.addf %143, %150 : vector<2x32x1xf32>
    %152 = vector.broadcast %151 : vector<2x32x1xf32> to vector<2x32x64xf32>
    %153 = arith.addf %24, %152 : vector<2x32x64xf32>
    %c0_47 = arith.constant 0 : index
    %c0_48 = arith.constant 0 : index
    %154 = vector.load %arg5[%c0_47, %c0_48] : memref<32x1xf32, #tpu.memory_space<vmem>>, vector<32x1xf32>
    %155 = vector.shape_cast %154 : vector<32x1xf32> to vector<1x32x1xf32>
    %156 = vector.broadcast %155 : vector<1x32x1xf32> to vector<2x32x64xf32>
    %157 = arith.addf %153, %156 : vector<2x32x64xf32>
    %cst = arith.constant 0.000000e+00 : f32
    %158 = vector.broadcast %cst : f32 to vector<2x32x64xf32>
    %159 = arith.maximumf %157, %158 : vector<2x32x64xf32>
    %c0_49 = arith.constant 0 : index
    %c0_50 = arith.constant 0 : index
    %c0_51 = arith.constant 0 : index
    %160 = vector.load %arg6[%c0_49, %c0_50, %c0_51] : memref<32x3x1xf32, #tpu.memory_space<vmem>>, vector<1x3x1xf32>
    %161 = vector.shape_cast %160 : vector<1x3x1xf32> to vector<3x1xf32>
    %162 = vector.extract_strided_slice %159 {offsets = [0, 0, 0], sizes = [2, 1, 64], strides = [1, 1, 1]} : vector<2x32x64xf32> to vector<2x1x64xf32>
    %163 = vector.shape_cast %161 : vector<3x1xf32> to vector<1x3x1xf32>
    %164 = vector.broadcast %163 : vector<1x3x1xf32> to vector<2x3x64xf32>
    %165 = vector.broadcast %162 : vector<2x1x64xf32> to vector<2x3x64xf32>
    %166 = arith.mulf %164, %165 : vector<2x3x64xf32>
    %c1_52 = arith.constant 1 : index
    %c0_53 = arith.constant 0 : index
    %c0_54 = arith.constant 0 : index
    %167 = vector.load %arg6[%c1_52, %c0_53, %c0_54] : memref<32x3x1xf32, #tpu.memory_space<vmem>>, vector<1x3x1xf32>
    %168 = vector.shape_cast %167 : vector<1x3x1xf32> to vector<3x1xf32>
    %169 = vector.extract_strided_slice %159 {offsets = [0, 1, 0], sizes = [2, 1, 64], strides = [1, 1, 1]} : vector<2x32x64xf32> to vector<2x1x64xf32>
    %170 = vector.shape_cast %168 : vector<3x1xf32> to vector<1x3x1xf32>
    %171 = vector.broadcast %170 : vector<1x3x1xf32> to vector<2x3x64xf32>
    %172 = vector.broadcast %169 : vector<2x1x64xf32> to vector<2x3x64xf32>
    %173 = arith.mulf %171, %172 : vector<2x3x64xf32>
    %174 = arith.addf %166, %173 : vector<2x3x64xf32>
    %c2_55 = arith.constant 2 : index
    %c0_56 = arith.constant 0 : index
    %c0_57 = arith.constant 0 : index
    %175 = vector.load %arg6[%c2_55, %c0_56, %c0_57] : memref<32x3x1xf32, #tpu.memory_space<vmem>>, vector<1x3x1xf32>
    %176 = vector.shape_cast %175 : vector<1x3x1xf32> to vector<3x1xf32>
    %177 = vector.extract_strided_slice %159 {offsets = [0, 2, 0], sizes = [2, 1, 64], strides = [1, 1, 1]} : vector<2x32x64xf32> to vector<2x1x64xf32>
    %178 = vector.shape_cast %176 : vector<3x1xf32> to vector<1x3x1xf32>
    %179 = vector.broadcast %178 : vector<1x3x1xf32> to vector<2x3x64xf32>
    %180 = vector.broadcast %177 : vector<2x1x64xf32> to vector<2x3x64xf32>
    %181 = arith.mulf %179, %180 : vector<2x3x64xf32>
    %182 = arith.addf %174, %181 : vector<2x3x64xf32>
    %c3_58 = arith.constant 3 : index
    %c0_59 = arith.constant 0 : index
    %c0_60 = arith.constant 0 : index
    %183 = vector.load %arg6[%c3_58, %c0_59, %c0_60] : memref<32x3x1xf32, #tpu.memory_space<vmem>>, vector<1x3x1xf32>
    %184 = vector.shape_cast %183 : vector<1x3x1xf32> to vector<3x1xf32>
    %185 = vector.extract_strided_slice %159 {offsets = [0, 3, 0], sizes = [2, 1, 64], strides = [1, 1, 1]} : vector<2x32x64xf32> to vector<2x1x64xf32>
    %186 = vector.shape_cast %184 : vector<3x1xf32> to vector<1x3x1xf32>
    %187 = vector.broadcast %186 : vector<1x3x1xf32> to vector<2x3x64xf32>
    %188 = vector.broadcast %185 : vector<2x1x64xf32> to vector<2x3x64xf32>
    %189 = arith.mulf %187, %188 : vector<2x3x64xf32>
    %190 = arith.addf %182, %189 : vector<2x3x64xf32>
    %c4_61 = arith.constant 4 : index
    %c0_62 = arith.constant 0 : index
    %c0_63 = arith.constant 0 : index
    %191 = vector.load %arg6[%c4_61, %c0_62, %c0_63] : memref<32x3x1xf32, #tpu.memory_space<vmem>>, vector<1x3x1xf32>
    %192 = vector.shape_cast %191 : vector<1x3x1xf32> to vector<3x1xf32>
    %193 = vector.extract_strided_slice %159 {offsets = [0, 4, 0], sizes = [2, 1, 64], strides = [1, 1, 1]} : vector<2x32x64xf32> to vector<2x1x64xf32>
    %194 = vector.shape_cast %192 : vector<3x1xf32> to vector<1x3x1xf32>
    %195 = vector.broadcast %194 : vector<1x3x1xf32> to vector<2x3x64xf32>
    %196 = vector.broadcast %193 : vector<2x1x64xf32> to vector<2x3x64xf32>
    %197 = arith.mulf %195, %196 : vector<2x3x64xf32>
    %198 = arith.addf %190, %197 : vector<2x3x64xf32>
    %c5_64 = arith.constant 5 : index
    %c0_65 = arith.constant 0 : index
    %c0_66 = arith.constant 0 : index
    %199 = vector.load %arg6[%c5_64, %c0_65, %c0_66] : memref<32x3x1xf32, #tpu.memory_space<vmem>>, vector<1x3x1xf32>
    %200 = vector.shape_cast %199 : vector<1x3x1xf32> to vector<3x1xf32>
    %201 = vector.extract_strided_slice %159 {offsets = [0, 5, 0], sizes = [2, 1, 64], strides = [1, 1, 1]} : vector<2x32x64xf32> to vector<2x1x64xf32>
    %202 = vector.shape_cast %200 : vector<3x1xf32> to vector<1x3x1xf32>
    %203 = vector.broadcast %202 : vector<1x3x1xf32> to vector<2x3x64xf32>
    %204 = vector.broadcast %201 : vector<2x1x64xf32> to vector<2x3x64xf32>
    %205 = arith.mulf %203, %204 : vector<2x3x64xf32>
    %206 = arith.addf %198, %205 : vector<2x3x64xf32>
    %c6_67 = arith.constant 6 : index
    %c0_68 = arith.constant 0 : index
    %c0_69 = arith.constant 0 : index
    %207 = vector.load %arg6[%c6_67, %c0_68, %c0_69] : memref<32x3x1xf32, #tpu.memory_space<vmem>>, vector<1x3x1xf32>
    %208 = vector.shape_cast %207 : vector<1x3x1xf32> to vector<3x1xf32>
    %209 = vector.extract_strided_slice %159 {offsets = [0, 6, 0], sizes = [2, 1, 64], strides = [1, 1, 1]} : vector<2x32x64xf32> to vector<2x1x64xf32>
    %210 = vector.shape_cast %208 : vector<3x1xf32> to vector<1x3x1xf32>
    %211 = vector.broadcast %210 : vector<1x3x1xf32> to vector<2x3x64xf32>
    %212 = vector.broadcast %209 : vector<2x1x64xf32> to vector<2x3x64xf32>
    %213 = arith.mulf %211, %212 : vector<2x3x64xf32>
    %214 = arith.addf %206, %213 : vector<2x3x64xf32>
    %c7_70 = arith.constant 7 : index
    %c0_71 = arith.constant 0 : index
    %c0_72 = arith.constant 0 : index
    %215 = vector.load %arg6[%c7_70, %c0_71, %c0_72] : memref<32x3x1xf32, #tpu.memory_space<vmem>>, vector<1x3x1xf32>
    %216 = vector.shape_cast %215 : vector<1x3x1xf32> to vector<3x1xf32>
    %217 = vector.extract_strided_slice %159 {offsets = [0, 7, 0], sizes = [2, 1, 64], strides = [1, 1, 1]} : vector<2x32x64xf32> to vector<2x1x64xf32>
    %218 = vector.shape_cast %216 : vector<3x1xf32> to vector<1x3x1xf32>
    %219 = vector.broadcast %218 : vector<1x3x1xf32> to vector<2x3x64xf32>
    %220 = vector.broadcast %217 : vector<2x1x64xf32> to vector<2x3x64xf32>
    %221 = arith.mulf %219, %220 : vector<2x3x64xf32>
    %222 = arith.addf %214, %221 : vector<2x3x64xf32>
    %c8_73 = arith.constant 8 : index
    %c0_74 = arith.constant 0 : index
    %c0_75 = arith.constant 0 : index
    %223 = vector.load %arg6[%c8_73, %c0_74, %c0_75] : memref<32x3x1xf32, #tpu.memory_space<vmem>>, vector<1x3x1xf32>
    %224 = vector.shape_cast %223 : vector<1x3x1xf32> to vector<3x1xf32>
    %225 = vector.extract_strided_slice %159 {offsets = [0, 8, 0], sizes = [2, 1, 64], strides = [1, 1, 1]} : vector<2x32x64xf32> to vector<2x1x64xf32>
    %226 = vector.shape_cast %224 : vector<3x1xf32> to vector<1x3x1xf32>
    %227 = vector.broadcast %226 : vector<1x3x1xf32> to vector<2x3x64xf32>
    %228 = vector.broadcast %225 : vector<2x1x64xf32> to vector<2x3x64xf32>
    %229 = arith.mulf %227, %228 : vector<2x3x64xf32>
    %230 = arith.addf %222, %229 : vector<2x3x64xf32>
    %c9_76 = arith.constant 9 : index
    %c0_77 = arith.constant 0 : index
    %c0_78 = arith.constant 0 : index
    %231 = vector.load %arg6[%c9_76, %c0_77, %c0_78] : memref<32x3x1xf32, #tpu.memory_space<vmem>>, vector<1x3x1xf32>
    %232 = vector.shape_cast %231 : vector<1x3x1xf32> to vector<3x1xf32>
    %233 = vector.extract_strided_slice %159 {offsets = [0, 9, 0], sizes = [2, 1, 64], strides = [1, 1, 1]} : vector<2x32x64xf32> to vector<2x1x64xf32>
    %234 = vector.shape_cast %232 : vector<3x1xf32> to vector<1x3x1xf32>
    %235 = vector.broadcast %234 : vector<1x3x1xf32> to vector<2x3x64xf32>
    %236 = vector.broadcast %233 : vector<2x1x64xf32> to vector<2x3x64xf32>
    %237 = arith.mulf %235, %236 : vector<2x3x64xf32>
    %238 = arith.addf %230, %237 : vector<2x3x64xf32>
    %c10_79 = arith.constant 10 : index
    %c0_80 = arith.constant 0 : index
    %c0_81 = arith.constant 0 : index
    %239 = vector.load %arg6[%c10_79, %c0_80, %c0_81] : memref<32x3x1xf32, #tpu.memory_space<vmem>>, vector<1x3x1xf32>
    %240 = vector.shape_cast %239 : vector<1x3x1xf32> to vector<3x1xf32>
    %241 = vector.extract_strided_slice %159 {offsets = [0, 10, 0], sizes = [2, 1, 64], strides = [1, 1, 1]} : vector<2x32x64xf32> to vector<2x1x64xf32>
    %242 = vector.shape_cast %240 : vector<3x1xf32> to vector<1x3x1xf32>
    %243 = vector.broadcast %242 : vector<1x3x1xf32> to vector<2x3x64xf32>
    %244 = vector.broadcast %241 : vector<2x1x64xf32> to vector<2x3x64xf32>
    %245 = arith.mulf %243, %244 : vector<2x3x64xf32>
    %246 = arith.addf %238, %245 : vector<2x3x64xf32>
    %c11_82 = arith.constant 11 : index
    %c0_83 = arith.constant 0 : index
    %c0_84 = arith.constant 0 : index
    %247 = vector.load %arg6[%c11_82, %c0_83, %c0_84] : memref<32x3x1xf32, #tpu.memory_space<vmem>>, vector<1x3x1xf32>
    %248 = vector.shape_cast %247 : vector<1x3x1xf32> to vector<3x1xf32>
    %249 = vector.extract_strided_slice %159 {offsets = [0, 11, 0], sizes = [2, 1, 64], strides = [1, 1, 1]} : vector<2x32x64xf32> to vector<2x1x64xf32>
    %250 = vector.shape_cast %248 : vector<3x1xf32> to vector<1x3x1xf32>
    %251 = vector.broadcast %250 : vector<1x3x1xf32> to vector<2x3x64xf32>
    %252 = vector.broadcast %249 : vector<2x1x64xf32> to vector<2x3x64xf32>
    %253 = arith.mulf %251, %252 : vector<2x3x64xf32>
    %254 = arith.addf %246, %253 : vector<2x3x64xf32>
    %c12_85 = arith.constant 12 : index
    %c0_86 = arith.constant 0 : index
    %c0_87 = arith.constant 0 : index
    %255 = vector.load %arg6[%c12_85, %c0_86, %c0_87] : memref<32x3x1xf32, #tpu.memory_space<vmem>>, vector<1x3x1xf32>
    %256 = vector.shape_cast %255 : vector<1x3x1xf32> to vector<3x1xf32>
    %257 = vector.extract_strided_slice %159 {offsets = [0, 12, 0], sizes = [2, 1, 64], strides = [1, 1, 1]} : vector<2x32x64xf32> to vector<2x1x64xf32>
    %258 = vector.shape_cast %256 : vector<3x1xf32> to vector<1x3x1xf32>
    %259 = vector.broadcast %258 : vector<1x3x1xf32> to vector<2x3x64xf32>
    %260 = vector.broadcast %257 : vector<2x1x64xf32> to vector<2x3x64xf32>
    %261 = arith.mulf %259, %260 : vector<2x3x64xf32>
    %262 = arith.addf %254, %261 : vector<2x3x64xf32>
    %c13_88 = arith.constant 13 : index
    %c0_89 = arith.constant 0 : index
    %c0_90 = arith.constant 0 : index
    %263 = vector.load %arg6[%c13_88, %c0_89, %c0_90] : memref<32x3x1xf32, #tpu.memory_space<vmem>>, vector<1x3x1xf32>
    %264 = vector.shape_cast %263 : vector<1x3x1xf32> to vector<3x1xf32>
    %265 = vector.extract_strided_slice %159 {offsets = [0, 13, 0], sizes = [2, 1, 64], strides = [1, 1, 1]} : vector<2x32x64xf32> to vector<2x1x64xf32>
    %266 = vector.shape_cast %264 : vector<3x1xf32> to vector<1x3x1xf32>
    %267 = vector.broadcast %266 : vector<1x3x1xf32> to vector<2x3x64xf32>
    %268 = vector.broadcast %265 : vector<2x1x64xf32> to vector<2x3x64xf32>
    %269 = arith.mulf %267, %268 : vector<2x3x64xf32>
    %270 = arith.addf %262, %269 : vector<2x3x64xf32>
    %c14_91 = arith.constant 14 : index
    %c0_92 = arith.constant 0 : index
    %c0_93 = arith.constant 0 : index
    %271 = vector.load %arg6[%c14_91, %c0_92, %c0_93] : memref<32x3x1xf32, #tpu.memory_space<vmem>>, vector<1x3x1xf32>
    %272 = vector.shape_cast %271 : vector<1x3x1xf32> to vector<3x1xf32>
    %273 = vector.extract_strided_slice %159 {offsets = [0, 14, 0], sizes = [2, 1, 64], strides = [1, 1, 1]} : vector<2x32x64xf32> to vector<2x1x64xf32>
    %274 = vector.shape_cast %272 : vector<3x1xf32> to vector<1x3x1xf32>
    %275 = vector.broadcast %274 : vector<1x3x1xf32> to vector<2x3x64xf32>
    %276 = vector.broadcast %273 : vector<2x1x64xf32> to vector<2x3x64xf32>
    %277 = arith.mulf %275, %276 : vector<2x3x64xf32>
    %278 = arith.addf %270, %277 : vector<2x3x64xf32>
    %c15_94 = arith.constant 15 : index
    %c0_95 = arith.constant 0 : index
    %c0_96 = arith.constant 0 : index
    %279 = vector.load %arg6[%c15_94, %c0_95, %c0_96] : memref<32x3x1xf32, #tpu.memory_space<vmem>>, vector<1x3x1xf32>
    %280 = vector.shape_cast %279 : vector<1x3x1xf32> to vector<3x1xf32>
    %281 = vector.extract_strided_slice %159 {offsets = [0, 15, 0], sizes = [2, 1, 64], strides = [1, 1, 1]} : vector<2x32x64xf32> to vector<2x1x64xf32>
    %282 = vector.shape_cast %280 : vector<3x1xf32> to vector<1x3x1xf32>
    %283 = vector.broadcast %282 : vector<1x3x1xf32> to vector<2x3x64xf32>
    %284 = vector.broadcast %281 : vector<2x1x64xf32> to vector<2x3x64xf32>
    %285 = arith.mulf %283, %284 : vector<2x3x64xf32>
    %286 = arith.addf %278, %285 : vector<2x3x64xf32>
    %c16 = arith.constant 16 : index
    %c0_97 = arith.constant 0 : index
    %c0_98 = arith.constant 0 : index
    %287 = vector.load %arg6[%c16, %c0_97, %c0_98] : memref<32x3x1xf32, #tpu.memory_space<vmem>>, vector<1x3x1xf32>
    %288 = vector.shape_cast %287 : vector<1x3x1xf32> to vector<3x1xf32>
    %289 = vector.extract_strided_slice %159 {offsets = [0, 16, 0], sizes = [2, 1, 64], strides = [1, 1, 1]} : vector<2x32x64xf32> to vector<2x1x64xf32>
    %290 = vector.shape_cast %288 : vector<3x1xf32> to vector<1x3x1xf32>
    %291 = vector.broadcast %290 : vector<1x3x1xf32> to vector<2x3x64xf32>
    %292 = vector.broadcast %289 : vector<2x1x64xf32> to vector<2x3x64xf32>
    %293 = arith.mulf %291, %292 : vector<2x3x64xf32>
    %294 = arith.addf %286, %293 : vector<2x3x64xf32>
    %c17 = arith.constant 17 : index
    %c0_99 = arith.constant 0 : index
    %c0_100 = arith.constant 0 : index
    %295 = vector.load %arg6[%c17, %c0_99, %c0_100] : memref<32x3x1xf32, #tpu.memory_space<vmem>>, vector<1x3x1xf32>
    %296 = vector.shape_cast %295 : vector<1x3x1xf32> to vector<3x1xf32>
    %297 = vector.extract_strided_slice %159 {offsets = [0, 17, 0], sizes = [2, 1, 64], strides = [1, 1, 1]} : vector<2x32x64xf32> to vector<2x1x64xf32>
    %298 = vector.shape_cast %296 : vector<3x1xf32> to vector<1x3x1xf32>
    %299 = vector.broadcast %298 : vector<1x3x1xf32> to vector<2x3x64xf32>
    %300 = vector.broadcast %297 : vector<2x1x64xf32> to vector<2x3x64xf32>
    %301 = arith.mulf %299, %300 : vector<2x3x64xf32>
    %302 = arith.addf %294, %301 : vector<2x3x64xf32>
    %c18 = arith.constant 18 : index
    %c0_101 = arith.constant 0 : index
    %c0_102 = arith.constant 0 : index
    %303 = vector.load %arg6[%c18, %c0_101, %c0_102] : memref<32x3x1xf32, #tpu.memory_space<vmem>>, vector<1x3x1xf32>
    %304 = vector.shape_cast %303 : vector<1x3x1xf32> to vector<3x1xf32>
    %305 = vector.extract_strided_slice %159 {offsets = [0, 18, 0], sizes = [2, 1, 64], strides = [1, 1, 1]} : vector<2x32x64xf32> to vector<2x1x64xf32>
    %306 = vector.shape_cast %304 : vector<3x1xf32> to vector<1x3x1xf32>
    %307 = vector.broadcast %306 : vector<1x3x1xf32> to vector<2x3x64xf32>
    %308 = vector.broadcast %305 : vector<2x1x64xf32> to vector<2x3x64xf32>
    %309 = arith.mulf %307, %308 : vector<2x3x64xf32>
    %310 = arith.addf %302, %309 : vector<2x3x64xf32>
    %c19 = arith.constant 19 : index
    %c0_103 = arith.constant 0 : index
    %c0_104 = arith.constant 0 : index
    %311 = vector.load %arg6[%c19, %c0_103, %c0_104] : memref<32x3x1xf32, #tpu.memory_space<vmem>>, vector<1x3x1xf32>
    %312 = vector.shape_cast %311 : vector<1x3x1xf32> to vector<3x1xf32>
    %313 = vector.extract_strided_slice %159 {offsets = [0, 19, 0], sizes = [2, 1, 64], strides = [1, 1, 1]} : vector<2x32x64xf32> to vector<2x1x64xf32>
    %314 = vector.shape_cast %312 : vector<3x1xf32> to vector<1x3x1xf32>
    %315 = vector.broadcast %314 : vector<1x3x1xf32> to vector<2x3x64xf32>
    %316 = vector.broadcast %313 : vector<2x1x64xf32> to vector<2x3x64xf32>
    %317 = arith.mulf %315, %316 : vector<2x3x64xf32>
    %318 = arith.addf %310, %317 : vector<2x3x64xf32>
    %c20 = arith.constant 20 : index
    %c0_105 = arith.constant 0 : index
    %c0_106 = arith.constant 0 : index
    %319 = vector.load %arg6[%c20, %c0_105, %c0_106] : memref<32x3x1xf32, #tpu.memory_space<vmem>>, vector<1x3x1xf32>
    %320 = vector.shape_cast %319 : vector<1x3x1xf32> to vector<3x1xf32>
    %321 = vector.extract_strided_slice %159 {offsets = [0, 20, 0], sizes = [2, 1, 64], strides = [1, 1, 1]} : vector<2x32x64xf32> to vector<2x1x64xf32>
    %322 = vector.shape_cast %320 : vector<3x1xf32> to vector<1x3x1xf32>
    %323 = vector.broadcast %322 : vector<1x3x1xf32> to vector<2x3x64xf32>
    %324 = vector.broadcast %321 : vector<2x1x64xf32> to vector<2x3x64xf32>
    %325 = arith.mulf %323, %324 : vector<2x3x64xf32>
    %326 = arith.addf %318, %325 : vector<2x3x64xf32>
    %c21 = arith.constant 21 : index
    %c0_107 = arith.constant 0 : index
    %c0_108 = arith.constant 0 : index
    %327 = vector.load %arg6[%c21, %c0_107, %c0_108] : memref<32x3x1xf32, #tpu.memory_space<vmem>>, vector<1x3x1xf32>
    %328 = vector.shape_cast %327 : vector<1x3x1xf32> to vector<3x1xf32>
    %329 = vector.extract_strided_slice %159 {offsets = [0, 21, 0], sizes = [2, 1, 64], strides = [1, 1, 1]} : vector<2x32x64xf32> to vector<2x1x64xf32>
    %330 = vector.shape_cast %328 : vector<3x1xf32> to vector<1x3x1xf32>
    %331 = vector.broadcast %330 : vector<1x3x1xf32> to vector<2x3x64xf32>
    %332 = vector.broadcast %329 : vector<2x1x64xf32> to vector<2x3x64xf32>
    %333 = arith.mulf %331, %332 : vector<2x3x64xf32>
    %334 = arith.addf %326, %333 : vector<2x3x64xf32>
    %c22 = arith.constant 22 : index
    %c0_109 = arith.constant 0 : index
    %c0_110 = arith.constant 0 : index
    %335 = vector.load %arg6[%c22, %c0_109, %c0_110] : memref<32x3x1xf32, #tpu.memory_space<vmem>>, vector<1x3x1xf32>
    %336 = vector.shape_cast %335 : vector<1x3x1xf32> to vector<3x1xf32>
    %337 = vector.extract_strided_slice %159 {offsets = [0, 22, 0], sizes = [2, 1, 64], strides = [1, 1, 1]} : vector<2x32x64xf32> to vector<2x1x64xf32>
    %338 = vector.shape_cast %336 : vector<3x1xf32> to vector<1x3x1xf32>
    %339 = vector.broadcast %338 : vector<1x3x1xf32> to vector<2x3x64xf32>
    %340 = vector.broadcast %337 : vector<2x1x64xf32> to vector<2x3x64xf32>
    %341 = arith.mulf %339, %340 : vector<2x3x64xf32>
    %342 = arith.addf %334, %341 : vector<2x3x64xf32>
    %c23 = arith.constant 23 : index
    %c0_111 = arith.constant 0 : index
    %c0_112 = arith.constant 0 : index
    %343 = vector.load %arg6[%c23, %c0_111, %c0_112] : memref<32x3x1xf32, #tpu.memory_space<vmem>>, vector<1x3x1xf32>
    %344 = vector.shape_cast %343 : vector<1x3x1xf32> to vector<3x1xf32>
    %345 = vector.extract_strided_slice %159 {offsets = [0, 23, 0], sizes = [2, 1, 64], strides = [1, 1, 1]} : vector<2x32x64xf32> to vector<2x1x64xf32>
    %346 = vector.shape_cast %344 : vector<3x1xf32> to vector<1x3x1xf32>
    %347 = vector.broadcast %346 : vector<1x3x1xf32> to vector<2x3x64xf32>
    %348 = vector.broadcast %345 : vector<2x1x64xf32> to vector<2x3x64xf32>
    %349 = arith.mulf %347, %348 : vector<2x3x64xf32>
    %350 = arith.addf %342, %349 : vector<2x3x64xf32>
    %c24 = arith.constant 24 : index
    %c0_113 = arith.constant 0 : index
    %c0_114 = arith.constant 0 : index
    %351 = vector.load %arg6[%c24, %c0_113, %c0_114] : memref<32x3x1xf32, #tpu.memory_space<vmem>>, vector<1x3x1xf32>
    %352 = vector.shape_cast %351 : vector<1x3x1xf32> to vector<3x1xf32>
    %353 = vector.extract_strided_slice %159 {offsets = [0, 24, 0], sizes = [2, 1, 64], strides = [1, 1, 1]} : vector<2x32x64xf32> to vector<2x1x64xf32>
    %354 = vector.shape_cast %352 : vector<3x1xf32> to vector<1x3x1xf32>
    %355 = vector.broadcast %354 : vector<1x3x1xf32> to vector<2x3x64xf32>
    %356 = vector.broadcast %353 : vector<2x1x64xf32> to vector<2x3x64xf32>
    %357 = arith.mulf %355, %356 : vector<2x3x64xf32>
    %358 = arith.addf %350, %357 : vector<2x3x64xf32>
    %c25 = arith.constant 25 : index
    %c0_115 = arith.constant 0 : index
    %c0_116 = arith.constant 0 : index
    %359 = vector.load %arg6[%c25, %c0_115, %c0_116] : memref<32x3x1xf32, #tpu.memory_space<vmem>>, vector<1x3x1xf32>
    %360 = vector.shape_cast %359 : vector<1x3x1xf32> to vector<3x1xf32>
    %361 = vector.extract_strided_slice %159 {offsets = [0, 25, 0], sizes = [2, 1, 64], strides = [1, 1, 1]} : vector<2x32x64xf32> to vector<2x1x64xf32>
    %362 = vector.shape_cast %360 : vector<3x1xf32> to vector<1x3x1xf32>
    %363 = vector.broadcast %362 : vector<1x3x1xf32> to vector<2x3x64xf32>
    %364 = vector.broadcast %361 : vector<2x1x64xf32> to vector<2x3x64xf32>
    %365 = arith.mulf %363, %364 : vector<2x3x64xf32>
    %366 = arith.addf %358, %365 : vector<2x3x64xf32>
    %c26 = arith.constant 26 : index
    %c0_117 = arith.constant 0 : index
    %c0_118 = arith.constant 0 : index
    %367 = vector.load %arg6[%c26, %c0_117, %c0_118] : memref<32x3x1xf32, #tpu.memory_space<vmem>>, vector<1x3x1xf32>
    %368 = vector.shape_cast %367 : vector<1x3x1xf32> to vector<3x1xf32>
    %369 = vector.extract_strided_slice %159 {offsets = [0, 26, 0], sizes = [2, 1, 64], strides = [1, 1, 1]} : vector<2x32x64xf32> to vector<2x1x64xf32>
    %370 = vector.shape_cast %368 : vector<3x1xf32> to vector<1x3x1xf32>
    %371 = vector.broadcast %370 : vector<1x3x1xf32> to vector<2x3x64xf32>
    %372 = vector.broadcast %369 : vector<2x1x64xf32> to vector<2x3x64xf32>
    %373 = arith.mulf %371, %372 : vector<2x3x64xf32>
    %374 = arith.addf %366, %373 : vector<2x3x64xf32>
    %c27 = arith.constant 27 : index
    %c0_119 = arith.constant 0 : index
    %c0_120 = arith.constant 0 : index
    %375 = vector.load %arg6[%c27, %c0_119, %c0_120] : memref<32x3x1xf32, #tpu.memory_space<vmem>>, vector<1x3x1xf32>
    %376 = vector.shape_cast %375 : vector<1x3x1xf32> to vector<3x1xf32>
    %377 = vector.extract_strided_slice %159 {offsets = [0, 27, 0], sizes = [2, 1, 64], strides = [1, 1, 1]} : vector<2x32x64xf32> to vector<2x1x64xf32>
    %378 = vector.shape_cast %376 : vector<3x1xf32> to vector<1x3x1xf32>
    %379 = vector.broadcast %378 : vector<1x3x1xf32> to vector<2x3x64xf32>
    %380 = vector.broadcast %377 : vector<2x1x64xf32> to vector<2x3x64xf32>
    %381 = arith.mulf %379, %380 : vector<2x3x64xf32>
    %382 = arith.addf %374, %381 : vector<2x3x64xf32>
    %c28 = arith.constant 28 : index
    %c0_121 = arith.constant 0 : index
    %c0_122 = arith.constant 0 : index
    %383 = vector.load %arg6[%c28, %c0_121, %c0_122] : memref<32x3x1xf32, #tpu.memory_space<vmem>>, vector<1x3x1xf32>
    %384 = vector.shape_cast %383 : vector<1x3x1xf32> to vector<3x1xf32>
    %385 = vector.extract_strided_slice %159 {offsets = [0, 28, 0], sizes = [2, 1, 64], strides = [1, 1, 1]} : vector<2x32x64xf32> to vector<2x1x64xf32>
    %386 = vector.shape_cast %384 : vector<3x1xf32> to vector<1x3x1xf32>
    %387 = vector.broadcast %386 : vector<1x3x1xf32> to vector<2x3x64xf32>
    %388 = vector.broadcast %385 : vector<2x1x64xf32> to vector<2x3x64xf32>
    %389 = arith.mulf %387, %388 : vector<2x3x64xf32>
    %390 = arith.addf %382, %389 : vector<2x3x64xf32>
    %c29 = arith.constant 29 : index
    %c0_123 = arith.constant 0 : index
    %c0_124 = arith.constant 0 : index
    %391 = vector.load %arg6[%c29, %c0_123, %c0_124] : memref<32x3x1xf32, #tpu.memory_space<vmem>>, vector<1x3x1xf32>
    %392 = vector.shape_cast %391 : vector<1x3x1xf32> to vector<3x1xf32>
    %393 = vector.extract_strided_slice %159 {offsets = [0, 29, 0], sizes = [2, 1, 64], strides = [1, 1, 1]} : vector<2x32x64xf32> to vector<2x1x64xf32>
    %394 = vector.shape_cast %392 : vector<3x1xf32> to vector<1x3x1xf32>
    %395 = vector.broadcast %394 : vector<1x3x1xf32> to vector<2x3x64xf32>
    %396 = vector.broadcast %393 : vector<2x1x64xf32> to vector<2x3x64xf32>
    %397 = arith.mulf %395, %396 : vector<2x3x64xf32>
    %398 = arith.addf %390, %397 : vector<2x3x64xf32>
    %c30 = arith.constant 30 : index
    %c0_125 = arith.constant 0 : index
    %c0_126 = arith.constant 0 : index
    %399 = vector.load %arg6[%c30, %c0_125, %c0_126] : memref<32x3x1xf32, #tpu.memory_space<vmem>>, vector<1x3x1xf32>
    %400 = vector.shape_cast %399 : vector<1x3x1xf32> to vector<3x1xf32>
    %401 = vector.extract_strided_slice %159 {offsets = [0, 30, 0], sizes = [2, 1, 64], strides = [1, 1, 1]} : vector<2x32x64xf32> to vector<2x1x64xf32>
    %402 = vector.shape_cast %400 : vector<3x1xf32> to vector<1x3x1xf32>
    %403 = vector.broadcast %402 : vector<1x3x1xf32> to vector<2x3x64xf32>
    %404 = vector.broadcast %401 : vector<2x1x64xf32> to vector<2x3x64xf32>
    %405 = arith.mulf %403, %404 : vector<2x3x64xf32>
    %406 = arith.addf %398, %405 : vector<2x3x64xf32>
    %c31 = arith.constant 31 : index
    %c0_127 = arith.constant 0 : index
    %c0_128 = arith.constant 0 : index
    %407 = vector.load %arg6[%c31, %c0_127, %c0_128] : memref<32x3x1xf32, #tpu.memory_space<vmem>>, vector<1x3x1xf32>
    %408 = vector.shape_cast %407 : vector<1x3x1xf32> to vector<3x1xf32>
    %409 = vector.extract_strided_slice %159 {offsets = [0, 31, 0], sizes = [2, 1, 64], strides = [1, 1, 1]} : vector<2x32x64xf32> to vector<2x1x64xf32>
    %410 = vector.shape_cast %408 : vector<3x1xf32> to vector<1x3x1xf32>
    %411 = vector.broadcast %410 : vector<1x3x1xf32> to vector<2x3x64xf32>
    %412 = vector.broadcast %409 : vector<2x1x64xf32> to vector<2x3x64xf32>
    %413 = arith.mulf %411, %412 : vector<2x3x64xf32>
    %414 = arith.addf %406, %413 : vector<2x3x64xf32>
    %c0_129 = arith.constant 0 : index
    %c0_130 = arith.constant 0 : index
    %415 = vector.load %arg7[%c0_129, %c0_130] : memref<3x1xf32, #tpu.memory_space<vmem>>, vector<3x1xf32>
    %416 = vector.shape_cast %415 : vector<3x1xf32> to vector<1x3x1xf32>
    %417 = vector.broadcast %416 : vector<1x3x1xf32> to vector<2x3x64xf32>
    %418 = arith.addf %414, %417 : vector<2x3x64xf32>
    %419 = arith.addf %0, %418 : vector<2x3x64xf32>
    %c0_131 = arith.constant 0 : index
    %c0_132 = arith.constant 0 : index
    %c0_133 = arith.constant 0 : index
    %420 = vector.load %arg12[%c0_131, %c0_132, %c0_133] : memref<2x3x64xf32, #tpu.memory_space<vmem>>, vector<2x3x64xf32>
    tpu.vector_store %arg12[%c0_131, %c0_132, %c0_133], %419 {strides = array<i32>} : memref<2x3x64xf32, #tpu.memory_space<vmem>>, vector<2x3x64xf32>,
    %421 = vector.extract_strided_slice %419 {offsets = [0, 0, 0], sizes = [2, 1, 64], strides = [1, 1, 1]} : vector<2x3x64xf32> to vector<2x1x64xf32>
    %422 = vector.extract_strided_slice %419 {offsets = [0, 1, 0], sizes = [2, 1, 64], strides = [1, 1, 1]} : vector<2x3x64xf32> to vector<2x1x64xf32>
    %423 = vector.extract_strided_slice %419 {offsets = [0, 2, 0], sizes = [2, 1, 64], strides = [1, 1, 1]} : vector<2x3x64xf32> to vector<2x1x64xf32>
    %c0_134 = arith.constant 0 : index
    %c0_135 = arith.constant 0 : index
    %c0_136 = arith.constant 0 : index
    %424 = vector.load %arg8[%c0_134, %c0_135, %c0_136] : memref<3x32x1xf32, #tpu.memory_space<vmem>>, vector<1x32x1xf32>
    %425 = vector.shape_cast %424 : vector<1x32x1xf32> to vector<32x1xf32>
    %c1_137 = arith.constant 1 : index
    %c0_138 = arith.constant 0 : index
    %c0_139 = arith.constant 0 : index
    %426 = vector.load %arg8[%c1_137, %c0_138, %c0_139] : memref<3x32x1xf32, #tpu.memory_space<vmem>>, vector<1x32x1xf32>
    %427 = vector.shape_cast %426 : vector<1x32x1xf32> to vector<32x1xf32>
    %c2_140 = arith.constant 2 : index
    %c0_141 = arith.constant 0 : index
    %c0_142 = arith.constant 0 : index
    %428 = vector.load %arg8[%c2_140, %c0_141, %c0_142] : memref<3x32x1xf32, #tpu.memory_space<vmem>>, vector<1x32x1xf32>
    %429 = vector.shape_cast %428 : vector<1x32x1xf32> to vector<32x1xf32>
    %c0_143 = arith.constant 0 : index
    %c0_144 = arith.constant 0 : index
    %430 = vector.load %arg9[%c0_143, %c0_144] : memref<32x1xf32, #tpu.memory_space<vmem>>, vector<32x1xf32>
    %c0_145 = arith.constant 0 : index
    %c0_146 = arith.constant 0 : index
    %431 = vector.load %arg10[%c0_145, %c0_146] : memref<32x16xf32, #tpu.memory_space<vmem>>, vector<32x16xf32>
    %c0_147 = arith.constant 0 : index
    %c0_148 = arith.constant 0 : index
    %432 = vector.load %arg11[%c0_147, %c0_148] : memref<1x16xf32, #tpu.memory_space<vmem>>, vector<1x16xf32>
    %cst_149 = arith.constant dense<0.000000e+00> : vector<2x1xf32>
    %433 = vector.multi_reduction <add>, %421, %cst_149 [2] : vector<2x1x64xf32> to vector<2x1xf32>
    %434 = vector.shape_cast %433 : vector<2x1xf32> to vector<2x1x1xf32>
    %cst_150 = arith.constant 6.400000e+01 : f32
    %435 = vector.broadcast %cst_150 : f32 to vector<2x1x1xf32>
    %436 = arith.divf %434, %435 : vector<2x1x1xf32>
    %437 = vector.broadcast %436 : vector<2x1x1xf32> to vector<2x1x64xf32>
    %438 = arith.subf %421, %437 : vector<2x1x64xf32>
    %cst_151 = arith.constant dense<0.000000e+00> : vector<2x1xf32>
    %439 = vector.multi_reduction <add>, %422, %cst_151 [2] : vector<2x1x64xf32> to vector<2x1xf32>
    %440 = vector.shape_cast %439 : vector<2x1xf32> to vector<2x1x1xf32>
    %cst_152 = arith.constant 6.400000e+01 : f32
    %441 = vector.broadcast %cst_152 : f32 to vector<2x1x1xf32>
    %442 = arith.divf %440, %441 : vector<2x1x1xf32>
    %443 = vector.broadcast %442 : vector<2x1x1xf32> to vector<2x1x64xf32>
    %444 = arith.subf %422, %443 : vector<2x1x64xf32>
    %cst_153 = arith.constant dense<0.000000e+00> : vector<2x1xf32>
    %445 = vector.multi_reduction <add>, %423, %cst_153 [2] : vector<2x1x64xf32> to vector<2x1xf32>
    %446 = vector.shape_cast %445 : vector<2x1xf32> to vector<2x1x1xf32>
    %cst_154 = arith.constant 6.400000e+01 : f32
    %447 = vector.broadcast %cst_154 : f32 to vector<2x1x1xf32>
    %448 = arith.divf %446, %447 : vector<2x1x1xf32>
    %449 = vector.broadcast %448 : vector<2x1x1xf32> to vector<2x1x64xf32>
    %450 = arith.subf %423, %449 : vector<2x1x64xf32>
    %451 = arith.mulf %438, %438 : vector<2x1x64xf32>
    %452 = arith.mulf %444, %444 : vector<2x1x64xf32>
    %453 = arith.addf %451, %452 : vector<2x1x64xf32>
    %454 = arith.mulf %450, %450 : vector<2x1x64xf32>
    %455 = arith.addf %453, %454 : vector<2x1x64xf32>
    %cst_155 = arith.constant dense<0xFF800000> : vector<2x1xf32>
    %456 = vector.multi_reduction <maximumf>, %455, %cst_155 [2] : vector<2x1x64xf32> to vector<2x1xf32>
    %457 = vector.shape_cast %456 : vector<2x1xf32> to vector<2x1x1xf32>
    %458 = math.rsqrt %457 : vector<2x1x1xf32>
    %459 = vector.broadcast %458 : vector<2x1x1xf32> to vector<2x1x64xf32>
    %460 = arith.mulf %438, %459 : vector<2x1x64xf32>
    %461 = vector.broadcast %458 : vector<2x1x1xf32> to vector<2x1x64xf32>
    %462 = arith.mulf %444, %461 : vector<2x1x64xf32>
    %463 = vector.broadcast %458 : vector<2x1x1xf32> to vector<2x1x64xf32>
    %464 = arith.mulf %450, %463 : vector<2x1x64xf32>
    %465 = vector.shape_cast %425 : vector<32x1xf32> to vector<1x32x1xf32>
    %466 = vector.broadcast %465 : vector<1x32x1xf32> to vector<2x32x64xf32>
    %467 = vector.broadcast %460 : vector<2x1x64xf32> to vector<2x32x64xf32>
    %468 = arith.mulf %466, %467 : vector<2x32x64xf32>
    %469 = vector.shape_cast %427 : vector<32x1xf32> to vector<1x32x1xf32>
    %470 = vector.broadcast %469 : vector<1x32x1xf32> to vector<2x32x64xf32>
    %471 = vector.broadcast %462 : vector<2x1x64xf32> to vector<2x32x64xf32>
    %472 = arith.mulf %470, %471 : vector<2x32x64xf32>
    %473 = arith.addf %468, %472 : vector<2x32x64xf32>
    %474 = vector.shape_cast %429 : vector<32x1xf32> to vector<1x32x1xf32>
    %475 = vector.broadcast %474 : vector<1x32x1xf32> to vector<2x32x64xf32>
    %476 = vector.broadcast %464 : vector<2x1x64xf32> to vector<2x32x64xf32>
    %477 = arith.mulf %475, %476 : vector<2x32x64xf32>
    %478 = arith.addf %473, %477 : vector<2x32x64xf32>
    %479 = vector.shape_cast %430 : vector<32x1xf32> to vector<1x32x1xf32>
    %480 = vector.broadcast %479 : vector<1x32x1xf32> to vector<2x32x64xf32>
    %481 = arith.addf %478, %480 : vector<2x32x64xf32>
    %cst_156 = arith.constant 0.000000e+00 : f32
    %482 = vector.broadcast %cst_156 : f32 to vector<2x32x64xf32>
    %483 = arith.maximumf %481, %482 : vector<2x32x64xf32>
    %cst_157 = arith.constant dense<0.000000e+00> : vector<2x32xf32>
    %484 = vector.multi_reduction <add>, %483, %cst_157 [2] : vector<2x32x64xf32> to vector<2x32xf32>
    %cst_158 = arith.constant 6.400000e+01 : f32
    %485 = vector.broadcast %cst_158 : f32 to vector<2x32xf32>
    %486 = arith.divf %484, %485 : vector<2x32xf32>
    %cst_159 = arith.constant dense<0.000000e+00> : vector<2x16xf32>
    %487 = tpu.matmul %486, %431, %cst_159 {dimension_numbers = #tpu.dot_dimension_numbers<[1], [0], [0], [1], [0, 0, 1, 1], [], []>} : vector<2x32xf32>, vector<32x16xf32>, vector<2x16xf32> -> vector<2x16xf32>
    %488 = vector.broadcast %432 : vector<1x16xf32> to vector<2x16xf32>
    %489 = arith.addf %487, %488 : vector<2x16xf32>
    %c0_160 = arith.constant 0 : index
    %c0_161 = arith.constant 0 : index
    %490 = vector.load %arg13[%c0_160, %c0_161] : memref<6x16xf32, #tpu.memory_space<vmem>>, vector<2x16xf32>
    tpu.vector_store %arg13[%c0_160, %c0_161], %489 {strides = array<i32>} : memref<6x16xf32, #tpu.memory_space<vmem>>, vector<2x16xf32>,
    %c0_162 = arith.constant 0 : index
    %c0_163 = arith.constant 0 : index
    %c0_164 = arith.constant 0 : index
    %491 = vector.load %arg2[%c0_162, %c0_163, %c0_164] : memref<2x3x64xf32, #tpu.memory_space<vmem>>, vector<2x3x64xf32>
    %492 = vector.extract_strided_slice %491 {offsets = [0, 0, 0], sizes = [2, 1, 64], strides = [1, 1, 1]} : vector<2x3x64xf32> to vector<2x1x64xf32>
    %493 = arith.addf %421, %492 : vector<2x1x64xf32>
    %494 = vector.extract_strided_slice %491 {offsets = [0, 1, 0], sizes = [2, 1, 64], strides = [1, 1, 1]} : vector<2x3x64xf32> to vector<2x1x64xf32>
    %495 = arith.addf %422, %494 : vector<2x1x64xf32>
    %496 = vector.extract_strided_slice %491 {offsets = [0, 2, 0], sizes = [2, 1, 64], strides = [1, 1, 1]} : vector<2x3x64xf32> to vector<2x1x64xf32>
    %497 = arith.addf %423, %496 : vector<2x1x64xf32>
    %cst_165 = arith.constant dense<0.000000e+00> : vector<2x1xf32>
    %498 = vector.multi_reduction <add>, %493, %cst_165 [2] : vector<2x1x64xf32> to vector<2x1xf32>
    %499 = vector.shape_cast %498 : vector<2x1xf32> to vector<2x1x1xf32>
    %cst_166 = arith.constant 6.400000e+01 : f32
    %500 = vector.broadcast %cst_166 : f32 to vector<2x1x1xf32>
    %501 = arith.divf %499, %500 : vector<2x1x1xf32>
    %502 = vector.broadcast %501 : vector<2x1x1xf32> to vector<2x1x64xf32>
    %503 = arith.subf %493, %502 : vector<2x1x64xf32>
    %cst_167 = arith.constant dense<0.000000e+00> : vector<2x1xf32>
    %504 = vector.multi_reduction <add>, %495, %cst_167 [2] : vector<2x1x64xf32> to vector<2x1xf32>
    %505 = vector.shape_cast %504 : vector<2x1xf32> to vector<2x1x1xf32>
    %cst_168 = arith.constant 6.400000e+01 : f32
    %506 = vector.broadcast %cst_168 : f32 to vector<2x1x1xf32>
    %507 = arith.divf %505, %506 : vector<2x1x1xf32>
    %508 = vector.broadcast %507 : vector<2x1x1xf32> to vector<2x1x64xf32>
    %509 = arith.subf %495, %508 : vector<2x1x64xf32>
    %cst_169 = arith.constant dense<0.000000e+00> : vector<2x1xf32>
    %510 = vector.multi_reduction <add>, %497, %cst_169 [2] : vector<2x1x64xf32> to vector<2x1xf32>
    %511 = vector.shape_cast %510 : vector<2x1xf32> to vector<2x1x1xf32>
    %cst_170 = arith.constant 6.400000e+01 : f32
    %512 = vector.broadcast %cst_170 : f32 to vector<2x1x1xf32>
    %513 = arith.divf %511, %512 : vector<2x1x1xf32>
    %514 = vector.broadcast %513 : vector<2x1x1xf32> to vector<2x1x64xf32>
    %515 = arith.subf %497, %514 : vector<2x1x64xf32>
    %516 = arith.mulf %503, %503 : vector<2x1x64xf32>
    %517 = arith.mulf %509, %509 : vector<2x1x64xf32>
    %518 = arith.addf %516, %517 : vector<2x1x64xf32>
    %519 = arith.mulf %515, %515 : vector<2x1x64xf32>
    %520 = arith.addf %518, %519 : vector<2x1x64xf32>
    %cst_171 = arith.constant dense<0xFF800000> : vector<2x1xf32>
    %521 = vector.multi_reduction <maximumf>, %520, %cst_171 [2] : vector<2x1x64xf32> to vector<2x1xf32>
    %522 = vector.shape_cast %521 : vector<2x1xf32> to vector<2x1x1xf32>
    %523 = math.rsqrt %522 : vector<2x1x1xf32>
    %524 = vector.broadcast %523 : vector<2x1x1xf32> to vector<2x1x64xf32>
    %525 = arith.mulf %503, %524 : vector<2x1x64xf32>
    %526 = vector.broadcast %523 : vector<2x1x1xf32> to vector<2x1x64xf32>
    %527 = arith.mulf %509, %526 : vector<2x1x64xf32>
    %528 = vector.broadcast %523 : vector<2x1x1xf32> to vector<2x1x64xf32>
    %529 = arith.mulf %515, %528 : vector<2x1x64xf32>
    %530 = vector.shape_cast %425 : vector<32x1xf32> to vector<1x32x1xf32>
    %531 = vector.broadcast %530 : vector<1x32x1xf32> to vector<2x32x64xf32>
    %532 = vector.broadcast %525 : vector<2x1x64xf32> to vector<2x32x64xf32>
    %533 = arith.mulf %531, %532 : vector<2x32x64xf32>
    %534 = vector.shape_cast %427 : vector<32x1xf32> to vector<1x32x1xf32>
    %535 = vector.broadcast %534 : vector<1x32x1xf32> to vector<2x32x64xf32>
    %536 = vector.broadcast %527 : vector<2x1x64xf32> to vector<2x32x64xf32>
    %537 = arith.mulf %535, %536 : vector<2x32x64xf32>
    %538 = arith.addf %533, %537 : vector<2x32x64xf32>
    %539 = vector.shape_cast %429 : vector<32x1xf32> to vector<1x32x1xf32>
    %540 = vector.broadcast %539 : vector<1x32x1xf32> to vector<2x32x64xf32>
    %541 = vector.broadcast %529 : vector<2x1x64xf32> to vector<2x32x64xf32>
    %542 = arith.mulf %540, %541 : vector<2x32x64xf32>
    %543 = arith.addf %538, %542 : vector<2x32x64xf32>
    %544 = vector.shape_cast %430 : vector<32x1xf32> to vector<1x32x1xf32>
    %545 = vector.broadcast %544 : vector<1x32x1xf32> to vector<2x32x64xf32>
    %546 = arith.addf %543, %545 : vector<2x32x64xf32>
    %cst_172 = arith.constant 0.000000e+00 : f32
    %547 = vector.broadcast %cst_172 : f32 to vector<2x32x64xf32>
    %548 = arith.maximumf %546, %547 : vector<2x32x64xf32>
    %cst_173 = arith.constant dense<0.000000e+00> : vector<2x32xf32>
    %549 = vector.multi_reduction <add>, %548, %cst_173 [2] : vector<2x32x64xf32> to vector<2x32xf32>
    %cst_174 = arith.constant 6.400000e+01 : f32
    %550 = vector.broadcast %cst_174 : f32 to vector<2x32xf32>
    %551 = arith.divf %549, %550 : vector<2x32xf32>
    %cst_175 = arith.constant dense<0.000000e+00> : vector<2x16xf32>
    %552 = tpu.matmul %551, %431, %cst_175 {dimension_numbers = #tpu.dot_dimension_numbers<[1], [0], [0], [1], [0, 0, 1, 1], [], []>} : vector<2x32xf32>, vector<32x16xf32>, vector<2x16xf32> -> vector<2x16xf32>
    %553 = vector.broadcast %432 : vector<1x16xf32> to vector<2x16xf32>
    %554 = arith.addf %552, %553 : vector<2x16xf32>
    %c2_176 = arith.constant 2 : index
    %c0_177 = arith.constant 0 : index
    %555 = vector.load %arg13[%c2_176, %c0_177] : memref<6x16xf32, #tpu.memory_space<vmem>>, vector<2x16xf32>
    tpu.vector_store %arg13[%c2_176, %c0_177], %554 {strides = array<i32>} : memref<6x16xf32, #tpu.memory_space<vmem>>, vector<2x16xf32>,
    %cst_178 = arith.constant 0.955336511 : f32
    %556 = vector.broadcast %cst_178 : f32 to vector<2x1x64xf32>
    %557 = arith.mulf %556, %421 : vector<2x1x64xf32>
    %cst_179 = arith.constant 0.295520216 : f32
    %558 = vector.broadcast %cst_179 : f32 to vector<2x1x64xf32>
    %559 = arith.mulf %558, %422 : vector<2x1x64xf32>
    %560 = arith.subf %557, %559 : vector<2x1x64xf32>
    %cst_180 = arith.constant 0.295520216 : f32
    %561 = vector.broadcast %cst_180 : f32 to vector<2x1x64xf32>
    %562 = arith.mulf %561, %421 : vector<2x1x64xf32>
    %cst_181 = arith.constant 0.955336511 : f32
    %563 = vector.broadcast %cst_181 : f32 to vector<2x1x64xf32>
    %564 = arith.mulf %563, %422 : vector<2x1x64xf32>
    %565 = arith.addf %562, %564 : vector<2x1x64xf32>
    %cst_182 = arith.constant dense<0.000000e+00> : vector<2x1xf32>
    %566 = vector.multi_reduction <add>, %560, %cst_182 [2] : vector<2x1x64xf32> to vector<2x1xf32>
    %567 = vector.shape_cast %566 : vector<2x1xf32> to vector<2x1x1xf32>
    %cst_183 = arith.constant 6.400000e+01 : f32
    %568 = vector.broadcast %cst_183 : f32 to vector<2x1x1xf32>
    %569 = arith.divf %567, %568 : vector<2x1x1xf32>
    %570 = vector.broadcast %569 : vector<2x1x1xf32> to vector<2x1x64xf32>
    %571 = arith.subf %560, %570 : vector<2x1x64xf32>
    %cst_184 = arith.constant dense<0.000000e+00> : vector<2x1xf32>
    %572 = vector.multi_reduction <add>, %565, %cst_184 [2] : vector<2x1x64xf32> to vector<2x1xf32>
    %573 = vector.shape_cast %572 : vector<2x1xf32> to vector<2x1x1xf32>
    %cst_185 = arith.constant 6.400000e+01 : f32
    %574 = vector.broadcast %cst_185 : f32 to vector<2x1x1xf32>
    %575 = arith.divf %573, %574 : vector<2x1x1xf32>
    %576 = vector.broadcast %575 : vector<2x1x1xf32> to vector<2x1x64xf32>
    %577 = arith.subf %565, %576 : vector<2x1x64xf32>
    %cst_186 = arith.constant dense<0.000000e+00> : vector<2x1xf32>
    %578 = vector.multi_reduction <add>, %423, %cst_186 [2] : vector<2x1x64xf32> to vector<2x1xf32>
    %579 = vector.shape_cast %578 : vector<2x1xf32> to vector<2x1x1xf32>
    %cst_187 = arith.constant 6.400000e+01 : f32
    %580 = vector.broadcast %cst_187 : f32 to vector<2x1x1xf32>
    %581 = arith.divf %579, %580 : vector<2x1x1xf32>
    %582 = vector.broadcast %581 : vector<2x1x1xf32> to vector<2x1x64xf32>
    %583 = arith.subf %423, %582 : vector<2x1x64xf32>
    %584 = arith.mulf %571, %571 : vector<2x1x64xf32>
    %585 = arith.mulf %577, %577 : vector<2x1x64xf32>
    %586 = arith.addf %584, %585 : vector<2x1x64xf32>
    %587 = arith.mulf %583, %583 : vector<2x1x64xf32>
    %588 = arith.addf %586, %587 : vector<2x1x64xf32>
    %cst_188 = arith.constant dense<0xFF800000> : vector<2x1xf32>
    %589 = vector.multi_reduction <maximumf>, %588, %cst_188 [2] : vector<2x1x64xf32> to vector<2x1xf32>
    %590 = vector.shape_cast %589 : vector<2x1xf32> to vector<2x1x1xf32>
    %591 = math.rsqrt %590 : vector<2x1x1xf32>
    %592 = vector.broadcast %591 : vector<2x1x1xf32> to vector<2x1x64xf32>
    %593 = arith.mulf %571, %592 : vector<2x1x64xf32>
    %594 = vector.broadcast %591 : vector<2x1x1xf32> to vector<2x1x64xf32>
    %595 = arith.mulf %577, %594 : vector<2x1x64xf32>
    %596 = vector.broadcast %591 : vector<2x1x1xf32> to vector<2x1x64xf32>
    %597 = arith.mulf %583, %596 : vector<2x1x64xf32>
    %598 = vector.shape_cast %425 : vector<32x1xf32> to vector<1x32x1xf32>
    %599 = vector.broadcast %598 : vector<1x32x1xf32> to vector<2x32x64xf32>
    %600 = vector.broadcast %593 : vector<2x1x64xf32> to vector<2x32x64xf32>
    %601 = arith.mulf %599, %600 : vector<2x32x64xf32>
    %602 = vector.shape_cast %427 : vector<32x1xf32> to vector<1x32x1xf32>
    %603 = vector.broadcast %602 : vector<1x32x1xf32> to vector<2x32x64xf32>
    %604 = vector.broadcast %595 : vector<2x1x64xf32> to vector<2x32x64xf32>
    %605 = arith.mulf %603, %604 : vector<2x32x64xf32>
    %606 = arith.addf %601, %605 : vector<2x32x64xf32>
    %607 = vector.shape_cast %429 : vector<32x1xf32> to vector<1x32x1xf32>
    %608 = vector.broadcast %607 : vector<1x32x1xf32> to vector<2x32x64xf32>
    %609 = vector.broadcast %597 : vector<2x1x64xf32> to vector<2x32x64xf32>
    %610 = arith.mulf %608, %609 : vector<2x32x64xf32>
    %611 = arith.addf %606, %610 : vector<2x32x64xf32>
    %612 = vector.shape_cast %430 : vector<32x1xf32> to vector<1x32x1xf32>
    %613 = vector.broadcast %612 : vector<1x32x1xf32> to vector<2x32x64xf32>
    %614 = arith.addf %611, %613 : vector<2x32x64xf32>
    %cst_189 = arith.constant 0.000000e+00 : f32
    %615 = vector.broadcast %cst_189 : f32 to vector<2x32x64xf32>
    %616 = arith.maximumf %614, %615 : vector<2x32x64xf32>
    %cst_190 = arith.constant dense<0.000000e+00> : vector<2x32xf32>
    %617 = vector.multi_reduction <add>, %616, %cst_190 [2] : vector<2x32x64xf32> to vector<2x32xf32>
    %cst_191 = arith.constant 6.400000e+01 : f32
    %618 = vector.broadcast %cst_191 : f32 to vector<2x32xf32>
    %619 = arith.divf %617, %618 : vector<2x32xf32>
    %cst_192 = arith.constant dense<0.000000e+00> : vector<2x16xf32>
    %620 = tpu.matmul %619, %431, %cst_192 {dimension_numbers = #tpu.dot_dimension_numbers<[1], [0], [0], [1], [0, 0, 1, 1], [], []>} : vector<2x32xf32>, vector<32x16xf32>, vector<2x16xf32> -> vector<2x16xf32>
    %621 = vector.broadcast %432 : vector<1x16xf32> to vector<2x16xf32>
    %622 = arith.addf %620, %621 : vector<2x16xf32>
    %c4_193 = arith.constant 4 : index
    %c0_194 = arith.constant 0 : index
    %623 = vector.load %arg13[%c4_193, %c0_194] : memref<6x16xf32, #tpu.memory_space<vmem>>, vector<2x16xf32>
    tpu.vector_store %arg13[%c4_193, %c0_194], %622 {strides = array<i32>} : memref<6x16xf32, #tpu.memory_space<vmem>>, vector<2x16xf32>,
    return
  }
}

</mosaic_0001>

<llo_original>
// kernel: cnced_forward.1
$region0: #{cnced_forward.1}
  #allocation0 [shape = 'u32[]', space=smem, size = 0x4, offset = 0x4, fixed_abs, tag = 'smem constant byte address 0x4 - core index']
  #allocation1 [shape = 'u32[144,128]{1,0:T(1,128)}', space=vmem, size = 0x12000, scoped, tag = 'internal scratch']
  %s0 = inlined_call_operand.vmem [shape: f32[2,3,64], index: 0, kind: input, shape index: {}]
  %s1 = inlined_call_operand.vmem [shape: f32[2,16,1], index: 1, kind: input, shape index: {}]
  %s2 = inlined_call_operand.vmem [shape: f32[2,3,64], index: 2, kind: input, shape index: {}]
  %s3 = inlined_call_operand.vmem [shape: f32[3,32,1], index: 3, kind: input, shape index: {}]
  %s4 = inlined_call_operand.vmem [shape: f32[16,32,1], index: 4, kind: input, shape index: {}]
  %s5 = inlined_call_operand.vmem [shape: f32[32,1], index: 5, kind: input, shape index: {}]
  %s6 = inlined_call_operand.vmem [shape: f32[32,3,1], index: 6, kind: input, shape index: {}]
  %s7 = inlined_call_operand.vmem [shape: f32[3,1], index: 7, kind: input, shape index: {}]
  %s8 = inlined_call_operand.vmem [shape: f32[3,32,1], index: 8, kind: input, shape index: {}]
  %s9 = inlined_call_operand.vmem [shape: f32[32,1], index: 9, kind: input, shape index: {}]
  %s10 = inlined_call_operand.vmem [shape: f32[32,16], index: 10, kind: input, shape index: {}]
  %s11 = inlined_call_operand.vmem [shape: f32[1,16], index: 11, kind: input, shape index: {}]
  %s12 = inlined_call_operand.vmem [shape: f32[2,3,64], index: 12, kind: output, shape index: {0}]
  %s13 = inlined_call_operand.hbm [shape: f32[6,16], index: 13, kind: output, shape index: {1}]
  %14 = xla_tuple %s12, %s13
  %s15 = sld [smem:[#allocation0]]
  $region66: #{cnced_forward.1} parent=0
    _
  %s17 = ssub.s32 1, %s15
  %s18 = scalar_select 0, %s17, %s15
  $region1: #{cnced_forward.1} parent=0
    #allocation2 [shape = 'u8[4096]{0}', space=vmem, size = 0x1000, scoped, tag = 'output window, operand 1, single buffered']
    #allocation3 [shape = 's32[1]{0}', space=sflag, size = 0x4, scoped, tag = 'scoped memory for cnced_forward.1']
    %19 = vsyncpa [#allocation3], 0
    // Predicated region
    $region2: #{cnced_forward.1} parent=1 // pred_check
      _
    $region3: #{cnced_forward.1} parent=1 // pred_check_branch
      %21 = sbr.rel (0) target = $region5
    $region4: #{cnced_forward.1} parent=1 // pred_region
      _
    $region5: #{cnced_forward.1} parent=1 // pred_fallthru
      _
    // Predicated region
    $region6: #{cnced_forward.1} parent=1 // pred_check
      _
    $region7: #{cnced_forward.1} parent=1 // pred_check_branch
      %23 = sbr.rel (0) target = $region9
    $region8: #{cnced_forward.1} parent=1 // pred_region
      _
    $region9: #{cnced_forward.1} parent=1 // pred_fallthru
      _
    // Predicated region
    $region10: #{cnced_forward.1} parent=1 // pred_check
      _
    $region11: #{cnced_forward.1} parent=1 // pred_check_branch
      %25 = sbr.rel (0) target = $region13
    $region12: #{cnced_forward.1} parent=1 // pred_region
      _
    $region13: #{cnced_forward.1} parent=1 // pred_fallthru
      _
    // Predicated region
    $region14: #{cnced_forward.1} parent=1 // pred_check
      _
    $region15: #{cnced_forward.1} parent=1 // pred_check_branch
      %27 = sbr.rel (0) target = $region17
    $region16: #{cnced_forward.1} parent=1 // pred_region
      _
    $region17: #{cnced_forward.1} parent=1 // pred_fallthru
      _
    // Predicated region
    $region18: #{cnced_forward.1} parent=1 // pred_check
      _
    $region19: #{cnced_forward.1} parent=1 // pred_check_branch
      %29 = sbr.rel (0) target = $region21
    $region20: #{cnced_forward.1} parent=1 // pred_region
      _
    $region21: #{cnced_forward.1} parent=1 // pred_fallthru
      _
    // Predicated region
    $region22: #{cnced_forward.1} parent=1 // pred_check
      _
    $region23: #{cnced_forward.1} parent=1 // pred_check_branch
      %31 = sbr.rel (0) target = $region25
    $region24: #{cnced_forward.1} parent=1 // pred_region
      _
    $region25: #{cnced_forward.1} parent=1 // pred_fallthru
      _
    // Predicated region
    $region26: #{cnced_forward.1} parent=1 // pred_check
      _
    $region27: #{cnced_forward.1} parent=1 // pred_check_branch
      %33 = sbr.rel (0) target = $region29
    $region28: #{cnced_forward.1} parent=1 // pred_region
      _
    $region29: #{cnced_forward.1} parent=1 // pred_fallthru
      _
    // Predicated region
    $region30: #{cnced_forward.1} parent=1 // pred_check
      _
    $region31: #{cnced_forward.1} parent=1 // pred_check_branch
      %35 = sbr.rel (0) target = $region33
    $region32: #{cnced_forward.1} parent=1 // pred_region
      _
    $region33: #{cnced_forward.1} parent=1 // pred_fallthru
      _
    // Predicated region
    $region34: #{cnced_forward.1} parent=1 // pred_check
      _
    $region35: #{cnced_forward.1} parent=1 // pred_check_branch
      %37 = sbr.rel (0) target = $region37
    $region36: #{cnced_forward.1} parent=1 // pred_region
      _
    $region37: #{cnced_forward.1} parent=1 // pred_fallthru
      _
    // Predicated region
    $region38: #{cnced_forward.1} parent=1 // pred_check
      _
    $region39: #{cnced_forward.1} parent=1 // pred_check_branch
      %39 = sbr.rel (0) target = $region41
    $region40: #{cnced_forward.1} parent=1 // pred_region
      _
    $region41: #{cnced_forward.1} parent=1 // pred_fallthru
      _
    // Predicated region
    $region42: #{cnced_forward.1} parent=1 // pred_check
      _
    $region43: #{cnced_forward.1} parent=1 // pred_check_branch
      %41 = sbr.rel (0) target = $region45
    $region44: #{cnced_forward.1} parent=1 // pred_region
      _
    $region45: #{cnced_forward.1} parent=1 // pred_fallthru
      _
    // Predicated region
    $region46: #{cnced_forward.1} parent=1 // pred_check
      _
    $region47: #{cnced_forward.1} parent=1 // pred_check_branch
      %43 = sbr.rel (0) target = $region49
    $region48: #{cnced_forward.1} parent=1 // pred_region
      _
    $region49: #{cnced_forward.1} parent=1 // pred_fallthru
      _
    %v44 = vld [vmem:[%s0] sm:$0x7]
    %v45 = vld [vmem:[%s0 + $0x4] sm:$0x7]
    %v46 = vld [vmem:[%s1] sm:$0xff]
    %v47 = vld [vmem:[%s1 + $0x8] sm:$0xff]
    %v48 = vld [vmem:[%s1 + $0x10] sm:$0xff]
    %v49 = vld [vmem:[%s1 + $0x18] sm:$0xff]
    %v50 = vld [vmem:[%s3] sm:$0xff]
    %v51 = vld [vmem:[%s3 + $0x8] sm:$0xff]
    %v52 = vld [vmem:[%s3 + $0x10] sm:$0xff]
    %v53 = vld [vmem:[%s3 + $0x18] sm:$0xff]
    %55 = vset.pattern.permute.xlu0 0
    %56 = vperm.xlu0 %55, %v50
    %v57 = vpop.permute.xlu0 %56
    %60 = vset.pattern.permute.xlu0 0
    %61 = vperm.xlu0 %60, %v51
    %v62 = vpop.permute.xlu0 %61
    %65 = vset.pattern.permute.xlu0 0
    %66 = vperm.xlu0 %65, %v52
    %v67 = vpop.permute.xlu0 %66
    %70 = vset.pattern.permute.xlu0 0
    %71 = vperm.xlu0 %70, %v53
    %v72 = vpop.permute.xlu0 %71
    %v74 = vlaneseq
    %v75 = vshrl.u32 %v74, 7
    %v76 = vsub.s32 0, %v75
    %v77 = vrot.slane %v44, %v76
    %v78 = vlaneseq
    %v79 = vshrl.u32 %v78, 7
    %v80 = vsub.s32 0, %v79
    %v81 = vrot.slane %v45, %v80
    %v82 = vmul.f32 %v57, %v77
    %v83 = vmul.f32 %v62, %v77
    %v84 = vmul.f32 %v67, %v77
    %v85 = vmul.f32 %v72, %v77
    %v86 = vmul.f32 %v57, %v81
    %v87 = vmul.f32 %v62, %v81
    %v88 = vmul.f32 %v67, %v81
    %v89 = vmul.f32 %v72, %v81
    %s90 = scalar_lea.vmem %s3, 32
    %v91 = vld [vmem:[%s90] sm:$0xff]
    %v92 = vld [vmem:[%s90 + $0x8] sm:$0xff]
    %v93 = vld [vmem:[%s90 + $0x10] sm:$0xff]
    %v94 = vld [vmem:[%s90 + $0x18] sm:$0xff]
    %96 = vset.pattern.permute.xlu0 0
    %97 = vperm.xlu0 %96, %v91
    %v98 = vpop.permute.xlu0 %97
    %101 = vset.pattern.permute.xlu0 0
    %102 = vperm.xlu0 %101, %v92
    %v103 = vpop.permute.xlu0 %102
    %106 = vset.pattern.permute.xlu0 0
    %107 = vperm.xlu0 %106, %v93
    %v108 = vpop.permute.xlu0 %107
    %111 = vset.pattern.permute.xlu0 0
    %112 = vperm.xlu0 %111, %v94
    %v113 = vpop.permute.xlu0 %112
    %v115 = vlaneseq
    %v116 = vshrl.u32 %v115, 7
    %v117 = vsub.s32 1, %v116
    %v118 = vrot.slane %v44, %v117
    %v119 = vlaneseq
    %v120 = vshrl.u32 %v119, 7
    %v121 = vsub.s32 1, %v120
    %v122 = vrot.slane %v45, %v121
    %v123 = vmul.f32 %v98, %v118
    %v124 = vmul.f32 %v103, %v118
    %v125 = vmul.f32 %v108, %v118
    %v126 = vmul.f32 %v113, %v118
    %v127 = vmul.f32 %v98, %v122
    %v128 = vmul.f32 %v103, %v122
    %v129 = vmul.f32 %v108, %v122
    %v130 = vmul.f32 %v113, %v122
    %v131 = vadd.f32 %v82, %v123
    %v132 = vadd.f32 %v83, %v124
    %v133 = vadd.f32 %v84, %v125
    %v134 = vadd.f32 %v85, %v126
    %v135 = vadd.f32 %v86, %v127
    %v136 = vadd.f32 %v87, %v128
    %v137 = vadd.f32 %v88, %v129
    %v138 = vadd.f32 %v89, %v130
    %s139 = scalar_lea.vmem %s3, 64
    %v140 = vld [vmem:[%s139] sm:$0xff]
    %v141 = vld [vmem:[%s139 + $0x8] sm:$0xff]
    %v142 = vld [vmem:[%s139 + $0x10] sm:$0xff]
    %v143 = vld [vmem:[%s139 + $0x18] sm:$0xff]
    %145 = vset.pattern.permute.xlu0 0
    %146 = vperm.xlu0 %145, %v140
    %v147 = vpop.permute.xlu0 %146
    %150 = vset.pattern.permute.xlu0 0
    %151 = vperm.xlu0 %150, %v141
    %v152 = vpop.permute.xlu0 %151
    %155 = vset.pattern.permute.xlu0 0
    %156 = vperm.xlu0 %155, %v142
    %v157 = vpop.permute.xlu0 %156
    %160 = vset.pattern.permute.xlu0 0
    %161 = vperm.xlu0 %160, %v143
    %v162 = vpop.permute.xlu0 %161
    %v164 = vlaneseq
    %v165 = vshrl.u32 %v164, 7
    %v166 = vsub.s32 2, %v165
    %v167 = vrot.slane %v44, %v166
    %v168 = vlaneseq
    %v169 = vshrl.u32 %v168, 7
    %v170 = vsub.s32 2, %v169
    %v171 = vrot.slane %v45, %v170
    %v172 = vmul.f32 %v147, %v167
    %v173 = vmul.f32 %v152, %v167
    %v174 = vmul.f32 %v157, %v167
    %v175 = vmul.f32 %v162, %v167
    %v176 = vmul.f32 %v147, %v171
    %v177 = vmul.f32 %v152, %v171
    %v178 = vmul.f32 %v157, %v171
    %v179 = vmul.f32 %v162, %v171
    %v180 = vadd.f32 %v131, %v172
    %v181 = vadd.f32 %v132, %v173
    %v182 = vadd.f32 %v133, %v174
    %v183 = vadd.f32 %v134, %v175
    %v184 = vadd.f32 %v135, %v176
    %v185 = vadd.f32 %v136, %v177
    %v186 = vadd.f32 %v137, %v178
    %v187 = vadd.f32 %v138, %v179
    %v188 = vld [vmem:[%s4] sm:$0xff]
    %v189 = vld [vmem:[%s4 + $0x8] sm:$0xff]
    %v190 = vld [vmem:[%s4 + $0x10] sm:$0xff]
    %v191 = vld [vmem:[%s4 + $0x18] sm:$0xff]
    %v192 = vlaneseq
    %v193 = vshrl.u32 %v192, 7
    %v194 = vsub.s32 0, %v193
    %v195 = vrot.slane %v46, %v194
    %v196 = vlaneseq
    %v197 = vshrl.u32 %v196, 7
    %v198 = vsub.s32 0, %v197
    %v199 = vrot.slane %v48, %v198
    %v200 = vmul.f32 %v188, %v195
    %v201 = vmul.f32 %v189, %v195
    %v202 = vmul.f32 %v190, %v195
    %v203 = vmul.f32 %v191, %v195
    %v204 = vmul.f32 %v188, %v199
    %v205 = vmul.f32 %v189, %v199
    %v206 = vmul.f32 %v190, %v199
    %v207 = vmul.f32 %v191, %v199
    %s208 = scalar_lea.vmem %s4, 32
    %v209 = vld [vmem:[%s208] sm:$0xff]
    %v210 = vld [vmem:[%s208 + $0x8] sm:$0xff]
    %v211 = vld [vmem:[%s208 + $0x10] sm:$0xff]
    %v212 = vld [vmem:[%s208 + $0x18] sm:$0xff]
    %v213 = vlaneseq
    %v214 = vshrl.u32 %v213, 7
    %v215 = vsub.s32 1, %v214
    %v216 = vrot.slane %v46, %v215
    %v217 = vlaneseq
    %v218 = vshrl.u32 %v217, 7
    %v219 = vsub.s32 1, %v218
    %v220 = vrot.slane %v48, %v219
    %v221 = vmul.f32 %v209, %v216
    %v222 = vmul.f32 %v210, %v216
    %v223 = vmul.f32 %v211, %v216
    %v224 = vmul.f32 %v212, %v216
    %v225 = vmul.f32 %v209, %v220
    %v226 = vmul.f32 %v210, %v220
    %v227 = vmul.f32 %v211, %v220
    %v228 = vmul.f32 %v212, %v220
    %v229 = vadd.f32 %v200, %v221
    %v230 = vadd.f32 %v201, %v222
    %v231 = vadd.f32 %v202, %v223
    %v232 = vadd.f32 %v203, %v224
    %v233 = vadd.f32 %v204, %v225
    %v234 = vadd.f32 %v205, %v226
    %v235 = vadd.f32 %v206, %v227
    %v236 = vadd.f32 %v207, %v228
    %s237 = scalar_lea.vmem %s4, 64
    %v238 = vld [vmem:[%s237] sm:$0xff]
    %v239 = vld [vmem:[%s237 + $0x8] sm:$0xff]
    %v240 = vld [vmem:[%s237 + $0x10] sm:$0xff]
    %v241 = vld [vmem:[%s237 + $0x18] sm:$0xff]
    %v242 = vlaneseq
    %v243 = vshrl.u32 %v242, 7
    %v244 = vsub.s32 2, %v243
    %v245 = vrot.slane %v46, %v244
    %v246 = vlaneseq
    %v247 = vshrl.u32 %v246, 7
    %v248 = vsub.s32 2, %v247
    %v249 = vrot.slane %v48, %v248
    %v250 = vmul.f32 %v238, %v245
    %v251 = vmul.f32 %v239, %v245
    %v252 = vmul.f32 %v240, %v245
    %v253 = vmul.f32 %v241, %v245
    %v254 = vmul.f32 %v238, %v249
    %v255 = vmul.f32 %v239, %v249
    %v256 = vmul.f32 %v240, %v249
    %v257 = vmul.f32 %v241, %v249
    %v258 = vadd.f32 %v229, %v250
    %v259 = vadd.f32 %v230, %v251
    %v260 = vadd.f32 %v231, %v252
    %v261 = vadd.f32 %v232, %v253
    %v262 = vadd.f32 %v233, %v254
    %v263 = vadd.f32 %v234, %v255
    %v264 = vadd.f32 %v235, %v256
    %v265 = vadd.f32 %v236, %v257
    %s266 = scalar_lea.vmem %s4, 96
    %v267 = vld [vmem:[%s266] sm:$0xff]
    %v268 = vld [vmem:[%s266 + $0x8] sm:$0xff]
    %v269 = vld [vmem:[%s266 + $0x10] sm:$0xff]
    %v270 = vld [vmem:[%s266 + $0x18] sm:$0xff]
    %v271 = vlaneseq
    %v272 = vshrl.u32 %v271, 7
    %v273 = vsub.s32 3, %v272
    %v274 = vrot.slane %v46, %v273
    %v275 = vlaneseq
    %v276 = vshrl.u32 %v275, 7
    %v277 = vsub.s32 3, %v276
    %v278 = vrot.slane %v48, %v277
    %v279 = vmul.f32 %v267, %v274
    %v280 = vmul.f32 %v268, %v274
    %v281 = vmul.f32 %v269, %v274
    %v282 = vmul.f32 %v270, %v274
    %v283 = vmul.f32 %v267, %v278
    %v284 = vmul.f32 %v268, %v278
    %v285 = vmul.f32 %v269, %v278
    %v286 = vmul.f32 %v270, %v278
    %v287 = vadd.f32 %v258, %v279
    %v288 = vadd.f32 %v259, %v280
    %v289 = vadd.f32 %v260, %v281
    %v290 = vadd.f32 %v261, %v282
    %v291 = vadd.f32 %v262, %v283
    %v292 = vadd.f32 %v263, %v284
    %v293 = vadd.f32 %v264, %v285
    %v294 = vadd.f32 %v265, %v286
    %s295 = scalar_lea.vmem %s4, 128
    %v296 = vld [vmem:[%s295] sm:$0xff]
    %v297 = vld [vmem:[%s295 + $0x8] sm:$0xff]
    %v298 = vld [vmem:[%s295 + $0x10] sm:$0xff]
    %v299 = vld [vmem:[%s295 + $0x18] sm:$0xff]
    %v300 = vlaneseq
    %v301 = vshrl.u32 %v300, 7
    %v302 = vsub.s32 4, %v301
    %v303 = vrot.slane %v46, %v302
    %v304 = vlaneseq
    %v305 = vshrl.u32 %v304, 7
    %v306 = vsub.s32 4, %v305
    %v307 = vrot.slane %v48, %v306
    %v308 = vmul.f32 %v296, %v303
    %v309 = vmul.f32 %v297, %v303
    %v310 = vmul.f32 %v298, %v303
    %v311 = vmul.f32 %v299, %v303
    %v312 = vmul.f32 %v296, %v307
    %v313 = vmul.f32 %v297, %v307
    %v314 = vmul.f32 %v298, %v307
    %v315 = vmul.f32 %v299, %v307
    %v316 = vadd.f32 %v287, %v308
    %v317 = vadd.f32 %v288, %v309
    %v318 = vadd.f32 %v289, %v310
    %v319 = vadd.f32 %v290, %v311
    %v320 = vadd.f32 %v291, %v312
    %v321 = vadd.f32 %v292, %v313
    %v322 = vadd.f32 %v293, %v314
    %v323 = vadd.f32 %v294, %v315
    %s324 = scalar_lea.vmem %s4, 160
    %v325 = vld [vmem:[%s324] sm:$0xff]
    %v326 = vld [vmem:[%s324 + $0x8] sm:$0xff]
    %v327 = vld [vmem:[%s324 + $0x10] sm:$0xff]
    %v328 = vld [vmem:[%s324 + $0x18] sm:$0xff]
    %v329 = vlaneseq
    %v330 = vshrl.u32 %v329, 7
    %v331 = vsub.s32 5, %v330
    %v332 = vrot.slane %v46, %v331
    %v333 = vlaneseq
    %v334 = vshrl.u32 %v333, 7
    %v335 = vsub.s32 5, %v334
    %v336 = vrot.slane %v48, %v335
    %v337 = vmul.f32 %v325, %v332
    %v338 = vmul.f32 %v326, %v332
    %v339 = vmul.f32 %v327, %v332
    %v340 = vmul.f32 %v328, %v332
    %v341 = vmul.f32 %v325, %v336
    %v342 = vmul.f32 %v326, %v336
    %v343 = vmul.f32 %v327, %v336
    %v344 = vmul.f32 %v328, %v336
    %v345 = vadd.f32 %v316, %v337
    %v346 = vadd.f32 %v317, %v338
    %v347 = vadd.f32 %v318, %v339
    %v348 = vadd.f32 %v319, %v340
    %v349 = vadd.f32 %v320, %v341
    %v350 = vadd.f32 %v321, %v342
    %v351 = vadd.f32 %v322, %v343
    %v352 = vadd.f32 %v323, %v344
    %s353 = scalar_lea.vmem %s4, 192
    %v354 = vld [vmem:[%s353] sm:$0xff]
    %v355 = vld [vmem:[%s353 + $0x8] sm:$0xff]
    %v356 = vld [vmem:[%s353 + $0x10] sm:$0xff]
    %v357 = vld [vmem:[%s353 + $0x18] sm:$0xff]
    %v358 = vlaneseq
    %v359 = vshrl.u32 %v358, 7
    %v360 = vsub.s32 6, %v359
    %v361 = vrot.slane %v46, %v360
    %v362 = vlaneseq
    %v363 = vshrl.u32 %v362, 7
    %v364 = vsub.s32 6, %v363
    %v365 = vrot.slane %v48, %v364
    %v366 = vmul.f32 %v354, %v361
    %v367 = vmul.f32 %v355, %v361
    %v368 = vmul.f32 %v356, %v361
    %v369 = vmul.f32 %v357, %v361
    %v370 = vmul.f32 %v354, %v365
    %v371 = vmul.f32 %v355, %v365
    %v372 = vmul.f32 %v356, %v365
    %v373 = vmul.f32 %v357, %v365
    %v374 = vadd.f32 %v345, %v366
    %v375 = vadd.f32 %v346, %v367
    %v376 = vadd.f32 %v347, %v368
    %v377 = vadd.f32 %v348, %v369
    %v378 = vadd.f32 %v349, %v370
    %v379 = vadd.f32 %v350, %v371
    %v380 = vadd.f32 %v351, %v372
    %v381 = vadd.f32 %v352, %v373
    %s382 = scalar_lea.vmem %s4, 224
    %v383 = vld [vmem:[%s382] sm:$0xff]
    %v384 = vld [vmem:[%s382 + $0x8] sm:$0xff]
    %v385 = vld [vmem:[%s382 + $0x10] sm:$0xff]
    %v386 = vld [vmem:[%s382 + $0x18] sm:$0xff]
    %v387 = vlaneseq
    %v388 = vshrl.u32 %v387, 7
    %v389 = vsub.s32 7, %v388
    %v390 = vrot.slane %v46, %v389
    %v391 = vlaneseq
    %v392 = vshrl.u32 %v391, 7
    %v393 = vsub.s32 7, %v392
    %v394 = vrot.slane %v48, %v393
    %v395 = vmul.f32 %v383, %v390
    %v396 = vmul.f32 %v384, %v390
    %v397 = vmul.f32 %v385, %v390
    %v398 = vmul.f32 %v386, %v390
    %v399 = vmul.f32 %v383, %v394
    %v400 = vmul.f32 %v384, %v394
    %v401 = vmul.f32 %v385, %v394
    %v402 = vmul.f32 %v386, %v394
    %v403 = vadd.f32 %v374, %v395
    %v404 = vadd.f32 %v375, %v396
    %v405 = vadd.f32 %v376, %v397
    %v406 = vadd.f32 %v377, %v398
    %v407 = vadd.f32 %v378, %v399
    %v408 = vadd.f32 %v379, %v400
    %v409 = vadd.f32 %v380, %v401
    %v410 = vadd.f32 %v381, %v402
    %s411 = scalar_lea.vmem %s4, 256
    %v412 = vld [vmem:[%s411] sm:$0xff]
    %v413 = vld [vmem:[%s411 + $0x8] sm:$0xff]
    %v414 = vld [vmem:[%s411 + $0x10] sm:$0xff]
    %v415 = vld [vmem:[%s411 + $0x18] sm:$0xff]
    %v416 = vlaneseq
    %v417 = vshrl.u32 %v416, 7
    %v418 = vsub.s32 0, %v417
    %v419 = vrot.slane %v47, %v418
    %v420 = vlaneseq
    %v421 = vshrl.u32 %v420, 7
    %v422 = vsub.s32 0, %v421
    %v423 = vrot.slane %v49, %v422
    %v424 = vmul.f32 %v412, %v419
    %v425 = vmul.f32 %v413, %v419
    %v426 = vmul.f32 %v414, %v419
    %v427 = vmul.f32 %v415, %v419
    %v428 = vmul.f32 %v412, %v423
    %v429 = vmul.f32 %v413, %v423
    %v430 = vmul.f32 %v414, %v423
    %v431 = vmul.f32 %v415, %v423
    %v432 = vadd.f32 %v403, %v424
    %v433 = vadd.f32 %v404, %v425
    %v434 = vadd.f32 %v405, %v426
    %v435 = vadd.f32 %v406, %v427
    %v436 = vadd.f32 %v407, %v428
    %v437 = vadd.f32 %v408, %v429
    %v438 = vadd.f32 %v409, %v430
    %v439 = vadd.f32 %v410, %v431
    %s440 = scalar_lea.vmem %s4, 288
    %v441 = vld [vmem:[%s440] sm:$0xff]
    %v442 = vld [vmem:[%s440 + $0x8] sm:$0xff]
    %v443 = vld [vmem:[%s440 + $0x10] sm:$0xff]
    %v444 = vld [vmem:[%s440 + $0x18] sm:$0xff]
    %v445 = vlaneseq
    %v446 = vshrl.u32 %v445, 7
    %v447 = vsub.s32 1, %v446
    %v448 = vrot.slane %v47, %v447
    %v449 = vlaneseq
    %v450 = vshrl.u32 %v449, 7
    %v451 = vsub.s32 1, %v450
    %v452 = vrot.slane %v49, %v451
    %v453 = vmul.f32 %v441, %v448
    %v454 = vmul.f32 %v442, %v448
    %v455 = vmul.f32 %v443, %v448
    %v456 = vmul.f32 %v444, %v448
    %v457 = vmul.f32 %v441, %v452
    %v458 = vmul.f32 %v442, %v452
    %v459 = vmul.f32 %v443, %v452
    %v460 = vmul.f32 %v444, %v452
    %v461 = vadd.f32 %v432, %v453
    %v462 = vadd.f32 %v433, %v454
    %v463 = vadd.f32 %v434, %v455
    %v464 = vadd.f32 %v435, %v456
    %v465 = vadd.f32 %v436, %v457
    %v466 = vadd.f32 %v437, %v458
    %v467 = vadd.f32 %v438, %v459
    %v468 = vadd.f32 %v439, %v460
    %s469 = scalar_lea.vmem %s4, 320
    %v470 = vld [vmem:[%s469] sm:$0xff]
    %v471 = vld [vmem:[%s469 + $0x8] sm:$0xff]
    %v472 = vld [vmem:[%s469 + $0x10] sm:$0xff]
    %v473 = vld [vmem:[%s469 + $0x18] sm:$0xff]
    %v474 = vlaneseq
    %v475 = vshrl.u32 %v474, 7
    %v476 = vsub.s32 2, %v475
    %v477 = vrot.slane %v47, %v476
    %v478 = vlaneseq
    %v479 = vshrl.u32 %v478, 7
    %v480 = vsub.s32 2, %v479
    %v481 = vrot.slane %v49, %v480
    %v482 = vmul.f32 %v470, %v477
    %v483 = vmul.f32 %v471, %v477
    %v484 = vmul.f32 %v472, %v477
    %v485 = vmul.f32 %v473, %v477
    %v486 = vmul.f32 %v470, %v481
    %v487 = vmul.f32 %v471, %v481
    %v488 = vmul.f32 %v472, %v481
    %v489 = vmul.f32 %v473, %v481
    %v490 = vadd.f32 %v461, %v482
    %v491 = vadd.f32 %v462, %v483
    %v492 = vadd.f32 %v463, %v484
    %v493 = vadd.f32 %v464, %v485
    %v494 = vadd.f32 %v465, %v486
    %v495 = vadd.f32 %v466, %v487
    %v496 = vadd.f32 %v467, %v488
    %v497 = vadd.f32 %v468, %v489
    %s498 = scalar_lea.vmem %s4, 352
    %v499 = vld [vmem:[%s498] sm:$0xff]
    %v500 = vld [vmem:[%s498 + $0x8] sm:$0xff]
    %v501 = vld [vmem:[%s498 + $0x10] sm:$0xff]
    %v502 = vld [vmem:[%s498 + $0x18] sm:$0xff]
    %v503 = vlaneseq
    %v504 = vshrl.u32 %v503, 7
    %v505 = vsub.s32 3, %v504
    %v506 = vrot.slane %v47, %v505
    %v507 = vlaneseq
    %v508 = vshrl.u32 %v507, 7
    %v509 = vsub.s32 3, %v508
    %v510 = vrot.slane %v49, %v509
    %v511 = vmul.f32 %v499, %v506
    %v512 = vmul.f32 %v500, %v506
    %v513 = vmul.f32 %v501, %v506
    %v514 = vmul.f32 %v502, %v506
    %v515 = vmul.f32 %v499, %v510
    %v516 = vmul.f32 %v500, %v510
    %v517 = vmul.f32 %v501, %v510
    %v518 = vmul.f32 %v502, %v510
    %v519 = vadd.f32 %v490, %v511
    %v520 = vadd.f32 %v491, %v512
    %v521 = vadd.f32 %v492, %v513
    %v522 = vadd.f32 %v493, %v514
    %v523 = vadd.f32 %v494, %v515
    %v524 = vadd.f32 %v495, %v516
    %v525 = vadd.f32 %v496, %v517
    %v526 = vadd.f32 %v497, %v518
    %s527 = scalar_lea.vmem %s4, 384
    %v528 = vld [vmem:[%s527] sm:$0xff]
    %v529 = vld [vmem:[%s527 + $0x8] sm:$0xff]
    %v530 = vld [vmem:[%s527 + $0x10] sm:$0xff]
    %v531 = vld [vmem:[%s527 + $0x18] sm:$0xff]
    %v532 = vlaneseq
    %v533 = vshrl.u32 %v532, 7
    %v534 = vsub.s32 4, %v533
    %v535 = vrot.slane %v47, %v534
    %v536 = vlaneseq
    %v537 = vshrl.u32 %v536, 7
    %v538 = vsub.s32 4, %v537
    %v539 = vrot.slane %v49, %v538
    %v540 = vmul.f32 %v528, %v535
    %v541 = vmul.f32 %v529, %v535
    %v542 = vmul.f32 %v530, %v535
    %v543 = vmul.f32 %v531, %v535
    %v544 = vmul.f32 %v528, %v539
    %v545 = vmul.f32 %v529, %v539
    %v546 = vmul.f32 %v530, %v539
    %v547 = vmul.f32 %v531, %v539
    %v548 = vadd.f32 %v519, %v540
    %v549 = vadd.f32 %v520, %v541
    %v550 = vadd.f32 %v521, %v542
    %v551 = vadd.f32 %v522, %v543
    %v552 = vadd.f32 %v523, %v544
    %v553 = vadd.f32 %v524, %v545
    %v554 = vadd.f32 %v525, %v546
    %v555 = vadd.f32 %v526, %v547
    %s556 = scalar_lea.vmem %s4, 416
    %v557 = vld [vmem:[%s556] sm:$0xff]
    %v558 = vld [vmem:[%s556 + $0x8] sm:$0xff]
    %v559 = vld [vmem:[%s556 + $0x10] sm:$0xff]
    %v560 = vld [vmem:[%s556 + $0x18] sm:$0xff]
    %v561 = vlaneseq
    %v562 = vshrl.u32 %v561, 7
    %v563 = vsub.s32 5, %v562
    %v564 = vrot.slane %v47, %v563
    %v565 = vlaneseq
    %v566 = vshrl.u32 %v565, 7
    %v567 = vsub.s32 5, %v566
    %v568 = vrot.slane %v49, %v567
    %v569 = vmul.f32 %v557, %v564
    %v570 = vmul.f32 %v558, %v564
    %v571 = vmul.f32 %v559, %v564
    %v572 = vmul.f32 %v560, %v564
    %v573 = vmul.f32 %v557, %v568
    %v574 = vmul.f32 %v558, %v568
    %v575 = vmul.f32 %v559, %v568
    %v576 = vmul.f32 %v560, %v568
    %v577 = vadd.f32 %v548, %v569
    %v578 = vadd.f32 %v549, %v570
    %v579 = vadd.f32 %v550, %v571
    %v580 = vadd.f32 %v551, %v572
    %v581 = vadd.f32 %v552, %v573
    %v582 = vadd.f32 %v553, %v574
    %v583 = vadd.f32 %v554, %v575
    %v584 = vadd.f32 %v555, %v576
    %s585 = scalar_lea.vmem %s4, 448
    %v586 = vld [vmem:[%s585] sm:$0xff]
    %v587 = vld [vmem:[%s585 + $0x8] sm:$0xff]
    %v588 = vld [vmem:[%s585 + $0x10] sm:$0xff]
    %v589 = vld [vmem:[%s585 + $0x18] sm:$0xff]
    %v590 = vlaneseq
    %v591 = vshrl.u32 %v590, 7
    %v592 = vsub.s32 6, %v591
    %v593 = vrot.slane %v47, %v592
    %v594 = vlaneseq
    %v595 = vshrl.u32 %v594, 7
    %v596 = vsub.s32 6, %v595
    %v597 = vrot.slane %v49, %v596
    %v598 = vmul.f32 %v586, %v593
    %v599 = vmul.f32 %v587, %v593
    %v600 = vmul.f32 %v588, %v593
    %v601 = vmul.f32 %v589, %v593
    %v602 = vmul.f32 %v586, %v597
    %v603 = vmul.f32 %v587, %v597
    %v604 = vmul.f32 %v588, %v597
    %v605 = vmul.f32 %v589, %v597
    %v606 = vadd.f32 %v577, %v598
    %v607 = vadd.f32 %v578, %v599
    %v608 = vadd.f32 %v579, %v600
    %v609 = vadd.f32 %v580, %v601
    %v610 = vadd.f32 %v581, %v602
    %v611 = vadd.f32 %v582, %v603
    %v612 = vadd.f32 %v583, %v604
    %v613 = vadd.f32 %v584, %v605
    %s614 = scalar_lea.vmem %s4, 480
    %v615 = vld [vmem:[%s614] sm:$0xff]
    %v616 = vld [vmem:[%s614 + $0x8] sm:$0xff]
    %v617 = vld [vmem:[%s614 + $0x10] sm:$0xff]
    %v618 = vld [vmem:[%s614 + $0x18] sm:$0xff]
    %v619 = vlaneseq
    %v620 = vshrl.u32 %v619, 7
    %v621 = vsub.s32 7, %v620
    %v622 = vrot.slane %v47, %v621
    %v623 = vlaneseq
    %v624 = vshrl.u32 %v623, 7
    %v625 = vsub.s32 7, %v624
    %v626 = vrot.slane %v49, %v625
    %v627 = vmul.f32 %v615, %v622
    %v628 = vmul.f32 %v616, %v622
    %v629 = vmul.f32 %v617, %v622
    %v630 = vmul.f32 %v618, %v622
    %v631 = vmul.f32 %v615, %v626
    %v632 = vmul.f32 %v616, %v626
    %v633 = vmul.f32 %v617, %v626
    %v634 = vmul.f32 %v618, %v626
    %v635 = vadd.f32 %v606, %v627
    %v636 = vadd.f32 %v607, %v628
    %v637 = vadd.f32 %v608, %v629
    %v638 = vadd.f32 %v609, %v630
    %v639 = vadd.f32 %v610, %v631
    %v640 = vadd.f32 %v611, %v632
    %v641 = vadd.f32 %v612, %v633
    %v642 = vadd.f32 %v613, %v634
    %644 = vset.pattern.permute.xlu0 0
    %645 = vperm.xlu0 %644, %v635
    %v646 = vpop.permute.xlu0 %645
    %649 = vset.pattern.permute.xlu0 0
    %650 = vperm.xlu0 %649, %v636
    %v651 = vpop.permute.xlu0 %650
    %654 = vset.pattern.permute.xlu0 0
    %655 = vperm.xlu0 %654, %v637
    %v656 = vpop.permute.xlu0 %655
    %659 = vset.pattern.permute.xlu0 0
    %660 = vperm.xlu0 %659, %v638
    %v661 = vpop.permute.xlu0 %660
    %664 = vset.pattern.permute.xlu0 0
    %665 = vperm.xlu0 %664, %v639
    %v666 = vpop.permute.xlu0 %665
    %669 = vset.pattern.permute.xlu0 0
    %670 = vperm.xlu0 %669, %v640
    %v671 = vpop.permute.xlu0 %670
    %674 = vset.pattern.permute.xlu0 0
    %675 = vperm.xlu0 %674, %v641
    %v676 = vpop.permute.xlu0 %675
    %679 = vset.pattern.permute.xlu0 0
    %680 = vperm.xlu0 %679, %v642
    %v681 = vpop.permute.xlu0 %680
    %v683 = vadd.f32 %v180, %v646
    %v684 = vadd.f32 %v181, %v651
    %v685 = vadd.f32 %v182, %v656
    %v686 = vadd.f32 %v183, %v661
    %v687 = vadd.f32 %v184, %v666
    %v688 = vadd.f32 %v185, %v671
    %v689 = vadd.f32 %v186, %v676
    %v690 = vadd.f32 %v187, %v681
    %v691 = vld [vmem:[%s5] sm:$0xff]
    %v692 = vld [vmem:[%s5 + $0x8] sm:$0xff]
    %v693 = vld [vmem:[%s5 + $0x10] sm:$0xff]
    %v694 = vld [vmem:[%s5 + $0x18] sm:$0xff]
    %696 = vset.pattern.permute.xlu0 0
    %697 = vperm.xlu0 %696, %v691
    %v698 = vpop.permute.xlu0 %697
    %701 = vset.pattern.permute.xlu0 0
    %702 = vperm.xlu0 %701, %v692
    %v703 = vpop.permute.xlu0 %702
    %706 = vset.pattern.permute.xlu0 0
    %707 = vperm.xlu0 %706, %v693
    %v708 = vpop.permute.xlu0 %707
    %711 = vset.pattern.permute.xlu0 0
    %712 = vperm.xlu0 %711, %v694
    %v713 = vpop.permute.xlu0 %712
    %v715 = vadd.f32 %v683, %v698
    %v716 = vadd.f32 %v684, %v703
    %v717 = vadd.f32 %v685, %v708
    %v718 = vadd.f32 %v686, %v713
    %v719 = vadd.f32 %v687, %v698
    %v720 = vadd.f32 %v688, %v703
    %v721 = vadd.f32 %v689, %v708
    %v722 = vadd.f32 %v690, %v713
    %v723 = vmax.f32 %v715, 0.0
    %v724 = vmax.f32 %v716, 0.0
    %v725 = vmax.f32 %v717, 0.0
    %v726 = vmax.f32 %v718, 0.0
    %v727 = vmax.f32 %v719, 0.0
    %v728 = vmax.f32 %v720, 0.0
    %v729 = vmax.f32 %v721, 0.0
    %v730 = vmax.f32 %v722, 0.0
    %v731 = vld [vmem:[%s6] sm:$0x7]
    %733 = vset.pattern.permute.xlu0 0
    %734 = vperm.xlu0 %733, %v731
    %v735 = vpop.permute.xlu0 %734
    %v737 = vlaneseq
    %v738 = vshrl.u32 %v737, 7
    %v739 = vsub.s32 0, %v738
    %v740 = vrot.slane %v723, %v739
    %v741 = vlaneseq
    %v742 = vshrl.u32 %v741, 7
    %v743 = vsub.s32 0, %v742
    %v744 = vrot.slane %v727, %v743
    %v745 = vmul.f32 %v735, %v740
    %v746 = vmul.f32 %v735, %v744
    %s747 = scalar_lea.vmem %s6, 4
    %v748 = vld [vmem:[%s747] sm:$0x7]
    %750 = vset.pattern.permute.xlu0 0
    %751 = vperm.xlu0 %750, %v748
    %v752 = vpop.permute.xlu0 %751
    %v754 = vlaneseq
    %v755 = vshrl.u32 %v754, 7
    %v756 = vsub.s32 1, %v755
    %v757 = vrot.slane %v723, %v756
    %v758 = vlaneseq
    %v759 = vshrl.u32 %v758, 7
    %v760 = vsub.s32 1, %v759
    %v761 = vrot.slane %v727, %v760
    %v762 = vmul.f32 %v752, %v757
    %v763 = vmul.f32 %v752, %v761
    %v764 = vadd.f32 %v745, %v762
    %v765 = vadd.f32 %v746, %v763
    %s766 = scalar_lea.vmem %s6, 8
    %v767 = vld [vmem:[%s766] sm:$0x7]
    %769 = vset.pattern.permute.xlu0 0
    %770 = vperm.xlu0 %769, %v767
    %v771 = vpop.permute.xlu0 %770
    %v773 = vlaneseq
    %v774 = vshrl.u32 %v773, 7
    %v775 = vsub.s32 2, %v774
    %v776 = vrot.slane %v723, %v775
    %v777 = vlaneseq
    %v778 = vshrl.u32 %v777, 7
    %v779 = vsub.s32 2, %v778
    %v780 = vrot.slane %v727, %v779
    %v781 = vmul.f32 %v771, %v776
    %v782 = vmul.f32 %v771, %v780
    %v783 = vadd.f32 %v764, %v781
    %v784 = vadd.f32 %v765, %v782
    %s785 = scalar_lea.vmem %s6, 12
    %v786 = vld [vmem:[%s785] sm:$0x7]
    %788 = vset.pattern.permute.xlu0 0
    %789 = vperm.xlu0 %788, %v786
    %v790 = vpop.permute.xlu0 %789
    %v792 = vlaneseq
    %v793 = vshrl.u32 %v792, 7
    %v794 = vsub.s32 3, %v793
    %v795 = vrot.slane %v723, %v794
    %v796 = vlaneseq
    %v797 = vshrl.u32 %v796, 7
    %v798 = vsub.s32 3, %v797
    %v799 = vrot.slane %v727, %v798
    %v800 = vmul.f32 %v790, %v795
    %v801 = vmul.f32 %v790, %v799
    %v802 = vadd.f32 %v783, %v800
    %v803 = vadd.f32 %v784, %v801
    %s804 = scalar_lea.vmem %s6, 16
    %v805 = vld [vmem:[%s804] sm:$0x7]
    %807 = vset.pattern.permute.xlu0 0
    %808 = vperm.xlu0 %807, %v805
    %v809 = vpop.permute.xlu0 %808
    %v811 = vlaneseq
    %v812 = vshrl.u32 %v811, 7
    %v813 = vsub.s32 4, %v812
    %v814 = vrot.slane %v723, %v813
    %v815 = vlaneseq
    %v816 = vshrl.u32 %v815, 7
    %v817 = vsub.s32 4, %v816
    %v818 = vrot.slane %v727, %v817
    %v819 = vmul.f32 %v809, %v814
    %v820 = vmul.f32 %v809, %v818
    %v821 = vadd.f32 %v802, %v819
    %v822 = vadd.f32 %v803, %v820
    %s823 = scalar_lea.vmem %s6, 20
    %v824 = vld [vmem:[%s823] sm:$0x7]
    %826 = vset.pattern.permute.xlu0 0
    %827 = vperm.xlu0 %826, %v824
    %v828 = vpop.permute.xlu0 %827
    %v830 = vlaneseq
    %v831 = vshrl.u32 %v830, 7
    %v832 = vsub.s32 5, %v831
    %v833 = vrot.slane %v723, %v832
    %v834 = vlaneseq
    %v835 = vshrl.u32 %v834, 7
    %v836 = vsub.s32 5, %v835
    %v837 = vrot.slane %v727, %v836
    %v838 = vmul.f32 %v828, %v833
    %v839 = vmul.f32 %v828, %v837
    %v840 = vadd.f32 %v821, %v838
    %v841 = vadd.f32 %v822, %v839
    %s842 = scalar_lea.vmem %s6, 24
    %v843 = vld [vmem:[%s842] sm:$0x7]
    %845 = vset.pattern.permute.xlu0 0
    %846 = vperm.xlu0 %845, %v843
    %v847 = vpop.permute.xlu0 %846
    %v849 = vlaneseq
    %v850 = vshrl.u32 %v849, 7
    %v851 = vsub.s32 6, %v850
    %v852 = vrot.slane %v723, %v851
    %v853 = vlaneseq
    %v854 = vshrl.u32 %v853, 7
    %v855 = vsub.s32 6, %v854
    %v856 = vrot.slane %v727, %v855
    %v857 = vmul.f32 %v847, %v852
    %v858 = vmul.f32 %v847, %v856
    %v859 = vadd.f32 %v840, %v857
    %v860 = vadd.f32 %v841, %v858
    %s861 = scalar_lea.vmem %s6, 28
    %v862 = vld [vmem:[%s861] sm:$0x7]
    %864 = vset.pattern.permute.xlu0 0
    %865 = vperm.xlu0 %864, %v862
    %v866 = vpop.permute.xlu0 %865
    %v868 = vlaneseq
    %v869 = vshrl.u32 %v868, 7
    %v870 = vsub.s32 7, %v869
    %v871 = vrot.slane %v723, %v870
    %v872 = vlaneseq
    %v873 = vshrl.u32 %v872, 7
    %v874 = vsub.s32 7, %v873
    %v875 = vrot.slane %v727, %v874
    %v876 = vmul.f32 %v866, %v871
    %v877 = vmul.f32 %v866, %v875
    %v878 = vadd.f32 %v859, %v876
    %v879 = vadd.f32 %v860, %v877
    %s880 = scalar_lea.vmem %s6, 32
    %v881 = vld [vmem:[%s880] sm:$0x7]
    %883 = vset.pattern.permute.xlu0 0
    %884 = vperm.xlu0 %883, %v881
    %v885 = vpop.permute.xlu0 %884
    %v887 = vlaneseq
    %v888 = vshrl.u32 %v887, 7
    %v889 = vsub.s32 0, %v888
    %v890 = vrot.slane %v724, %v889
    %v891 = vlaneseq
    %v892 = vshrl.u32 %v891, 7
    %v893 = vsub.s32 0, %v892
    %v894 = vrot.slane %v728, %v893
    %v895 = vmul.f32 %v885, %v890
    %v896 = vmul.f32 %v885, %v894
    %v897 = vadd.f32 %v878, %v895
    %v898 = vadd.f32 %v879, %v896
    %s899 = scalar_lea.vmem %s6, 36
    %v900 = vld [vmem:[%s899] sm:$0x7]
    %902 = vset.pattern.permute.xlu0 0
    %903 = vperm.xlu0 %902, %v900
    %v904 = vpop.permute.xlu0 %903
    %v906 = vlaneseq
    %v907 = vshrl.u32 %v906, 7
    %v908 = vsub.s32 1, %v907
    %v909 = vrot.slane %v724, %v908
    %v910 = vlaneseq
    %v911 = vshrl.u32 %v910, 7
    %v912 = vsub.s32 1, %v911
    %v913 = vrot.slane %v728, %v912
    %v914 = vmul.f32 %v904, %v909
    %v915 = vmul.f32 %v904, %v913
    %v916 = vadd.f32 %v897, %v914
    %v917 = vadd.f32 %v898, %v915
    %s918 = scalar_lea.vmem %s6, 40
    %v919 = vld [vmem:[%s918] sm:$0x7]
    %921 = vset.pattern.permute.xlu0 0
    %922 = vperm.xlu0 %921, %v919
    %v923 = vpop.permute.xlu0 %922
    %v925 = vlaneseq
    %v926 = vshrl.u32 %v925, 7
    %v927 = vsub.s32 2, %v926
    %v928 = vrot.slane %v724, %v927
    %v929 = vlaneseq
    %v930 = vshrl.u32 %v929, 7
    %v931 = vsub.s32 2, %v930
    %v932 = vrot.slane %v728, %v931
    %v933 = vmul.f32 %v923, %v928
    %v934 = vmul.f32 %v923, %v932
    %v935 = vadd.f32 %v916, %v933
    %v936 = vadd.f32 %v917, %v934
    %s937 = scalar_lea.vmem %s6, 44
    %v938 = vld [vmem:[%s937] sm:$0x7]
    %940 = vset.pattern.permute.xlu0 0
    %941 = vperm.xlu0 %940, %v938
    %v942 = vpop.permute.xlu0 %941
    %v944 = vlaneseq
    %v945 = vshrl.u32 %v944, 7
    %v946 = vsub.s32 3, %v945
    %v947 = vrot.slane %v724, %v946
    %v948 = vlaneseq
    %v949 = vshrl.u32 %v948, 7
    %v950 = vsub.s32 3, %v949
    %v951 = vrot.slane %v728, %v950
    %v952 = vmul.f32 %v942, %v947
    %v953 = vmul.f32 %v942, %v951
    %v954 = vadd.f32 %v935, %v952
    %v955 = vadd.f32 %v936, %v953
    %s956 = scalar_lea.vmem %s6, 48
    %v957 = vld [vmem:[%s956] sm:$0x7]
    %959 = vset.pattern.permute.xlu0 0
    %960 = vperm.xlu0 %959, %v957
    %v961 = vpop.permute.xlu0 %960
    %v963 = vlaneseq
    %v964 = vshrl.u32 %v963, 7
    %v965 = vsub.s32 4, %v964
    %v966 = vrot.slane %v724, %v965
    %v967 = vlaneseq
    %v968 = vshrl.u32 %v967, 7
    %v969 = vsub.s32 4, %v968
    %v970 = vrot.slane %v728, %v969
    %v971 = vmul.f32 %v961, %v966
    %v972 = vmul.f32 %v961, %v970
    %v973 = vadd.f32 %v954, %v971
    %v974 = vadd.f32 %v955, %v972
    %s975 = scalar_lea.vmem %s6, 52
    %v976 = vld [vmem:[%s975] sm:$0x7]
    %978 = vset.pattern.permute.xlu0 0
    %979 = vperm.xlu0 %978, %v976
    %v980 = vpop.permute.xlu0 %979
    %v982 = vlaneseq
    %v983 = vshrl.u32 %v982, 7
    %v984 = vsub.s32 5, %v983
    %v985 = vrot.slane %v724, %v984
    %v986 = vlaneseq
    %v987 = vshrl.u32 %v986, 7
    %v988 = vsub.s32 5, %v987
    %v989 = vrot.slane %v728, %v988
    %v990 = vmul.f32 %v980, %v985
    %v991 = vmul.f32 %v980, %v989
    %v992 = vadd.f32 %v973, %v990
    %v993 = vadd.f32 %v974, %v991
    %s994 = scalar_lea.vmem %s6, 56
    %v995 = vld [vmem:[%s994] sm:$0x7]
    %997 = vset.pattern.permute.xlu0 0
    %998 = vperm.xlu0 %997, %v995
    %v999 = vpop.permute.xlu0 %998
    %v1001 = vlaneseq
    %v1002 = vshrl.u32 %v1001, 7
    %v1003 = vsub.s32 6, %v1002
    %v1004 = vrot.slane %v724, %v1003
    %v1005 = vlaneseq
    %v1006 = vshrl.u32 %v1005, 7
    %v1007 = vsub.s32 6, %v1006
    %v1008 = vrot.slane %v728, %v1007
    %v1009 = vmul.f32 %v999, %v1004
    %v1010 = vmul.f32 %v999, %v1008
    %v1011 = vadd.f32 %v992, %v1009
    %v1012 = vadd.f32 %v993, %v1010
    %s1013 = scalar_lea.vmem %s6, 60
    %v1014 = vld [vmem:[%s1013] sm:$0x7]
    %1016 = vset.pattern.permute.xlu0 0
    %1017 = vperm.xlu0 %1016, %v1014
    %v1018 = vpop.permute.xlu0 %1017
    %v1020 = vlaneseq
    %v1021 = vshrl.u32 %v1020, 7
    %v1022 = vsub.s32 7, %v1021
    %v1023 = vrot.slane %v724, %v1022
    %v1024 = vlaneseq
    %v1025 = vshrl.u32 %v1024, 7
    %v1026 = vsub.s32 7, %v1025
    %v1027 = vrot.slane %v728, %v1026
    %v1028 = vmul.f32 %v1018, %v1023
    %v1029 = vmul.f32 %v1018, %v1027
    %v1030 = vadd.f32 %v1011, %v1028
    %v1031 = vadd.f32 %v1012, %v1029
    %s1032 = scalar_lea.vmem %s6, 64
    %v1033 = vld [vmem:[%s1032] sm:$0x7]
    %1035 = vset.pattern.permute.xlu0 0
    %1036 = vperm.xlu0 %1035, %v1033
    %v1037 = vpop.permute.xlu0 %1036
    %v1039 = vlaneseq
    %v1040 = vshrl.u32 %v1039, 7
    %v1041 = vsub.s32 0, %v1040
    %v1042 = vrot.slane %v725, %v1041
    %v1043 = vlaneseq
    %v1044 = vshrl.u32 %v1043, 7
    %v1045 = vsub.s32 0, %v1044
    %v1046 = vrot.slane %v729, %v1045
    %v1047 = vmul.f32 %v1037, %v1042
    %v1048 = vmul.f32 %v1037, %v1046
    %v1049 = vadd.f32 %v1030, %v1047
    %v1050 = vadd.f32 %v1031, %v1048
    %s1051 = scalar_lea.vmem %s6, 68
    %v1052 = vld [vmem:[%s1051] sm:$0x7]
    %1054 = vset.pattern.permute.xlu0 0
    %1055 = vperm.xlu0 %1054, %v1052
    %v1056 = vpop.permute.xlu0 %1055
    %v1058 = vlaneseq
    %v1059 = vshrl.u32 %v1058, 7
    %v1060 = vsub.s32 1, %v1059
    %v1061 = vrot.slane %v725, %v1060
    %v1062 = vlaneseq
    %v1063 = vshrl.u32 %v1062, 7
    %v1064 = vsub.s32 1, %v1063
    %v1065 = vrot.slane %v729, %v1064
    %v1066 = vmul.f32 %v1056, %v1061
    %v1067 = vmul.f32 %v1056, %v1065
    %v1068 = vadd.f32 %v1049, %v1066
    %v1069 = vadd.f32 %v1050, %v1067
    %s1070 = scalar_lea.vmem %s6, 72
    %v1071 = vld [vmem:[%s1070] sm:$0x7]
    %1073 = vset.pattern.permute.xlu0 0
    %1074 = vperm.xlu0 %1073, %v1071
    %v1075 = vpop.permute.xlu0 %1074
    %v1077 = vlaneseq
    %v1078 = vshrl.u32 %v1077, 7
    %v1079 = vsub.s32 2, %v1078
    %v1080 = vrot.slane %v725, %v1079
    %v1081 = vlaneseq
    %v1082 = vshrl.u32 %v1081, 7
    %v1083 = vsub.s32 2, %v1082
    %v1084 = vrot.slane %v729, %v1083
    %v1085 = vmul.f32 %v1075, %v1080
    %v1086 = vmul.f32 %v1075, %v1084
    %v1087 = vadd.f32 %v1068, %v1085
    %v1088 = vadd.f32 %v1069, %v1086
    %s1089 = scalar_lea.vmem %s6, 76
    %v1090 = vld [vmem:[%s1089] sm:$0x7]
    %1092 = vset.pattern.permute.xlu0 0
    %1093 = vperm.xlu0 %1092, %v1090
    %v1094 = vpop.permute.xlu0 %1093
    %v1096 = vlaneseq
    %v1097 = vshrl.u32 %v1096, 7
    %v1098 = vsub.s32 3, %v1097
    %v1099 = vrot.slane %v725, %v1098
    %v1100 = vlaneseq
    %v1101 = vshrl.u32 %v1100, 7
    %v1102 = vsub.s32 3, %v1101
    %v1103 = vrot.slane %v729, %v1102
    %v1104 = vmul.f32 %v1094, %v1099
    %v1105 = vmul.f32 %v1094, %v1103
    %v1106 = vadd.f32 %v1087, %v1104
    %v1107 = vadd.f32 %v1088, %v1105
    %s1108 = scalar_lea.vmem %s6, 80
    %v1109 = vld [vmem:[%s1108] sm:$0x7]
    %1111 = vset.pattern.permute.xlu0 0
    %1112 = vperm.xlu0 %1111, %v1109
    %v1113 = vpop.permute.xlu0 %1112
    %v1115 = vlaneseq
    %v1116 = vshrl.u32 %v1115, 7
    %v1117 = vsub.s32 4, %v1116
    %v1118 = vrot.slane %v725, %v1117
    %v1119 = vlaneseq
    %v1120 = vshrl.u32 %v1119, 7
    %v1121 = vsub.s32 4, %v1120
    %v1122 = vrot.slane %v729, %v1121
    %v1123 = vmul.f32 %v1113, %v1118
    %v1124 = vmul.f32 %v1113, %v1122
    %v1125 = vadd.f32 %v1106, %v1123
    %v1126 = vadd.f32 %v1107, %v1124
    %s1127 = scalar_lea.vmem %s6, 84
    %v1128 = vld [vmem:[%s1127] sm:$0x7]
    %1130 = vset.pattern.permute.xlu0 0
    %1131 = vperm.xlu0 %1130, %v1128
    %v1132 = vpop.permute.xlu0 %1131
    %v1134 = vlaneseq
    %v1135 = vshrl.u32 %v1134, 7
    %v1136 = vsub.s32 5, %v1135
    %v1137 = vrot.slane %v725, %v1136
    %v1138 = vlaneseq
    %v1139 = vshrl.u32 %v1138, 7
    %v1140 = vsub.s32 5, %v1139
    %v1141 = vrot.slane %v729, %v1140
    %v1142 = vmul.f32 %v1132, %v1137
    %v1143 = vmul.f32 %v1132, %v1141
    %v1144 = vadd.f32 %v1125, %v1142
    %v1145 = vadd.f32 %v1126, %v1143
    %s1146 = scalar_lea.vmem %s6, 88
    %v1147 = vld [vmem:[%s1146] sm:$0x7]
    %1149 = vset.pattern.permute.xlu0 0
    %1150 = vperm.xlu0 %1149, %v1147
    %v1151 = vpop.permute.xlu0 %1150
    %v1153 = vlaneseq
    %v1154 = vshrl.u32 %v1153, 7
    %v1155 = vsub.s32 6, %v1154
    %v1156 = vrot.slane %v725, %v1155
    %v1157 = vlaneseq
    %v1158 = vshrl.u32 %v1157, 7
    %v1159 = vsub.s32 6, %v1158
    %v1160 = vrot.slane %v729, %v1159
    %v1161 = vmul.f32 %v1151, %v1156
    %v1162 = vmul.f32 %v1151, %v1160
    %v1163 = vadd.f32 %v1144, %v1161
    %v1164 = vadd.f32 %v1145, %v1162
    %s1165 = scalar_lea.vmem %s6, 92
    %v1166 = vld [vmem:[%s1165] sm:$0x7]
    %1168 = vset.pattern.permute.xlu0 0
    %1169 = vperm.xlu0 %1168, %v1166
    %v1170 = vpop.permute.xlu0 %1169
    %v1172 = vlaneseq
    %v1173 = vshrl.u32 %v1172, 7
    %v1174 = vsub.s32 7, %v1173
    %v1175 = vrot.slane %v725, %v1174
    %v1176 = vlaneseq
    %v1177 = vshrl.u32 %v1176, 7
    %v1178 = vsub.s32 7, %v1177
    %v1179 = vrot.slane %v729, %v1178
    %v1180 = vmul.f32 %v1170, %v1175
    %v1181 = vmul.f32 %v1170, %v1179
    %v1182 = vadd.f32 %v1163, %v1180
    %v1183 = vadd.f32 %v1164, %v1181
    %s1184 = scalar_lea.vmem %s6, 96
    %v1185 = vld [vmem:[%s1184] sm:$0x7]
    %1187 = vset.pattern.permute.xlu0 0
    %1188 = vperm.xlu0 %1187, %v1185
    %v1189 = vpop.permute.xlu0 %1188
    %v1191 = vlaneseq
    %v1192 = vshrl.u32 %v1191, 7
    %v1193 = vsub.s32 0, %v1192
    %v1194 = vrot.slane %v726, %v1193
    %v1195 = vlaneseq
    %v1196 = vshrl.u32 %v1195, 7
    %v1197 = vsub.s32 0, %v1196
    %v1198 = vrot.slane %v730, %v1197
    %v1199 = vmul.f32 %v1189, %v1194
    %v1200 = vmul.f32 %v1189, %v1198
    %v1201 = vadd.f32 %v1182, %v1199
    %v1202 = vadd.f32 %v1183, %v1200
    %s1203 = scalar_lea.vmem %s6, 100
    %v1204 = vld [vmem:[%s1203] sm:$0x7]
    %1206 = vset.pattern.permute.xlu0 0
    %1207 = vperm.xlu0 %1206, %v1204
    %v1208 = vpop.permute.xlu0 %1207
    %v1210 = vlaneseq
    %v1211 = vshrl.u32 %v1210, 7
    %v1212 = vsub.s32 1, %v1211
    %v1213 = vrot.slane %v726, %v1212
    %v1214 = vlaneseq
    %v1215 = vshrl.u32 %v1214, 7
    %v1216 = vsub.s32 1, %v1215
    %v1217 = vrot.slane %v730, %v1216
    %v1218 = vmul.f32 %v1208, %v1213
    %v1219 = vmul.f32 %v1208, %v1217
    %v1220 = vadd.f32 %v1201, %v1218
    %v1221 = vadd.f32 %v1202, %v1219
    %s1222 = scalar_lea.vmem %s6, 104
    %v1223 = vld [vmem:[%s1222] sm:$0x7]
    %1225 = vset.pattern.permute.xlu0 0
    %1226 = vperm.xlu0 %1225, %v1223
    %v1227 = vpop.permute.xlu0 %1226
    %v1229 = vlaneseq
    %v1230 = vshrl.u32 %v1229, 7
    %v1231 = vsub.s32 2, %v1230
    %v1232 = vrot.slane %v726, %v1231
    %v1233 = vlaneseq
    %v1234 = vshrl.u32 %v1233, 7
    %v1235 = vsub.s32 2, %v1234
    %v1236 = vrot.slane %v730, %v1235
    %v1237 = vmul.f32 %v1227, %v1232
    %v1238 = vmul.f32 %v1227, %v1236
    %v1239 = vadd.f32 %v1220, %v1237
    %v1240 = vadd.f32 %v1221, %v1238
    %s1241 = scalar_lea.vmem %s6, 108
    %v1242 = vld [vmem:[%s1241] sm:$0x7]
    %1244 = vset.pattern.permute.xlu0 0
    %1245 = vperm.xlu0 %1244, %v1242
    %v1246 = vpop.permute.xlu0 %1245
    %v1248 = vlaneseq
    %v1249 = vshrl.u32 %v1248, 7
    %v1250 = vsub.s32 3, %v1249
    %v1251 = vrot.slane %v726, %v1250
    %v1252 = vlaneseq
    %v1253 = vshrl.u32 %v1252, 7
    %v1254 = vsub.s32 3, %v1253
    %v1255 = vrot.slane %v730, %v1254
    %v1256 = vmul.f32 %v1246, %v1251
    %v1257 = vmul.f32 %v1246, %v1255
    %v1258 = vadd.f32 %v1239, %v1256
    %v1259 = vadd.f32 %v1240, %v1257
    %s1260 = scalar_lea.vmem %s6, 112
    %v1261 = vld [vmem:[%s1260] sm:$0x7]
    %1263 = vset.pattern.permute.xlu0 0
    %1264 = vperm.xlu0 %1263, %v1261
    %v1265 = vpop.permute.xlu0 %1264
    %v1267 = vlaneseq
    %v1268 = vshrl.u32 %v1267, 7
    %v1269 = vsub.s32 4, %v1268
    %v1270 = vrot.slane %v726, %v1269
    %v1271 = vlaneseq
    %v1272 = vshrl.u32 %v1271, 7
    %v1273 = vsub.s32 4, %v1272
    %v1274 = vrot.slane %v730, %v1273
    %v1275 = vmul.f32 %v1265, %v1270
    %v1276 = vmul.f32 %v1265, %v1274
    %v1277 = vadd.f32 %v1258, %v1275
    %v1278 = vadd.f32 %v1259, %v1276
    %s1279 = scalar_lea.vmem %s6, 116
    %v1280 = vld [vmem:[%s1279] sm:$0x7]
    %1282 = vset.pattern.permute.xlu0 0
    %1283 = vperm.xlu0 %1282, %v1280
    %v1284 = vpop.permute.xlu0 %1283
    %v1286 = vlaneseq
    %v1287 = vshrl.u32 %v1286, 7
    %v1288 = vsub.s32 5, %v1287
    %v1289 = vrot.slane %v726, %v1288
    %v1290 = vlaneseq
    %v1291 = vshrl.u32 %v1290, 7
    %v1292 = vsub.s32 5, %v1291
    %v1293 = vrot.slane %v730, %v1292
    %v1294 = vmul.f32 %v1284, %v1289
    %v1295 = vmul.f32 %v1284, %v1293
    %v1296 = vadd.f32 %v1277, %v1294
    %v1297 = vadd.f32 %v1278, %v1295
    %s1298 = scalar_lea.vmem %s6, 120
    %v1299 = vld [vmem:[%s1298] sm:$0x7]
    %1301 = vset.pattern.permute.xlu0 0
    %1302 = vperm.xlu0 %1301, %v1299
    %v1303 = vpop.permute.xlu0 %1302
    %v1305 = vlaneseq
    %v1306 = vshrl.u32 %v1305, 7
    %v1307 = vsub.s32 6, %v1306
    %v1308 = vrot.slane %v726, %v1307
    %v1309 = vlaneseq
    %v1310 = vshrl.u32 %v1309, 7
    %v1311 = vsub.s32 6, %v1310
    %v1312 = vrot.slane %v730, %v1311
    %v1313 = vmul.f32 %v1303, %v1308
    %v1314 = vmul.f32 %v1303, %v1312
    %v1315 = vadd.f32 %v1296, %v1313
    %v1316 = vadd.f32 %v1297, %v1314
    %s1317 = scalar_lea.vmem %s6, 124
    %v1318 = vld [vmem:[%s1317] sm:$0x7]
    %1320 = vset.pattern.permute.xlu0 0
    %1321 = vperm.xlu0 %1320, %v1318
    %v1322 = vpop.permute.xlu0 %1321
    %v1324 = vlaneseq
    %v1325 = vshrl.u32 %v1324, 7
    %v1326 = vsub.s32 7, %v1325
    %v1327 = vrot.slane %v726, %v1326
    %v1328 = vlaneseq
    %v1329 = vshrl.u32 %v1328, 7
    %v1330 = vsub.s32 7, %v1329
    %v1331 = vrot.slane %v730, %v1330
    %v1332 = vmul.f32 %v1322, %v1327
    %v1333 = vmul.f32 %v1322, %v1331
    %v1334 = vadd.f32 %v1315, %v1332
    %v1335 = vadd.f32 %v1316, %v1333
    %v1336 = vld [vmem:[%s7] sm:$0x7]
    %1338 = vset.pattern.permute.xlu0 0
    %1339 = vperm.xlu0 %1338, %v1336
    %v1340 = vpop.permute.xlu0 %1339
    %v1342 = vadd.f32 %v1334, %v1340
    %v1343 = vadd.f32 %v1335, %v1340
    %v1344 = vadd.f32 %v44, %v1342
    %v1345 = vadd.f32 %v45, %v1343
    %vm1346 = vcmask 518144
    %1347 = vst.msk [vmem:[%s12] sm:$0x7] %vm1346, %v1344
    %1348 = vst.msk [vmem:[%s12 + $0x4] sm:$0x7] %vm1346, %v1345
    %v1349 = vld [vmem:[%s8] sm:$0xff]
    %v1350 = vld [vmem:[%s8 + $0x8] sm:$0xff]
    %v1351 = vld [vmem:[%s8 + $0x10] sm:$0xff]
    %v1352 = vld [vmem:[%s8 + $0x18] sm:$0xff]
    %s1353 = scalar_lea.vmem %s8, 32
    %v1354 = vld [vmem:[%s1353] sm:$0xff]
    %v1355 = vld [vmem:[%s1353 + $0x8] sm:$0xff]
    %v1356 = vld [vmem:[%s1353 + $0x10] sm:$0xff]
    %v1357 = vld [vmem:[%s1353 + $0x18] sm:$0xff]
    %s1358 = scalar_lea.vmem %s8, 64
    %v1359 = vld [vmem:[%s1358] sm:$0xff]
    %v1360 = vld [vmem:[%s1358 + $0x8] sm:$0xff]
    %v1361 = vld [vmem:[%s1358 + $0x10] sm:$0xff]
    %v1362 = vld [vmem:[%s1358 + $0x18] sm:$0xff]
    %v1363 = vld [vmem:[%s9] sm:$0xff]
    %v1364 = vld [vmem:[%s9 + $0x8] sm:$0xff]
    %v1365 = vld [vmem:[%s9 + $0x10] sm:$0xff]
    %v1366 = vld [vmem:[%s9 + $0x18] sm:$0xff]
    %v1367 = vld [vmem:[%s10] sm:$0xff]
    %v1368 = vld [vmem:[%s10 + $0x8] sm:$0xff]
    %v1369 = vld [vmem:[%s10 + $0x10] sm:$0xff]
    %v1370 = vld [vmem:[%s10 + $0x18] sm:$0xff]
    %v1371 = vld [vmem:[%s11] sm:$0x1]
    %vm1372 = vcmask 516096
    %v1373 = vsel %vm1372, %v1344, 0.0
    %1374 = vadd.xlane.f32.xlu0 %v1373
    %v1375 = vpop.xlane.xlu0 %1374
    %v1376 = vsel %vm1372, %v1345, 0.0
    %1377 = vadd.xlane.f32.xlu0 %v1376
    %v1378 = vpop.xlane.xlu0 %1377
    %v1379 = vrcp.pop 64.0
    %v1380 = vmul.f32 %v1375, %v1379
    %v1381 = vmul.f32 %v1378, %v1379
    %v1382 = vsub.f32 %v1344, %v1380
    %v1383 = vsub.f32 %v1345, %v1381
    %vm1384 = vcmask 517121
    %v1385 = vsel %vm1384, %v1344, 0.0
    %1386 = vadd.xlane.f32.xlu0 %v1385
    %v1387 = vpop.xlane.xlu0 %1386
    %v1388 = vsel %vm1384, %v1345, 0.0
    %1389 = vadd.xlane.f32.xlu0 %v1388
    %v1390 = vpop.xlane.xlu0 %1389
    %v1391 = vmul.f32 %v1387, %v1379
    %v1392 = vmul.f32 %v1390, %v1379
    %v1393 = vsub.f32 %v1344, %v1391
    %v1394 = vsub.f32 %v1345, %v1392
    %vm1395 = vcmask 518146
    %v1396 = vsel %vm1395, %v1344, 0.0
    %1397 = vadd.xlane.f32.xlu0 %v1396
    %v1398 = vpop.xlane.xlu0 %1397
    %v1399 = vsel %vm1395, %v1345, 0.0
    %1400 = vadd.xlane.f32.xlu0 %v1399
    %v1401 = vpop.xlane.xlu0 %1400
    %v1402 = vmul.f32 %v1398, %v1379
    %v1403 = vmul.f32 %v1401, %v1379
    %v1404 = vsub.f32 %v1344, %v1402
    %v1405 = vsub.f32 %v1345, %v1403
    %v1406 = vmul.f32 %v1382, %v1382
    %v1407 = vmul.f32 %v1383, %v1383
    %v1408 = vmul.f32 %v1393, %v1393
    %v1409 = vmul.f32 %v1394, %v1394
    %v1412 = vrot.slane %v1408, 1
    %v1413 = vrot.slane %v1409, 1
    %v1416 = vadd.f32 %v1406, %v1412
    %v1417 = vadd.f32 %v1407, %v1413
    %v1418 = vmul.f32 %v1404, %v1404
    %v1419 = vmul.f32 %v1405, %v1405
    %v1422 = vrot.slane %v1418, 2
    %v1423 = vrot.slane %v1419, 2
    %v1426 = vadd.f32 %v1416, %v1422
    %v1427 = vadd.f32 %v1417, %v1423
    %v1428 = vsel %vm1372, %v1426, -inf
    %1429 = vmax.xlane.f32.xlu0 %v1428
    %v1430 = vpop.xlane.xlu0 %1429
    %v1431 = vsel %vm1372, %v1427, -inf
    %1432 = vmax.xlane.f32.xlu0 %v1431
    %v1433 = vpop.xlane.xlu0 %1432
    %v1434 = vrsqrt.pop %v1430
    %v1435 = vrsqrt.pop %v1433
    %v1436 = vmul.f32 %v1382, %v1434
    %v1437 = vmul.f32 %v1383, %v1435
    %v1440 = vrot.slane %v1434, 7
    %v1441 = vrot.slane %v1435, 7
    %v1444 = vmul.f32 %v1393, %v1440
    %v1445 = vmul.f32 %v1394, %v1441
    %v1446 = vrot.slane %v1434, 6
    %v1447 = vrot.slane %v1435, 6
    %v1450 = vmul.f32 %v1404, %v1446
    %v1451 = vmul.f32 %v1405, %v1447
    %1453 = vset.pattern.permute.xlu0 0
    %1454 = vperm.xlu0 %1453, %v1349
    %v1455 = vpop.permute.xlu0 %1454
    %1458 = vset.pattern.permute.xlu0 0
    %1459 = vperm.xlu0 %1458, %v1350
    %v1460 = vpop.permute.xlu0 %1459
    %1463 = vset.pattern.permute.xlu0 0
    %1464 = vperm.xlu0 %1463, %v1351
    %v1465 = vpop.permute.xlu0 %1464
    %1468 = vset.pattern.permute.xlu0 0
    %1469 = vperm.xlu0 %1468, %v1352
    %v1470 = vpop.permute.xlu0 %1469
    %v1472 = vlaneseq
    %v1473 = vshrl.u32 %v1472, 7
    %v1474 = vsub.s32 0, %v1473
    %v1475 = vrot.slane %v1436, %v1474
    %v1476 = vlaneseq
    %v1477 = vshrl.u32 %v1476, 7
    %v1478 = vsub.s32 0, %v1477
    %v1479 = vrot.slane %v1437, %v1478
    %v1480 = vmul.f32 %v1455, %v1475
    %v1481 = vmul.f32 %v1460, %v1475
    %v1482 = vmul.f32 %v1465, %v1475
    %v1483 = vmul.f32 %v1470, %v1475
    %v1484 = vmul.f32 %v1455, %v1479
    %v1485 = vmul.f32 %v1460, %v1479
    %v1486 = vmul.f32 %v1465, %v1479
    %v1487 = vmul.f32 %v1470, %v1479
    %1489 = vset.pattern.permute.xlu0 0
    %1490 = vperm.xlu0 %1489, %v1354
    %v1491 = vpop.permute.xlu0 %1490
    %1494 = vset.pattern.permute.xlu0 0
    %1495 = vperm.xlu0 %1494, %v1355
    %v1496 = vpop.permute.xlu0 %1495
    %1499 = vset.pattern.permute.xlu0 0
    %1500 = vperm.xlu0 %1499, %v1356
    %v1501 = vpop.permute.xlu0 %1500
    %1504 = vset.pattern.permute.xlu0 0
    %1505 = vperm.xlu0 %1504, %v1357
    %v1506 = vpop.permute.xlu0 %1505
    %v1508 = vlaneseq
    %v1509 = vshrl.u32 %v1508, 7
    %v1510 = vsub.s32 1, %v1509
    %v1511 = vrot.slane %v1444, %v1510
    %v1512 = vlaneseq
    %v1513 = vshrl.u32 %v1512, 7
    %v1514 = vsub.s32 1, %v1513
    %v1515 = vrot.slane %v1445, %v1514
    %v1516 = vmul.f32 %v1491, %v1511
    %v1517 = vmul.f32 %v1496, %v1511
    %v1518 = vmul.f32 %v1501, %v1511
    %v1519 = vmul.f32 %v1506, %v1511
    %v1520 = vmul.f32 %v1491, %v1515
    %v1521 = vmul.f32 %v1496, %v1515
    %v1522 = vmul.f32 %v1501, %v1515
    %v1523 = vmul.f32 %v1506, %v1515
    %v1524 = vadd.f32 %v1480, %v1516
    %v1525 = vadd.f32 %v1481, %v1517
    %v1526 = vadd.f32 %v1482, %v1518
    %v1527 = vadd.f32 %v1483, %v1519
    %v1528 = vadd.f32 %v1484, %v1520
    %v1529 = vadd.f32 %v1485, %v1521
    %v1530 = vadd.f32 %v1486, %v1522
    %v1531 = vadd.f32 %v1487, %v1523
    %1533 = vset.pattern.permute.xlu0 0
    %1534 = vperm.xlu0 %1533, %v1359
    %v1535 = vpop.permute.xlu0 %1534
    %1538 = vset.pattern.permute.xlu0 0
    %1539 = vperm.xlu0 %1538, %v1360
    %v1540 = vpop.permute.xlu0 %1539
    %1543 = vset.pattern.permute.xlu0 0
    %1544 = vperm.xlu0 %1543, %v1361
    %v1545 = vpop.permute.xlu0 %1544
    %1548 = vset.pattern.permute.xlu0 0
    %1549 = vperm.xlu0 %1548, %v1362
    %v1550 = vpop.permute.xlu0 %1549
    %v1552 = vlaneseq
    %v1553 = vshrl.u32 %v1552, 7
    %v1554 = vsub.s32 2, %v1553
    %v1555 = vrot.slane %v1450, %v1554
    %v1556 = vlaneseq
    %v1557 = vshrl.u32 %v1556, 7
    %v1558 = vsub.s32 2, %v1557
    %v1559 = vrot.slane %v1451, %v1558
    %v1560 = vmul.f32 %v1535, %v1555
    %v1561 = vmul.f32 %v1540, %v1555
    %v1562 = vmul.f32 %v1545, %v1555
    %v1563 = vmul.f32 %v1550, %v1555
    %v1564 = vmul.f32 %v1535, %v1559
    %v1565 = vmul.f32 %v1540, %v1559
    %v1566 = vmul.f32 %v1545, %v1559
    %v1567 = vmul.f32 %v1550, %v1559
    %v1568 = vadd.f32 %v1524, %v1560
    %v1569 = vadd.f32 %v1525, %v1561
    %v1570 = vadd.f32 %v1526, %v1562
    %v1571 = vadd.f32 %v1527, %v1563
    %v1572 = vadd.f32 %v1528, %v1564
    %v1573 = vadd.f32 %v1529, %v1565
    %v1574 = vadd.f32 %v1530, %v1566
    %v1575 = vadd.f32 %v1531, %v1567
    %1577 = vset.pattern.permute.xlu0 0
    %1578 = vperm.xlu0 %1577, %v1363
    %v1579 = vpop.permute.xlu0 %1578
    %1582 = vset.pattern.permute.xlu0 0
    %1583 = vperm.xlu0 %1582, %v1364
    %v1584 = vpop.permute.xlu0 %1583
    %1587 = vset.pattern.permute.xlu0 0
    %1588 = vperm.xlu0 %1587, %v1365
    %v1589 = vpop.permute.xlu0 %1588
    %1592 = vset.pattern.permute.xlu0 0
    %1593 = vperm.xlu0 %1592, %v1366
    %v1594 = vpop.permute.xlu0 %1593
    %v1596 = vadd.f32 %v1568, %v1579
    %v1597 = vadd.f32 %v1569, %v1584
    %v1598 = vadd.f32 %v1570, %v1589
    %v1599 = vadd.f32 %v1571, %v1594
    %v1600 = vadd.f32 %v1572, %v1579
    %v1601 = vadd.f32 %v1573, %v1584
    %v1602 = vadd.f32 %v1574, %v1589
    %v1603 = vadd.f32 %v1575, %v1594
    %v1604 = vmax.f32 %v1596, 0.0
    %v1605 = vmax.f32 %v1597, 0.0
    %v1606 = vmax.f32 %v1598, 0.0
    %v1607 = vmax.f32 %v1599, 0.0
    %v1608 = vmax.f32 %v1600, 0.0
    %v1609 = vmax.f32 %v1601, 0.0
    %v1610 = vmax.f32 %v1602, 0.0
    %v1611 = vmax.f32 %v1603, 0.0
    %vm1612 = vcmask 523264
    %v1613 = vsel %vm1612, %v1604, 0.0
    %1614 = vadd.xlane.f32.xlu0 %v1613
    %v1615 = vpop.xlane.xlu0 %1614
    %v1616 = vsel %vm1612, %v1605, 0.0
    %1617 = vadd.xlane.f32.xlu0 %v1616
    %v1618 = vpop.xlane.xlu0 %1617
    %v1619 = vsel %vm1612, %v1606, 0.0
    %1620 = vadd.xlane.f32.xlu0 %v1619
    %v1621 = vpop.xlane.xlu0 %1620
    %v1622 = vsel %vm1612, %v1607, 0.0
    %1623 = vadd.xlane.f32.xlu0 %v1622
    %v1624 = vpop.xlane.xlu0 %1623
    %v1625 = vsel %vm1612, %v1608, 0.0
    %1626 = vadd.xlane.f32.xlu0 %v1625
    %v1627 = vpop.xlane.xlu0 %1626
    %v1628 = vsel %vm1612, %v1609, 0.0
    %1629 = vadd.xlane.f32.xlu0 %v1628
    %v1630 = vpop.xlane.xlu0 %1629
    %v1631 = vsel %vm1612, %v1610, 0.0
    %1632 = vadd.xlane.f32.xlu0 %v1631
    %v1633 = vpop.xlane.xlu0 %1632
    %v1634 = vsel %vm1612, %v1611, 0.0
    %1635 = vadd.xlane.f32.xlu0 %v1634
    %v1636 = vpop.xlane.xlu0 %1635
    %v1637 = vmul.f32 %v1615, %v1379
    %v1638 = vmul.f32 %v1618, %v1379
    %v1639 = vmul.f32 %v1621, %v1379
    %v1640 = vmul.f32 %v1624, %v1379
    %v1641 = vmul.f32 %v1627, %v1379
    %v1642 = vmul.f32 %v1630, %v1379
    %v1643 = vmul.f32 %v1633, %v1379
    %v1644 = vmul.f32 %v1636, %v1379
    %v1646 = vlaneseq
    %v1647 = vshrl.u32 %v1646, 7
    %v1648 = vsub.s32 0, %v1647
    %v1649 = vrot.slane %v1371, %v1648
    %v1659 = vlaneseq
    %v1660 = vand.u32 %v1659, 127
    %v1661 = vlaneseq
    %v1662 = vshrl.u32 %v1661, 7
    %v1663 = vsub.s32 %v1660, %v1662
    %v1664 = vrot.slane %v1637, %v1663
    %v1665 = vadd.s32 %v1660, 4294967288
    %v1666 = vlaneseq
    %v1667 = vshrl.u32 %v1666, 7
    %v1668 = vsub.s32 %v1665, %v1667
    %v1669 = vrot.slane %v1638, %v1668
    %vm1670 = vcmask 130112
    %v1671 = vsel %vm1670, %v1669, %v1664
    %v1672 = vadd.s32 %v1660, 4294967280
    %v1673 = vlaneseq
    %v1674 = vshrl.u32 %v1673, 7
    %v1675 = vsub.s32 %v1672, %v1674
    %v1676 = vrot.slane %v1639, %v1675
    %vm1677 = vcmask 195712
    %v1678 = vsel %vm1677, %v1676, %v1671
    %v1679 = vadd.s32 %v1660, 4294967272
    %v1680 = vlaneseq
    %v1681 = vshrl.u32 %v1680, 7
    %v1682 = vsub.s32 %v1679, %v1681
    %v1683 = vrot.slane %v1640, %v1682
    %vm1684 = vcmask 261312
    %v1685 = vsel %vm1684, %v1683, %v1678
    %v1686 = vlaneseq
    %v1687 = vshrl.u32 %v1686, 7
    %v1688 = vsub.s32 %v1660, %v1687
    %v1689 = vrot.slane %v1641, %v1688
    %v1690 = vlaneseq
    %v1691 = vshrl.u32 %v1690, 7
    %v1692 = vsub.s32 %v1665, %v1691
    %v1693 = vrot.slane %v1642, %v1692
    %v1694 = vsel %vm1670, %v1693, %v1689
    %v1695 = vlaneseq
    %v1696 = vshrl.u32 %v1695, 7
    %v1697 = vsub.s32 %v1672, %v1696
    %v1698 = vrot.slane %v1643, %v1697
    %v1699 = vsel %vm1677, %v1698, %v1694
    %v1700 = vlaneseq
    %v1701 = vshrl.u32 %v1700, 7
    %v1702 = vsub.s32 %v1679, %v1701
    %v1703 = vrot.slane %v1644, %v1702
    %v1704 = vsel %vm1684, %v1703, %v1699
    %vm1705 = vcmask 1041409
    %v1706 = vsel %vm1705, %v1704, %v1685
    %vm1707 = vcmask 261120
    %v1708 = vsel %vm1707, %v1706, 0
    %1710 = vmatprep.subr.mxu0 0.0
    %1711 = vmatpush1.msra.mxu0 0.0
    %1712 = vmatprep.subr.mxu0 0.0
    %1713 = vmatpush1.msra.mxu0 0.0
    %1714 = vmatprep.subr.mxu0 0.0
    %1715 = vmatpush1.msra.mxu0 0.0
    %1716 = vmatprep.subr.mxu0 0.0
    %1717 = vmatpush1.msra.mxu0 0.0
    %1718 = vmatprep.subr.mxu0 0.0
    %1719 = vmatpush1.msra.mxu0 0.0
    %1720 = vmatprep.subr.mxu0 0.0
    %1721 = vmatpush1.msra.mxu0 0.0
    %1722 = vmatprep.subr.mxu0 0.0
    %1723 = vmatpush1.msra.mxu0 0.0
    %1724 = vmatprep.subr.mxu0 0.0
    %1725 = vmatpush1.msra.mxu0 0.0
    %1726 = vmatprep.subr.mxu0 0.0
    %1727 = vmatpush1.msra.mxu0 0.0
    %1728 = vmatprep.subr.mxu0 0.0
    %1729 = vmatpush1.msra.mxu0 0.0
    %1730 = vmatprep.subr.mxu0 0.0
    %1731 = vmatpush1.msra.mxu0 0.0
    %1732 = vmatprep.subr.mxu0 0.0
    %1733 = vmatpush1.msra.mxu0 0.0
    %1734 = vmatprep.subr.mxu0 0.0
    %1735 = vmatpush1.msra.mxu0 %v1370
    %1736 = vmatprep.subr.mxu0 0.0
    %1737 = vmatpush1.msra.mxu0 %v1369
    %1738 = vmatprep.subr.mxu0 0.0
    %1739 = vmatpush1.msra.mxu0 %v1368
    %1740 = vmatprep.subr.mxu0 0.0
    %1741 = vmatpush1.msra.mxu0 %v1367
    %1742 = vmatprep.subr.mxu0 0.0
    %1743 = vmatpush2.msra.mxu0 0.0
    %1744 = vmatprep.subr.mxu0 0.0
    %1745 = vmatpush2.msra.mxu0 0.0
    %1746 = vmatprep.subr.mxu0 0.0
    %1747 = vmatpush2.msra.mxu0 0.0
    %1748 = vmatprep.subr.mxu0 0.0
    %1749 = vmatpush2.msra.mxu0 0.0
    %1750 = vmatprep.subr.mxu0 0.0
    %1751 = vmatpush2.msra.mxu0 0.0
    %1752 = vmatprep.subr.mxu0 0.0
    %1753 = vmatpush2.msra.mxu0 0.0
    %1754 = vmatprep.subr.mxu0 0.0
    %1755 = vmatpush2.msra.mxu0 0.0
    %1756 = vmatprep.subr.mxu0 0.0
    %1757 = vmatpush2.msra.mxu0 0.0
    %1758 = vmatprep.subr.mxu0 0.0
    %1759 = vmatpush2.msra.mxu0 0.0
    %1760 = vmatprep.subr.mxu0 0.0
    %1761 = vmatpush2.msra.mxu0 0.0
    %1762 = vmatprep.subr.mxu0 0.0
    %1763 = vmatpush2.msra.mxu0 0.0
    %1764 = vmatprep.subr.mxu0 0.0
    %1765 = vmatpush2.msra.mxu0 0.0
    %1766 = vmatprep.subr.mxu0 0.0
    %1767 = vmatpush2.msra.mxu0 0.0
    %1768 = vmatprep.subr.mxu0 0.0
    %1769 = vmatpush2.msra.mxu0 0.0
    %1770 = vmatprep.subr.mxu0 0.0
    %1771 = vmatpush2.msra.mxu0 0.0
    %1772 = vmatprep.subr.mxu0 0.0
    %1773 = vmatpush2.msra.mxu0 0.0
    %1774 = vmatprep.mubr.f32.mxu0 0.0
    %1775 = vmatmul.mubr.f32.gmra.mxu0 %v1708
    %v1776 = vpop.f32.mrf.mxu0
    %v1777 = vadd.f32 %v1649, %v1776
    %v1778 = vpop.f32.mrf.mxu0
    %1779 = vdwg.mxu0
    %vm1780 = vcmask 123904
    %1781 = vst.msk [vmem:[#allocation2] sm:$0x3] %vm1780, %v1777
    %v1782 = vld [vmem:[%s2] sm:$0x7]
    %v1783 = vld [vmem:[%s2 + $0x4] sm:$0x7]
    %v1784 = vadd.f32 %v1344, %v1782
    %v1785 = vadd.f32 %v1345, %v1783
    %v1786 = vsel %vm1372, %v1784, 0.0
    %1787 = vadd.xlane.f32.xlu0 %v1786
    %v1788 = vpop.xlane.xlu0 %1787
    %v1789 = vsel %vm1372, %v1785, 0.0
    %1790 = vadd.xlane.f32.xlu0 %v1789
    %v1791 = vpop.xlane.xlu0 %1790
    %v1792 = vmul.f32 %v1788, %v1379
    %v1793 = vmul.f32 %v1791, %v1379
    %v1794 = vsub.f32 %v1784, %v1792
    %v1795 = vsub.f32 %v1785, %v1793
    %v1796 = vsel %vm1384, %v1784, 0.0
    %1797 = vadd.xlane.f32.xlu0 %v1796
    %v1798 = vpop.xlane.xlu0 %1797
    %v1799 = vsel %vm1384, %v1785, 0.0
    %1800 = vadd.xlane.f32.xlu0 %v1799
    %v1801 = vpop.xlane.xlu0 %1800
    %v1802 = vmul.f32 %v1798, %v1379
    %v1803 = vmul.f32 %v1801, %v1379
    %v1804 = vsub.f32 %v1784, %v1802
    %v1805 = vsub.f32 %v1785, %v1803
    %v1806 = vsel %vm1395, %v1784, 0.0
    %1807 = vadd.xlane.f32.xlu0 %v1806
    %v1808 = vpop.xlane.xlu0 %1807
    %v1809 = vsel %vm1395, %v1785, 0.0
    %1810 = vadd.xlane.f32.xlu0 %v1809
    %v1811 = vpop.xlane.xlu0 %1810
    %v1812 = vmul.f32 %v1808, %v1379
    %v1813 = vmul.f32 %v1811, %v1379
    %v1814 = vsub.f32 %v1784, %v1812
    %v1815 = vsub.f32 %v1785, %v1813
    %v1816 = vmul.f32 %v1794, %v1794
    %v1817 = vmul.f32 %v1795, %v1795
    %v1818 = vmul.f32 %v1804, %v1804
    %v1819 = vmul.f32 %v1805, %v1805
    %v1822 = vrot.slane %v1818, 1
    %v1823 = vrot.slane %v1819, 1
    %v1826 = vadd.f32 %v1816, %v1822
    %v1827 = vadd.f32 %v1817, %v1823
    %v1828 = vmul.f32 %v1814, %v1814
    %v1829 = vmul.f32 %v1815, %v1815
    %v1832 = vrot.slane %v1828, 2
    %v1833 = vrot.slane %v1829, 2
    %v1836 = vadd.f32 %v1826, %v1832
    %v1837 = vadd.f32 %v1827, %v1833
    %v1838 = vsel %vm1372, %v1836, -inf
    %1839 = vmax.xlane.f32.xlu0 %v1838
    %v1840 = vpop.xlane.xlu0 %1839
    %v1841 = vsel %vm1372, %v1837, -inf
    %1842 = vmax.xlane.f32.xlu0 %v1841
    %v1843 = vpop.xlane.xlu0 %1842
    %v1844 = vrsqrt.pop %v1840
    %v1845 = vrsqrt.pop %v1843
    %v1846 = vmul.f32 %v1794, %v1844
    %v1847 = vmul.f32 %v1795, %v1845
    %v1850 = vrot.slane %v1844, 7
    %v1851 = vrot.slane %v1845, 7
    %v1854 = vmul.f32 %v1804, %v1850
    %v1855 = vmul.f32 %v1805, %v1851
    %v1856 = vrot.slane %v1844, 6
    %v1857 = vrot.slane %v1845, 6
    %v1860 = vmul.f32 %v1814, %v1856
    %v1861 = vmul.f32 %v1815, %v1857
    %v1862 = vlaneseq
    %v1863 = vshrl.u32 %v1862, 7
    %v1864 = vsub.s32 0, %v1863
    %v1865 = vrot.slane %v1846, %v1864
    %v1866 = vlaneseq
    %v1867 = vshrl.u32 %v1866, 7
    %v1868 = vsub.s32 0, %v1867
    %v1869 = vrot.slane %v1847, %v1868
    %v1870 = vmul.f32 %v1455, %v1865
    %v1871 = vmul.f32 %v1460, %v1865
    %v1872 = vmul.f32 %v1465, %v1865
    %v1873 = vmul.f32 %v1470, %v1865
    %v1874 = vmul.f32 %v1455, %v1869
    %v1875 = vmul.f32 %v1460, %v1869
    %v1876 = vmul.f32 %v1465, %v1869
    %v1877 = vmul.f32 %v1470, %v1869
    %v1878 = vlaneseq
    %v1879 = vshrl.u32 %v1878, 7
    %v1880 = vsub.s32 1, %v1879
    %v1881 = vrot.slane %v1854, %v1880
    %v1882 = vlaneseq
    %v1883 = vshrl.u32 %v1882, 7
    %v1884 = vsub.s32 1, %v1883
    %v1885 = vrot.slane %v1855, %v1884
    %v1886 = vmul.f32 %v1491, %v1881
    %v1887 = vmul.f32 %v1496, %v1881
    %v1888 = vmul.f32 %v1501, %v1881
    %v1889 = vmul.f32 %v1506, %v1881
    %v1890 = vmul.f32 %v1491, %v1885
    %v1891 = vmul.f32 %v1496, %v1885
    %v1892 = vmul.f32 %v1501, %v1885
    %v1893 = vmul.f32 %v1506, %v1885
    %v1894 = vadd.f32 %v1870, %v1886
    %v1895 = vadd.f32 %v1871, %v1887
    %v1896 = vadd.f32 %v1872, %v1888
    %v1897 = vadd.f32 %v1873, %v1889
    %v1898 = vadd.f32 %v1874, %v1890
    %v1899 = vadd.f32 %v1875, %v1891
    %v1900 = vadd.f32 %v1876, %v1892
    %v1901 = vadd.f32 %v1877, %v1893
    %v1902 = vlaneseq
    %v1903 = vshrl.u32 %v1902, 7
    %v1904 = vsub.s32 2, %v1903
    %v1905 = vrot.slane %v1860, %v1904
    %v1906 = vlaneseq
    %v1907 = vshrl.u32 %v1906, 7
    %v1908 = vsub.s32 2, %v1907
    %v1909 = vrot.slane %v1861, %v1908
    %v1910 = vmul.f32 %v1535, %v1905
    %v1911 = vmul.f32 %v1540, %v1905
    %v1912 = vmul.f32 %v1545, %v1905
    %v1913 = vmul.f32 %v1550, %v1905
    %v1914 = vmul.f32 %v1535, %v1909
    %v1915 = vmul.f32 %v1540, %v1909
    %v1916 = vmul.f32 %v1545, %v1909
    %v1917 = vmul.f32 %v1550, %v1909
    %v1918 = vadd.f32 %v1894, %v1910
    %v1919 = vadd.f32 %v1895, %v1911
    %v1920 = vadd.f32 %v1896, %v1912
    %v1921 = vadd.f32 %v1897, %v1913
    %v1922 = vadd.f32 %v1898, %v1914
    %v1923 = vadd.f32 %v1899, %v1915
    %v1924 = vadd.f32 %v1900, %v1916
    %v1925 = vadd.f32 %v1901, %v1917
    %v1926 = vadd.f32 %v1918, %v1579
    %v1927 = vadd.f32 %v1919, %v1584
    %v1928 = vadd.f32 %v1920, %v1589
    %v1929 = vadd.f32 %v1921, %v1594
    %v1930 = vadd.f32 %v1922, %v1579
    %v1931 = vadd.f32 %v1923, %v1584
    %v1932 = vadd.f32 %v1924, %v1589
    %v1933 = vadd.f32 %v1925, %v1594
    %v1934 = vmax.f32 %v1926, 0.0
    %v1935 = vmax.f32 %v1927, 0.0
    %v1936 = vmax.f32 %v1928, 0.0
    %v1937 = vmax.f32 %v1929, 0.0
    %v1938 = vmax.f32 %v1930, 0.0
    %v1939 = vmax.f32 %v1931, 0.0
    %v1940 = vmax.f32 %v1932, 0.0
    %v1941 = vmax.f32 %v1933, 0.0
    %v1942 = vsel %vm1612, %v1934, 0.0
    %1943 = vadd.xlane.f32.xlu0 %v1942
    %v1944 = vpop.xlane.xlu0 %1943
    %v1945 = vsel %vm1612, %v1935, 0.0
    %1946 = vadd.xlane.f32.xlu0 %v1945
    %v1947 = vpop.xlane.xlu0 %1946
    %v1948 = vsel %vm1612, %v1936, 0.0
    %1949 = vadd.xlane.f32.xlu0 %v1948
    %v1950 = vpop.xlane.xlu0 %1949
    %v1951 = vsel %vm1612, %v1937, 0.0
    %1952 = vadd.xlane.f32.xlu0 %v1951
    %v1953 = vpop.xlane.xlu0 %1952
    %v1954 = vsel %vm1612, %v1938, 0.0
    %1955 = vadd.xlane.f32.xlu0 %v1954
    %v1956 = vpop.xlane.xlu0 %1955
    %v1957 = vsel %vm1612, %v1939, 0.0
    %1958 = vadd.xlane.f32.xlu0 %v1957
    %v1959 = vpop.xlane.xlu0 %1958
    %v1960 = vsel %vm1612, %v1940, 0.0
    %1961 = vadd.xlane.f32.xlu0 %v1960
    %v1962 = vpop.xlane.xlu0 %1961
    %v1963 = vsel %vm1612, %v1941, 0.0
    %1964 = vadd.xlane.f32.xlu0 %v1963
    %v1965 = vpop.xlane.xlu0 %1964
    %v1966 = vmul.f32 %v1944, %v1379
    %v1967 = vmul.f32 %v1947, %v1379
    %v1968 = vmul.f32 %v1950, %v1379
    %v1969 = vmul.f32 %v1953, %v1379
    %v1970 = vmul.f32 %v1956, %v1379
    %v1971 = vmul.f32 %v1959, %v1379
    %v1972 = vmul.f32 %v1962, %v1379
    %v1973 = vmul.f32 %v1965, %v1379
    %v1982 = vlaneseq
    %v1983 = vshrl.u32 %v1982, 7
    %v1984 = vsub.s32 %v1660, %v1983
    %v1985 = vrot.slane %v1966, %v1984
    %v1986 = vlaneseq
    %v1987 = vshrl.u32 %v1986, 7
    %v1988 = vsub.s32 %v1665, %v1987
    %v1989 = vrot.slane %v1967, %v1988
    %v1990 = vsel %vm1670, %v1989, %v1985
    %v1991 = vlaneseq
    %v1992 = vshrl.u32 %v1991, 7
    %v1993 = vsub.s32 %v1672, %v1992
    %v1994 = vrot.slane %v1968, %v1993
    %v1995 = vsel %vm1677, %v1994, %v1990
    %v1996 = vlaneseq
    %v1997 = vshrl.u32 %v1996, 7
    %v1998 = vsub.s32 %v1679, %v1997
    %v1999 = vrot.slane %v1969, %v1998
    %v2000 = vsel %vm1684, %v1999, %v1995
    %v2001 = vlaneseq
    %v2002 = vshrl.u32 %v2001, 7
    %v2003 = vsub.s32 %v1660, %v2002
    %v2004 = vrot.slane %v1970, %v2003
    %v2005 = vlaneseq
    %v2006 = vshrl.u32 %v2005, 7
    %v2007 = vsub.s32 %v1665, %v2006
    %v2008 = vrot.slane %v1971, %v2007
    %v2009 = vsel %vm1670, %v2008, %v2004
    %v2010 = vlaneseq
    %v2011 = vshrl.u32 %v2010, 7
    %v2012 = vsub.s32 %v1672, %v2011
    %v2013 = vrot.slane %v1972, %v2012
    %v2014 = vsel %vm1677, %v2013, %v2009
    %v2015 = vlaneseq
    %v2016 = vshrl.u32 %v2015, 7
    %v2017 = vsub.s32 %v1679, %v2016
    %v2018 = vrot.slane %v1973, %v2017
    %v2019 = vsel %vm1684, %v2018, %v2014
    %v2020 = vsel %vm1705, %v2019, %v2000
    %v2021 = vsel %vm1707, %v2020, 0
    %2023 = vmatprep.subr.mxu0 0.0
    %2024 = vmatpush1.msra.mxu0 0.0
    %2025 = vmatprep.subr.mxu0 0.0
    %2026 = vmatpush1.msra.mxu0 0.0
    %2027 = vmatprep.subr.mxu0 0.0
    %2028 = vmatpush1.msra.mxu0 0.0
    %2029 = vmatprep.subr.mxu0 0.0
    %2030 = vmatpush1.msra.mxu0 0.0
    %2031 = vmatprep.subr.mxu0 0.0
    %2032 = vmatpush1.msra.mxu0 0.0
    %2033 = vmatprep.subr.mxu0 0.0
    %2034 = vmatpush1.msra.mxu0 0.0
    %2035 = vmatprep.subr.mxu0 0.0
    %2036 = vmatpush1.msra.mxu0 0.0
    %2037 = vmatprep.subr.mxu0 0.0
    %2038 = vmatpush1.msra.mxu0 0.0
    %2039 = vmatprep.subr.mxu0 0.0
    %2040 = vmatpush1.msra.mxu0 0.0
    %2041 = vmatprep.subr.mxu0 0.0
    %2042 = vmatpush1.msra.mxu0 0.0
    %2043 = vmatprep.subr.mxu0 0.0
    %2044 = vmatpush1.msra.mxu0 0.0
    %2045 = vmatprep.subr.mxu0 0.0
    %2046 = vmatpush1.msra.mxu0 0.0
    %2047 = vmatprep.subr.mxu0 0.0
    %2048 = vmatpush1.msra.mxu0 %v1370
    %2049 = vmatprep.subr.mxu0 0.0
    %2050 = vmatpush1.msra.mxu0 %v1369
    %2051 = vmatprep.subr.mxu0 0.0
    %2052 = vmatpush1.msra.mxu0 %v1368
    %2053 = vmatprep.subr.mxu0 0.0
    %2054 = vmatpush1.msra.mxu0 %v1367
    %2055 = vmatprep.subr.mxu0 0.0
    %2056 = vmatpush2.msra.mxu0 0.0
    %2057 = vmatprep.subr.mxu0 0.0
    %2058 = vmatpush2.msra.mxu0 0.0
    %2059 = vmatprep.subr.mxu0 0.0
    %2060 = vmatpush2.msra.mxu0 0.0
    %2061 = vmatprep.subr.mxu0 0.0
    %2062 = vmatpush2.msra.mxu0 0.0
    %2063 = vmatprep.subr.mxu0 0.0
    %2064 = vmatpush2.msra.mxu0 0.0
    %2065 = vmatprep.subr.mxu0 0.0
    %2066 = vmatpush2.msra.mxu0 0.0
    %2067 = vmatprep.subr.mxu0 0.0
    %2068 = vmatpush2.msra.mxu0 0.0
    %2069 = vmatprep.subr.mxu0 0.0
    %2070 = vmatpush2.msra.mxu0 0.0
    %2071 = vmatprep.subr.mxu0 0.0
    %2072 = vmatpush2.msra.mxu0 0.0
    %2073 = vmatprep.subr.mxu0 0.0
    %2074 = vmatpush2.msra.mxu0 0.0
    %2075 = vmatprep.subr.mxu0 0.0
    %2076 = vmatpush2.msra.mxu0 0.0
    %2077 = vmatprep.subr.mxu0 0.0
    %2078 = vmatpush2.msra.mxu0 0.0
    %2079 = vmatprep.subr.mxu0 0.0
    %2080 = vmatpush2.msra.mxu0 0.0
    %2081 = vmatprep.subr.mxu0 0.0
    %2082 = vmatpush2.msra.mxu0 0.0
    %2083 = vmatprep.subr.mxu0 0.0
    %2084 = vmatpush2.msra.mxu0 0.0
    %2085 = vmatprep.subr.mxu0 0.0
    %2086 = vmatpush2.msra.mxu0 0.0
    %2087 = vmatprep.mubr.f32.mxu0 0.0
    %2088 = vmatmul.mubr.f32.gmra.mxu0 %v2021
    %v2089 = vpop.f32.mrf.mxu0
    %v2090 = vadd.f32 %v1649, %v2089
    %v2091 = vpop.f32.mrf.mxu0
    %2092 = vdwg.mxu0
    %2093 = vst.msk [vmem:[#allocation2 + $0x2] sm:$0x3] %vm1780, %v2090
    %v2094 = vmul.f32 %v1344, 0.9553365
    %v2095 = vmul.f32 %v1345, 0.9553365
    %v2096 = vmul.f32 %v1344, 0.29552022
    %v2097 = vmul.f32 %v1345, 0.29552022
    %v2100 = vrot.slane %v2096, 1
    %v2101 = vrot.slane %v2097, 1
    %v2104 = vsub.f32 %v2094, %v2100
    %v2105 = vsub.f32 %v2095, %v2101
    %v2108 = vrot.slane %v2094, 1
    %v2109 = vrot.slane %v2095, 1
    %v2112 = vadd.f32 %v2096, %v2108
    %v2113 = vadd.f32 %v2097, %v2109
    %v2114 = vsel %vm1372, %v2104, 0.0
    %2115 = vadd.xlane.f32.xlu0 %v2114
    %v2116 = vpop.xlane.xlu0 %2115
    %v2117 = vsel %vm1372, %v2105, 0.0
    %2118 = vadd.xlane.f32.xlu0 %v2117
    %v2119 = vpop.xlane.xlu0 %2118
    %v2120 = vmul.f32 %v2116, %v1379
    %v2121 = vmul.f32 %v2119, %v1379
    %v2122 = vsub.f32 %v2104, %v2120
    %v2123 = vsub.f32 %v2105, %v2121
    %v2124 = vsel %vm1372, %v2112, 0.0
    %2125 = vadd.xlane.f32.xlu0 %v2124
    %v2126 = vpop.xlane.xlu0 %2125
    %v2127 = vsel %vm1372, %v2113, 0.0
    %2128 = vadd.xlane.f32.xlu0 %v2127
    %v2129 = vpop.xlane.xlu0 %2128
    %v2130 = vmul.f32 %v2126, %v1379
    %v2131 = vmul.f32 %v2129, %v1379
    %v2132 = vsub.f32 %v2112, %v2130
    %v2133 = vsub.f32 %v2113, %v2131
    %v2134 = vmul.f32 %v2122, %v2122
    %v2135 = vmul.f32 %v2123, %v2123
    %v2136 = vmul.f32 %v2132, %v2132
    %v2137 = vmul.f32 %v2133, %v2133
    %v2138 = vadd.f32 %v2134, %v2136
    %v2139 = vadd.f32 %v2135, %v2137
    %v2140 = vadd.f32 %v2138, %v1422
    %v2141 = vadd.f32 %v2139, %v1423
    %v2142 = vsel %vm1372, %v2140, -inf
    %2143 = vmax.xlane.f32.xlu0 %v2142
    %v2144 = vpop.xlane.xlu0 %2143
    %v2145 = vsel %vm1372, %v2141, -inf
    %2146 = vmax.xlane.f32.xlu0 %v2145
    %v2147 = vpop.xlane.xlu0 %2146
    %v2148 = vrsqrt.pop %v2144
    %v2149 = vrsqrt.pop %v2147
    %v2150 = vmul.f32 %v2122, %v2148
    %v2151 = vmul.f32 %v2123, %v2149
    %v2152 = vmul.f32 %v2132, %v2148
    %v2153 = vmul.f32 %v2133, %v2149
    %v2156 = vrot.slane %v2148, 6
    %v2157 = vrot.slane %v2149, 6
    %v2160 = vmul.f32 %v1404, %v2156
    %v2161 = vmul.f32 %v1405, %v2157
    %v2162 = vlaneseq
    %v2163 = vshrl.u32 %v2162, 7
    %v2164 = vsub.s32 0, %v2163
    %v2165 = vrot.slane %v2150, %v2164
    %v2166 = vlaneseq
    %v2167 = vshrl.u32 %v2166, 7
    %v2168 = vsub.s32 0, %v2167
    %v2169 = vrot.slane %v2151, %v2168
    %v2170 = vmul.f32 %v1455, %v2165
    %v2171 = vmul.f32 %v1460, %v2165
    %v2172 = vmul.f32 %v1465, %v2165
    %v2173 = vmul.f32 %v1470, %v2165
    %v2174 = vmul.f32 %v1455, %v2169
    %v2175 = vmul.f32 %v1460, %v2169
    %v2176 = vmul.f32 %v1465, %v2169
    %v2177 = vmul.f32 %v1470, %v2169
    %v2178 = vlaneseq
    %v2179 = vshrl.u32 %v2178, 7
    %v2180 = vsub.s32 0, %v2179
    %v2181 = vrot.slane %v2152, %v2180
    %v2182 = vlaneseq
    %v2183 = vshrl.u32 %v2182, 7
    %v2184 = vsub.s32 0, %v2183
    %v2185 = vrot.slane %v2153, %v2184
    %v2186 = vmul.f32 %v1491, %v2181
    %v2187 = vmul.f32 %v1496, %v2181
    %v2188 = vmul.f32 %v1501, %v2181
    %v2189 = vmul.f32 %v1506, %v2181
    %v2190 = vmul.f32 %v1491, %v2185
    %v2191 = vmul.f32 %v1496, %v2185
    %v2192 = vmul.f32 %v1501, %v2185
    %v2193 = vmul.f32 %v1506, %v2185
    %v2194 = vadd.f32 %v2170, %v2186
    %v2195 = vadd.f32 %v2171, %v2187
    %v2196 = vadd.f32 %v2172, %v2188
    %v2197 = vadd.f32 %v2173, %v2189
    %v2198 = vadd.f32 %v2174, %v2190
    %v2199 = vadd.f32 %v2175, %v2191
    %v2200 = vadd.f32 %v2176, %v2192
    %v2201 = vadd.f32 %v2177, %v2193
    %v2202 = vlaneseq
    %v2203 = vshrl.u32 %v2202, 7
    %v2204 = vsub.s32 2, %v2203
    %v2205 = vrot.slane %v2160, %v2204
    %v2206 = vlaneseq
    %v2207 = vshrl.u32 %v2206, 7
    %v2208 = vsub.s32 2, %v2207
    %v2209 = vrot.slane %v2161, %v2208
    %v2210 = vmul.f32 %v1535, %v2205
    %v2211 = vmul.f32 %v1540, %v2205
    %v2212 = vmul.f32 %v1545, %v2205
    %v2213 = vmul.f32 %v1550, %v2205
    %v2214 = vmul.f32 %v1535, %v2209
    %v2215 = vmul.f32 %v1540, %v2209
    %v2216 = vmul.f32 %v1545, %v2209
    %v2217 = vmul.f32 %v1550, %v2209
    %v2218 = vadd.f32 %v2194, %v2210
    %v2219 = vadd.f32 %v2195, %v2211
    %v2220 = vadd.f32 %v2196, %v2212
    %v2221 = vadd.f32 %v2197, %v2213
    %v2222 = vadd.f32 %v2198, %v2214
    %v2223 = vadd.f32 %v2199, %v2215
    %v2224 = vadd.f32 %v2200, %v2216
    %v2225 = vadd.f32 %v2201, %v2217
    %v2226 = vadd.f32 %v2218, %v1579
    %v2227 = vadd.f32 %v2219, %v1584
    %v2228 = vadd.f32 %v2220, %v1589
    %v2229 = vadd.f32 %v2221, %v1594
    %v2230 = vadd.f32 %v2222, %v1579
    %v2231 = vadd.f32 %v2223, %v1584
    %v2232 = vadd.f32 %v2224, %v1589
    %v2233 = vadd.f32 %v2225, %v1594
    %v2234 = vmax.f32 %v2226, 0.0
    %v2235 = vmax.f32 %v2227, 0.0
    %v2236 = vmax.f32 %v2228, 0.0
    %v2237 = vmax.f32 %v2229, 0.0
    %v2238 = vmax.f32 %v2230, 0.0
    %v2239 = vmax.f32 %v2231, 0.0
    %v2240 = vmax.f32 %v2232, 0.0
    %v2241 = vmax.f32 %v2233, 0.0
    %v2242 = vsel %vm1612, %v2234, 0.0
    %2243 = vadd.xlane.f32.xlu0 %v2242
    %v2244 = vpop.xlane.xlu0 %2243
    %v2245 = vsel %vm1612, %v2235, 0.0
    %2246 = vadd.xlane.f32.xlu0 %v2245
    %v2247 = vpop.xlane.xlu0 %2246
    %v2248 = vsel %vm1612, %v2236, 0.0
    %2249 = vadd.xlane.f32.xlu0 %v2248
    %v2250 = vpop.xlane.xlu0 %2249
    %v2251 = vsel %vm1612, %v2237, 0.0
    %2252 = vadd.xlane.f32.xlu0 %v2251
    %v2253 = vpop.xlane.xlu0 %2252
    %v2254 = vsel %vm1612, %v2238, 0.0
    %2255 = vadd.xlane.f32.xlu0 %v2254
    %v2256 = vpop.xlane.xlu0 %2255
    %v2257 = vsel %vm1612, %v2239, 0.0
    %2258 = vadd.xlane.f32.xlu0 %v2257
    %v2259 = vpop.xlane.xlu0 %2258
    %v2260 = vsel %vm1612, %v2240, 0.0
    %2261 = vadd.xlane.f32.xlu0 %v2260
    %v2262 = vpop.xlane.xlu0 %2261
    %v2263 = vsel %vm1612, %v2241, 0.0
    %2264 = vadd.xlane.f32.xlu0 %v2263
    %v2265 = vpop.xlane.xlu0 %2264
    %v2266 = vmul.f32 %v2244, %v1379
    %v2267 = vmul.f32 %v2247, %v1379
    %v2268 = vmul.f32 %v2250, %v1379
    %v2269 = vmul.f32 %v2253, %v1379
    %v2270 = vmul.f32 %v2256, %v1379
    %v2271 = vmul.f32 %v2259, %v1379
    %v2272 = vmul.f32 %v2262, %v1379
    %v2273 = vmul.f32 %v2265, %v1379
    %v2282 = vlaneseq
    %v2283 = vshrl.u32 %v2282, 7
    %v2284 = vsub.s32 %v1660, %v2283
    %v2285 = vrot.slane %v2266, %v2284
    %v2286 = vlaneseq
    %v2287 = vshrl.u32 %v2286, 7
    %v2288 = vsub.s32 %v1665, %v2287
    %v2289 = vrot.slane %v2267, %v2288
    %v2290 = vsel %vm1670, %v2289, %v2285
    %v2291 = vlaneseq
    %v2292 = vshrl.u32 %v2291, 7
    %v2293 = vsub.s32 %v1672, %v2292
    %v2294 = vrot.slane %v2268, %v2293
    %v2295 = vsel %vm1677, %v2294, %v2290
    %v2296 = vlaneseq
    %v2297 = vshrl.u32 %v2296, 7
    %v2298 = vsub.s32 %v1679, %v2297
    %v2299 = vrot.slane %v2269, %v2298
    %v2300 = vsel %vm1684, %v2299, %v2295
    %v2301 = vlaneseq
    %v2302 = vshrl.u32 %v2301, 7
    %v2303 = vsub.s32 %v1660, %v2302
    %v2304 = vrot.slane %v2270, %v2303
    %v2305 = vlaneseq
    %v2306 = vshrl.u32 %v2305, 7
    %v2307 = vsub.s32 %v1665, %v2306
    %v2308 = vrot.slane %v2271, %v2307
    %v2309 = vsel %vm1670, %v2308, %v2304
    %v2310 = vlaneseq
    %v2311 = vshrl.u32 %v2310, 7
    %v2312 = vsub.s32 %v1672, %v2311
    %v2313 = vrot.slane %v2272, %v2312
    %v2314 = vsel %vm1677, %v2313, %v2309
    %v2315 = vlaneseq
    %v2316 = vshrl.u32 %v2315, 7
    %v2317 = vsub.s32 %v1679, %v2316
    %v2318 = vrot.slane %v2273, %v2317
    %v2319 = vsel %vm1684, %v2318, %v2314
    %v2320 = vsel %vm1705, %v2319, %v2300
    %v2321 = vsel %vm1707, %v2320, 0
    %2323 = vmatprep.subr.mxu0 0.0
    %2324 = vmatpush1.msra.mxu0 0.0
    %2325 = vmatprep.subr.mxu0 0.0
    %2326 = vmatpush1.msra.mxu0 0.0
    %2327 = vmatprep.subr.mxu0 0.0
    %2328 = vmatpush1.msra.mxu0 0.0
    %2329 = vmatprep.subr.mxu0 0.0
    %2330 = vmatpush1.msra.mxu0 0.0
    %2331 = vmatprep.subr.mxu0 0.0
    %2332 = vmatpush1.msra.mxu0 0.0
    %2333 = vmatprep.subr.mxu0 0.0
    %2334 = vmatpush1.msra.mxu0 0.0
    %2335 = vmatprep.subr.mxu0 0.0
    %2336 = vmatpush1.msra.mxu0 0.0
    %2337 = vmatprep.subr.mxu0 0.0
    %2338 = vmatpush1.msra.mxu0 0.0
    %2339 = vmatprep.subr.mxu0 0.0
    %2340 = vmatpush1.msra.mxu0 0.0
    %2341 = vmatprep.subr.mxu0 0.0
    %2342 = vmatpush1.msra.mxu0 0.0
    %2343 = vmatprep.subr.mxu0 0.0
    %2344 = vmatpush1.msra.mxu0 0.0
    %2345 = vmatprep.subr.mxu0 0.0
    %2346 = vmatpush1.msra.mxu0 0.0
    %2347 = vmatprep.subr.mxu0 0.0
    %2348 = vmatpush1.msra.mxu0 %v1370
    %2349 = vmatprep.subr.mxu0 0.0
    %2350 = vmatpush1.msra.mxu0 %v1369
    %2351 = vmatprep.subr.mxu0 0.0
    %2352 = vmatpush1.msra.mxu0 %v1368
    %2353 = vmatprep.subr.mxu0 0.0
    %2354 = vmatpush1.msra.mxu0 %v1367
    %2355 = vmatprep.subr.mxu0 0.0
    %2356 = vmatpush2.msra.mxu0 0.0
    %2357 = vmatprep.subr.mxu0 0.0
    %2358 = vmatpush2.msra.mxu0 0.0
    %2359 = vmatprep.subr.mxu0 0.0
    %2360 = vmatpush2.msra.mxu0 0.0
    %2361 = vmatprep.subr.mxu0 0.0
    %2362 = vmatpush2.msra.mxu0 0.0
    %2363 = vmatprep.subr.mxu0 0.0
    %2364 = vmatpush2.msra.mxu0 0.0
    %2365 = vmatprep.subr.mxu0 0.0
    %2366 = vmatpush2.msra.mxu0 0.0
    %2367 = vmatprep.subr.mxu0 0.0
    %2368 = vmatpush2.msra.mxu0 0.0
    %2369 = vmatprep.subr.mxu0 0.0
    %2370 = vmatpush2.msra.mxu0 0.0
    %2371 = vmatprep.subr.mxu0 0.0
    %2372 = vmatpush2.msra.mxu0 0.0
    %2373 = vmatprep.subr.mxu0 0.0
    %2374 = vmatpush2.msra.mxu0 0.0
    %2375 = vmatprep.subr.mxu0 0.0
    %2376 = vmatpush2.msra.mxu0 0.0
    %2377 = vmatprep.subr.mxu0 0.0
    %2378 = vmatpush2.msra.mxu0 0.0
    %2379 = vmatprep.subr.mxu0 0.0
    %2380 = vmatpush2.msra.mxu0 0.0
    %2381 = vmatprep.subr.mxu0 0.0
    %2382 = vmatpush2.msra.mxu0 0.0
    %2383 = vmatprep.subr.mxu0 0.0
    %2384 = vmatpush2.msra.mxu0 0.0
    %2385 = vmatprep.subr.mxu0 0.0
    %2386 = vmatpush2.msra.mxu0 0.0
    %2387 = vmatprep.mubr.f32.mxu0 0.0
    %2388 = vmatmul.mubr.f32.gmra.mxu0 %v2321
    %v2389 = vpop.f32.mrf.mxu0
    %v2390 = vadd.f32 %v1649, %v2389
    %v2391 = vpop.f32.mrf.mxu0
    %2392 = vdwg.mxu0
    %2393 = vst.msk [vmem:[#allocation2 + $0x4] sm:$0x3] %vm1780, %v2390
    // Predicated region
    $region50: #{cnced_forward.1} parent=1 // pred_check
      _
    $region51: #{cnced_forward.1} parent=1 // pred_check_branch
      %2395 = sbr.rel (0) target = $region53
    $region52: #{cnced_forward.1} parent=1 // pred_region
      _
    $region53: #{cnced_forward.1} parent=1 // pred_fallthru
      _
    // Predicated region
    $region54: #{cnced_forward.1} parent=1 // pred_check
      _
    $region55: #{cnced_forward.1} parent=1 // pred_check_branch
      %2397 = sbr.rel (0) target = $region57
    $region56: #{cnced_forward.1} parent=1 // pred_region
      %s2399 = ssub.s32 128, 128
      %2400 = vsyncadd [#allocation3], %s2399
      %s2402 = sshll.u32 [#allocation2], 4
      %s2403 = int_to_ptr.vmem [resolvable:$true] %s2402
      %2405 = dma.vmem_to_hbm [thread:$0]  %s2403, 128, %s13, [#allocation3]
    $region57: #{cnced_forward.1} parent=1 // pred_fallthru
      _
    // Predicated region
    $region58: #{cnced_forward.1} parent=1 // pred_check
      _
    $region59: #{cnced_forward.1} parent=1 // pred_check_branch
      %2407 = sbr.rel (0) target = $region61
    $region60: #{cnced_forward.1} parent=1 // pred_region
      _
    $region61: #{cnced_forward.1} parent=1 // pred_fallthru
      _
    // Predicated region
    $region62: #{cnced_forward.1} parent=1 // pred_check
      _
    $region63: #{cnced_forward.1} parent=1 // pred_check_branch
      %2409 = sbr.rel (0) target = $region65
    $region64: #{cnced_forward.1} parent=1 // pred_region
      %2410 = dma.done [#allocation3], 128
    $region65: #{cnced_forward.1} parent=1 // pred_fallthru
      _
    %2411 = vsyncpa [#allocation3], 1

</llo_original>
